<compile_context>
chip_gen: v7x
topology: tpu7x:2x2x1
jax: 0.10.0
libtpu: 0.0.40
codegen_flags: <defaults>
</compile_context>

<pallas_src>
import jax
import jax.numpy as jnp
from jax import lax
from jax.experimental import pallas as pl
from jax.experimental.pallas import tpu as pltpu


def _round_up(x, m):
    return ((x + m - 1) // m) * m


def _pad_to(a, axis, target):
    pad = [(0, 0)] * a.ndim
    pad[axis] = (0, target - a.shape[axis])
    return jnp.pad(a, pad)


def _drqa_kernel(gx_ref, mask_ref, h0_ref, whh_ref, bhh_ref,
                 wfcx_ref, wfch_ref, bfcx_ref, bfch_ref,
                 x_ref, h_ref, hid_ref):
    """One grid step == one encoder k (grid=(4,), accumulation over k).

    gx_ref   : [S, B, 3Hp]  precomputed (embed @ W_ih^T + b_ih), gates (r,z,n)
    mask_ref : [S, B, 1]    1.0 while t < length, else 0.0
    h0_ref   : [B, Hp]      initial hidden for this encoder
    whh_ref  : [Hp, 3Hp]    fused hidden-gate weights
    bhh_ref  : [1, 3Hp]
    wfcx_ref : [Hp, Hp]     per-encoder slice of fcx (input-major)
    wfch_ref : [Hp, Hp]     per-encoder slice of fch
    bfcx_ref : [1, Hp]      (shared across grid steps)
    bfch_ref : [1, Hp]
    x_ref    : [B, Hp]      accumulator over encoders -> relu at last step
    h_ref    : [B, Hp]      accumulator over encoders -> relu at last step
    hid_ref  : [B, Hp]      this encoder's final hidden (recurrent state out)
    """
    k = pl.program_id(0)
    S = gx_ref.shape[0]
    HP = h0_ref.shape[1]

    whh = whh_ref[...]          # hoisted out of the loop
    bhh = bhh_ref[...]
    h0 = h0_ref[...]

    def step(t, h):
        gx = gx_ref[t]                                            # [B, 3Hp]
        gh = jnp.dot(h, whh, preferred_element_type=jnp.float32) + bhh
        r = jax.nn.sigmoid(gx[:, :HP] + gh[:, :HP])
        z = jax.nn.sigmoid(gx[:, HP:2 * HP] + gh[:, HP:2 * HP])
        n = jnp.tanh(gx[:, 2 * HP:] + r * gh[:, 2 * HP:])
        h_new = (1.0 - z) * n + z * h
        m = mask_ref[t]                                           # [B, 1]
        return jnp.where(m != 0.0, h_new, h)                      # freeze padded seqs

    h = lax.fori_loop(0, S, step, h0, unroll=True)

    hid_ref[...] = h
    xk = jnp.dot(h, wfcx_ref[...], preferred_element_type=jnp.float32)
    hk = jnp.dot(h, wfch_ref[...], preferred_element_type=jnp.float32)

    @pl.when(k == 0)
    def _():
        x_ref[...] = jnp.zeros_like(x_ref)
        h_ref[...] = jnp.zeros_like(h_ref)

    x_ref[...] = x_ref[...] + xk
    h_ref[...] = h_ref[...] + hk

    @pl.when(k == pl.num_programs(0) - 1)
    def _():
        x_ref[...] = jnp.maximum(x_ref[...] + bfcx_ref[...], 0.0)
        h_ref[...] = jnp.maximum(h_ref[...] + bfch_ref[...], 0.0)


def action_drqa_forward(obs, hiddens, params):
    """Mirrors ActionDrQA.forward(obs). Returns (x, h, new_hiddens).

    obs     : int array [B, 4, S]
    hiddens : None (zeros, == initHidden) or list of 4 arrays [1, B, H]
    params  : {"enc": [4 x {embedding, w_ih, w_hh, b_ih, b_hh}],
               "fcx_w", "fcx_b", "fch_w", "fch_b"}  (PyTorch layouts)
    """
    obs = obs.astype(jnp.int32)
    B, nenc, S = obs.shape
    assert nenc == 4
    H = params["fcx_w"].shape[0]
    HP = _round_up(H, 128)
    G3 = 3 * HP

    gx_list, whh_list, bhh_list = [], [], []
    for k in range(4):
        p = params["enc"][k]
        emb, w_ih, w_hh = p["embedding"], p["w_ih"], p["w_hh"]
        b_ih, b_hh = p["b_ih"], p["b_hh"]
        # Fold embedding lookup + input projection + input bias into one table.
        tbl = (emb @ w_ih.T + b_ih).reshape(-1, 3, H)              # [vocab, 3, H]
        tbl = _pad_to(tbl, 2, HP).reshape(-1, G3)                  # [vocab, 3Hp]
        gx = tbl[obs[:, k, :]]                                     # [B, S, 3Hp] (gather)
        gx_list.append(jnp.transpose(gx, (1, 0, 2)))               # [S, B, 3Hp]
        whh = w_hh.T.reshape(H, 3, H)                              # [in, gate, out]
        whh = _pad_to(_pad_to(whh, 0, HP), 2, HP).reshape(HP, G3)  # [Hp, 3Hp]
        whh_list.append(whh)
        bhh_list.append(_pad_to(b_hh.reshape(3, H), 1, HP).reshape(1, G3))

    gx_all = jnp.stack(gx_list)                                    # [4, S, B, 3Hp]
    whh_all = jnp.stack(whh_list)                                  # [4, Hp, 3Hp]
    bhh_all = jnp.stack(bhh_list)                                  # [4, 1, 3Hp]

    # Packed-sequence lengths (last nonzero index + 1, min 1) -> f32 mask.
    pos = jnp.arange(1, S + 1, dtype=jnp.int32)
    lengths = jnp.maximum(
        jnp.max(jnp.where(obs != 0, pos[None, None, :], 0), axis=2), 1)   # [B, 4]
    t_idx = jnp.arange(S, dtype=jnp.int32)
    mask = (t_idx[None, :, None] < lengths.T[:, None, :]).astype(jnp.float32)
    mask = mask[..., None]                                         # [4, S, B, 1]

    if hiddens is None:
        h0_all = jnp.zeros((4, B, HP), jnp.float32)
    else:
        h0_all = jnp.stack([_pad_to(h[0].astype(jnp.float32), 1, HP) for h in hiddens])

    # fcx/fch: cat + matmul == sum_k y_k @ W_k  (per-encoder [H, H] slices).
    wfcx = jnp.stack([_pad_to(_pad_to(params["fcx_w"][:, k * H:(k + 1) * H].T, 0, HP), 1, HP)
                      for k in range(4)])                          # [4, Hp, Hp]
    wfch = jnp.stack([_pad_to(_pad_to(params["fch_w"][:, k * H:(k + 1) * H].T, 0, HP), 1, HP)
                      for k in range(4)])
    bfcx = _pad_to(params["fcx_b"].reshape(1, H), 1, HP)           # [1, Hp]
    bfch = _pad_to(params["fch_b"].reshape(1, H), 1, HP)

    in_specs = [
        pl.BlockSpec((None, S, B, G3), lambda k: (k, 0, 0, 0)),    # gx
        pl.BlockSpec((None, S, B, 1), lambda k: (k, 0, 0, 0)),     # mask
        pl.BlockSpec((None, B, HP), lambda k: (k, 0, 0)),          # h0
        pl.BlockSpec((None, HP, G3), lambda k: (k, 0, 0)),         # whh
        pl.BlockSpec((None, 1, G3), lambda k: (k, 0, 0)),          # bhh
        pl.BlockSpec((None, HP, HP), lambda k: (k, 0, 0)),         # wfcx slice
        pl.BlockSpec((None, HP, HP), lambda k: (k, 0, 0)),         # wfch slice
        pl.BlockSpec((1, HP), lambda k: (0, 0)),                   # bfcx
        pl.BlockSpec((1, HP), lambda k: (0, 0)),                   # bfch
    ]
    out_specs = (
        pl.BlockSpec((B, HP), lambda k: (0, 0)),                   # x accumulator
        pl.BlockSpec((B, HP), lambda k: (0, 0)),                   # h accumulator
        pl.BlockSpec((None, B, HP), lambda k: (k, 0, 0)),          # per-encoder hidden
    )
    out_shape = (jax.ShapeDtypeStruct((B, HP), jnp.float32),
                 jax.ShapeDtypeStruct((B, HP), jnp.float32),
                 jax.ShapeDtypeStruct((4, B, HP), jnp.float32))

    # TODO(synk): at production B, add a second ("parallel") grid axis over the
    # batch so the v7x megacore can split work across its two TensorCores.
    x_pad, h_pad, hid_pad = pl.pallas_call(
        _drqa_kernel,
        out_shape=out_shape,
        grid=(4,),
        in_specs=in_specs,
        out_specs=out_specs,
        compiler_params=pltpu.CompilerParams(dimension_semantics=("arbitrary",)),
    )(gx_all, mask, h0_all, whh_all, bhh_all, wfcx, wfch, bfcx, bfch)

    x = x_pad[:, :H]
    h = h_pad[:, :H].reshape(1, B, H)
    new_hiddens = [hid_pad[k, :, :H].reshape(1, B, H) for k in range(4)]
    return x, h, new_hiddens


def reference_forward(obs, hiddens, params):
    """Pure-JAX mirror of ActionDrQA.forward (for correctness checking)."""
    obs = obs.astype(jnp.int32)
    B, _, S = obs.shape
    H = params["fcx_w"].shape[0]
    ys = []
    for k in range(4):
        p = params["enc"][k]
        tokens = obs[:, k, :]
        pos = jnp.arange(1, S + 1, dtype=jnp.int32)
        lengths = jnp.maximum(
            jnp.max(jnp.where(tokens != 0, pos[None, :], 0), axis=1), 1)
        x = p["embedding"][tokens]                                 # [B, S, H]
        h = jnp.zeros((B, H), jnp.float32) if hiddens is None else hiddens[k][0]
        for t in range(S):
            xt = x[:, t, :]
            gx = xt @ p["w_ih"].T + p["b_ih"]
            gh = h @ p["w_hh"].T + p["b_hh"]
            r = jax.nn.sigmoid(gx[:, :H] + gh[:, :H])
            z = jax.nn.sigmoid(gx[:, H:2 * H] + gh[:, H:2 * H])
            n = jnp.tanh(gx[:, 2 * H:] + r * gh[:, 2 * H:])
            h_new = (1.0 - z) * n + z * h
            h = jnp.where((t < lengths)[:, None], h_new, h)
        ys.append(h)                                               # y_k == h_k[0]
    ycat = jnp.concatenate(ys, axis=1)                             # [B, 4H]
    x_out = jax.nn.relu(ycat @ params["fcx_w"].T + params["fcx_b"])
    h_out = jax.nn.relu(ycat @ params["fch_w"].T + params["fch_b"]).reshape(1, B, H)
    return x_out, h_out, jnp.stack(ys)


if __name__ == "__main__":
    vocab, B, S, H = 50, 2, 8, 64

    key = jax.random.PRNGKey(0)
    keys = jax.random.split(key, 4 * 5 + 5)
    enc_params = []
    for k in range(4):
        kk = keys[5 * k:5 * k + 5]
        enc_params.append({
            "embedding": 0.1 * jax.random.normal(kk[0], (vocab, H), jnp.float32),
            "w_ih":      0.1 * jax.random.normal(kk[1], (3 * H, H), jnp.float32),
            "w_hh":      0.1 * jax.random.normal(kk[2], (3 * H, H), jnp.float32),
            "b_ih":      0.1 * jax.random.normal(kk[3], (3 * H,), jnp.float32),
            "b_hh":      0.1 * jax.random.normal(kk[4], (3 * H,), jnp.float32),
        })
    params = {
        "enc": enc_params,
        "fcx_w": 0.1 * jax.random.normal(keys[20], (H, 4 * H), jnp.float32),
        "fcx_b": 0.1 * jax.random.normal(keys[21], (H,), jnp.float32),
        "fch_w": 0.1 * jax.random.normal(keys[22], (H, 4 * H), jnp.float32),
        "fch_b": 0.1 * jax.random.normal(keys[23], (H,), jnp.float32),
    }

    obs = jax.random.randint(keys[24], (B, 4, S), 1, vocab, dtype=jnp.int32)
    obs = obs.at[0, 1, 5:].set(0)   # padded tail -> length 5
    obs = obs.at[1, 3, :].set(0)    # all padding -> length clamps to 1

    x, h, new_hiddens = action_drqa_forward(obs, None, params)
    jax.block_until_ready((x, h, new_hiddens))

    x_ref, h_ref, ys_ref = reference_forward(obs, None, params)
    assert x.shape == (B, H)
    assert h.shape == (1, B, H)
    assert jnp.allclose(x, x_ref, atol=1e-4), "x mismatch"
    assert jnp.allclose(h, h_ref, atol=1e-4), "h mismatch"
    for k in range(4):
        assert jnp.allclose(new_hiddens[k][0], ys_ref[k], atol=1e-4), "hidden mismatch"

    print("KERNEL_OK")
</pallas_src>

<mosaic_0001>
module attributes {stable_mosaic.version = 11 : i64} {
  func.func @_drqa_kernel(%arg0: i32, %arg1: memref<1x8x2x384xf32, #tpu.memory_space<vmem>>, %arg2: memref<1x8x2x1xf32, #tpu.memory_space<vmem>>, %arg3: memref<1x2x128xf32, #tpu.memory_space<vmem>>, %arg4: memref<1x128x384xf32, #tpu.memory_space<vmem>>, %arg5: memref<1x1x384xf32, #tpu.memory_space<vmem>>, %arg6: memref<1x128x128xf32, #tpu.memory_space<vmem>>, %arg7: memref<1x128x128xf32, #tpu.memory_space<vmem>>, %arg8: memref<1x128xf32, #tpu.memory_space<vmem>>, %arg9: memref<1x128xf32, #tpu.memory_space<vmem>>, %arg10: memref<2x128xf32, #tpu.memory_space<vmem>>, %arg11: memref<2x128xf32, #tpu.memory_space<vmem>>, %arg12: memref<1x2x128xf32, #tpu.memory_space<vmem>>) attributes {dimension_semantics = [#tpu.dimension_semantics<arbitrary>], iteration_bounds = array<i64: 4>, scalar_prefetch = 0 : i64, scratch_operands = 0 : i64, tpu.core_type = #tpu.core_type<tc>, window_params = [{transform_indices = @transform_0, window_bounds = array<i64: 1, 8, 2, 384>}, {transform_indices = @transform_1, window_bounds = array<i64: 1, 8, 2, 1>}, {transform_indices = @transform_2, window_bounds = array<i64: 1, 2, 128>}, {transform_indices = @transform_3, window_bounds = array<i64: 1, 128, 384>}, {transform_indices = @transform_4, window_bounds = array<i64: 1, 1, 384>}, {transform_indices = @transform_5, window_bounds = array<i64: 1, 128, 128>}, {transform_indices = @transform_6, window_bounds = array<i64: 1, 128, 128>}, {pipeline_mode = #tpu.pipeline_mode<synchronous>, transform_indices = @transform_7, window_bounds = array<i64: 1, 128>}, {pipeline_mode = #tpu.pipeline_mode<synchronous>, transform_indices = @transform_8, window_bounds = array<i64: 1, 128>}, {pipeline_mode = #tpu.pipeline_mode<synchronous>, transform_indices = @transform_9, window_bounds = array<i64: 2, 128>}, {pipeline_mode = #tpu.pipeline_mode<synchronous>, transform_indices = @transform_10, window_bounds = array<i64: 2, 128>}, {transform_indices = @transform_11, window_bounds = array<i64: 1, 2, 128>}]} {
    %c0 = arith.constant 0 : index
    %c0_0 = arith.constant 0 : index
    %c0_1 = arith.constant 0 : index
    %0 = vector.load %arg4[%c0, %c0_0, %c0_1] : memref<1x128x384xf32, #tpu.memory_space<vmem>>, vector<1x128x384xf32>
    %1 = vector.shape_cast %0 : vector<1x128x384xf32> to vector<128x384xf32>
    %c0_2 = arith.constant 0 : index
    %c0_3 = arith.constant 0 : index
    %c0_4 = arith.constant 0 : index
    %2 = vector.load %arg5[%c0_2, %c0_3, %c0_4] : memref<1x1x384xf32, #tpu.memory_space<vmem>>, vector<1x1x384xf32>
    %3 = vector.shape_cast %2 : vector<1x1x384xf32> to vector<1x384xf32>
    %c0_5 = arith.constant 0 : index
    %c0_6 = arith.constant 0 : index
    %c0_7 = arith.constant 0 : index
    %4 = vector.load %arg3[%c0_5, %c0_6, %c0_7] : memref<1x2x128xf32, #tpu.memory_space<vmem>>, vector<1x2x128xf32>
    %5 = vector.shape_cast %4 : vector<1x2x128xf32> to vector<2x128xf32>
    %c0_i32 = arith.constant 0 : i32
    %c0_8 = arith.constant 0 : index
    %6 = arith.index_cast %c0_i32 : i32 to index
    %c0_9 = arith.constant 0 : index
    %c0_10 = arith.constant 0 : index
    %7 = vector.load %arg1[%c0_8, %6, %c0_9, %c0_10] : memref<1x8x2x384xf32, #tpu.memory_space<vmem>>, vector<1x1x2x384xf32>
    %8 = vector.shape_cast %7 : vector<1x1x2x384xf32> to vector<2x384xf32>
    %cst = arith.constant dense<0.000000e+00> : vector<2x384xf32>
    %9 = tpu.matmul %5, %1, %cst {dimension_numbers = #tpu.dot_dimension_numbers<[1], [0], [0], [1], [0, 0, 1, 1], [], []>} : vector<2x128xf32>, vector<128x384xf32>, vector<2x384xf32> -> vector<2x384xf32>
    %10 = vector.broadcast %3 : vector<1x384xf32> to vector<2x384xf32>
    %11 = arith.addf %9, %10 : vector<2x384xf32>
    %12 = vector.extract_strided_slice %8 {offsets = [0, 0], sizes = [2, 128], strides = [1, 1]} : vector<2x384xf32> to vector<2x128xf32>
    %13 = vector.extract_strided_slice %11 {offsets = [0, 0], sizes = [2, 128], strides = [1, 1]} : vector<2x384xf32> to vector<2x128xf32>
    %14 = arith.addf %12, %13 : vector<2x128xf32>
    %15 = arith.negf %14 : vector<2x128xf32>
    %16 = math.exp %15 : vector<2x128xf32>
    %cst_11 = arith.constant 1.000000e+00 : f32
    %17 = vector.broadcast %cst_11 : f32 to vector<2x128xf32>
    %18 = arith.addf %17, %16 : vector<2x128xf32>
    %19 = arith.divf %17, %18 : vector<2x128xf32>
    %20 = vector.extract_strided_slice %8 {offsets = [0, 128], sizes = [2, 128], strides = [1, 1]} : vector<2x384xf32> to vector<2x128xf32>
    %21 = vector.extract_strided_slice %11 {offsets = [0, 128], sizes = [2, 128], strides = [1, 1]} : vector<2x384xf32> to vector<2x128xf32>
    %22 = arith.addf %20, %21 : vector<2x128xf32>
    %23 = arith.negf %22 : vector<2x128xf32>
    %24 = math.exp %23 : vector<2x128xf32>
    %cst_12 = arith.constant 1.000000e+00 : f32
    %25 = vector.broadcast %cst_12 : f32 to vector<2x128xf32>
    %26 = arith.addf %25, %24 : vector<2x128xf32>
    %27 = arith.divf %25, %26 : vector<2x128xf32>
    %28 = vector.extract_strided_slice %8 {offsets = [0, 256], sizes = [2, 128], strides = [1, 1]} : vector<2x384xf32> to vector<2x128xf32>
    %29 = vector.extract_strided_slice %11 {offsets = [0, 256], sizes = [2, 128], strides = [1, 1]} : vector<2x384xf32> to vector<2x128xf32>
    %30 = arith.mulf %19, %29 : vector<2x128xf32>
    %31 = arith.addf %28, %30 : vector<2x128xf32>
    %32 = math.tanh %31 : vector<2x128xf32>
    %cst_13 = arith.constant 1.000000e+00 : f32
    %33 = vector.broadcast %cst_13 : f32 to vector<2x128xf32>
    %34 = arith.subf %33, %27 : vector<2x128xf32>
    %35 = arith.mulf %34, %32 : vector<2x128xf32>
    %36 = arith.mulf %27, %5 : vector<2x128xf32>
    %37 = arith.addf %35, %36 : vector<2x128xf32>
    %c0_14 = arith.constant 0 : index
    %38 = arith.index_cast %c0_i32 : i32 to index
    %c0_15 = arith.constant 0 : index
    %c0_16 = arith.constant 0 : index
    %39 = vector.load %arg2[%c0_14, %38, %c0_15, %c0_16] : memref<1x8x2x1xf32, #tpu.memory_space<vmem>>, vector<1x1x2x1xf32>
    %40 = vector.shape_cast %39 : vector<1x1x2x1xf32> to vector<2x1xf32>
    %cst_17 = arith.constant 0.000000e+00 : f32
    %41 = vector.broadcast %cst_17 : f32 to vector<2x1xf32>
    %42 = arith.cmpf one, %40, %41 : vector<2x1xf32>
    %43 = vector.shape_cast %42 : vector<2x1xi1> to vector<2x1xi1>
    %44 = vector.broadcast %43 : vector<2x1xi1> to vector<2x128xi1>
    %45 = arith.select %44, %37, %5 : vector<2x128xi1>, vector<2x128xf32>
    %c1_i32 = arith.constant 1 : i32
    %c0_18 = arith.constant 0 : index
    %46 = arith.index_cast %c1_i32 : i32 to index
    %c0_19 = arith.constant 0 : index
    %c0_20 = arith.constant 0 : index
    %47 = vector.load %arg1[%c0_18, %46, %c0_19, %c0_20] : memref<1x8x2x384xf32, #tpu.memory_space<vmem>>, vector<1x1x2x384xf32>
    %48 = vector.shape_cast %47 : vector<1x1x2x384xf32> to vector<2x384xf32>
    %cst_21 = arith.constant dense<0.000000e+00> : vector<2x384xf32>
    %49 = tpu.matmul %45, %1, %cst_21 {dimension_numbers = #tpu.dot_dimension_numbers<[1], [0], [0], [1], [0, 0, 1, 1], [], []>} : vector<2x128xf32>, vector<128x384xf32>, vector<2x384xf32> -> vector<2x384xf32>
    %50 = vector.broadcast %3 : vector<1x384xf32> to vector<2x384xf32>
    %51 = arith.addf %49, %50 : vector<2x384xf32>
    %52 = vector.extract_strided_slice %48 {offsets = [0, 0], sizes = [2, 128], strides = [1, 1]} : vector<2x384xf32> to vector<2x128xf32>
    %53 = vector.extract_strided_slice %51 {offsets = [0, 0], sizes = [2, 128], strides = [1, 1]} : vector<2x384xf32> to vector<2x128xf32>
    %54 = arith.addf %52, %53 : vector<2x128xf32>
    %55 = arith.negf %54 : vector<2x128xf32>
    %56 = math.exp %55 : vector<2x128xf32>
    %cst_22 = arith.constant 1.000000e+00 : f32
    %57 = vector.broadcast %cst_22 : f32 to vector<2x128xf32>
    %58 = arith.addf %57, %56 : vector<2x128xf32>
    %59 = arith.divf %57, %58 : vector<2x128xf32>
    %60 = vector.extract_strided_slice %48 {offsets = [0, 128], sizes = [2, 128], strides = [1, 1]} : vector<2x384xf32> to vector<2x128xf32>
    %61 = vector.extract_strided_slice %51 {offsets = [0, 128], sizes = [2, 128], strides = [1, 1]} : vector<2x384xf32> to vector<2x128xf32>
    %62 = arith.addf %60, %61 : vector<2x128xf32>
    %63 = arith.negf %62 : vector<2x128xf32>
    %64 = math.exp %63 : vector<2x128xf32>
    %cst_23 = arith.constant 1.000000e+00 : f32
    %65 = vector.broadcast %cst_23 : f32 to vector<2x128xf32>
    %66 = arith.addf %65, %64 : vector<2x128xf32>
    %67 = arith.divf %65, %66 : vector<2x128xf32>
    %68 = vector.extract_strided_slice %48 {offsets = [0, 256], sizes = [2, 128], strides = [1, 1]} : vector<2x384xf32> to vector<2x128xf32>
    %69 = vector.extract_strided_slice %51 {offsets = [0, 256], sizes = [2, 128], strides = [1, 1]} : vector<2x384xf32> to vector<2x128xf32>
    %70 = arith.mulf %59, %69 : vector<2x128xf32>
    %71 = arith.addf %68, %70 : vector<2x128xf32>
    %72 = math.tanh %71 : vector<2x128xf32>
    %cst_24 = arith.constant 1.000000e+00 : f32
    %73 = vector.broadcast %cst_24 : f32 to vector<2x128xf32>
    %74 = arith.subf %73, %67 : vector<2x128xf32>
    %75 = arith.mulf %74, %72 : vector<2x128xf32>
    %76 = arith.mulf %67, %45 : vector<2x128xf32>
    %77 = arith.addf %75, %76 : vector<2x128xf32>
    %c0_25 = arith.constant 0 : index
    %78 = arith.index_cast %c1_i32 : i32 to index
    %c0_26 = arith.constant 0 : index
    %c0_27 = arith.constant 0 : index
    %79 = vector.load %arg2[%c0_25, %78, %c0_26, %c0_27] : memref<1x8x2x1xf32, #tpu.memory_space<vmem>>, vector<1x1x2x1xf32>
    %80 = vector.shape_cast %79 : vector<1x1x2x1xf32> to vector<2x1xf32>
    %cst_28 = arith.constant 0.000000e+00 : f32
    %81 = vector.broadcast %cst_28 : f32 to vector<2x1xf32>
    %82 = arith.cmpf one, %80, %81 : vector<2x1xf32>
    %83 = vector.shape_cast %82 : vector<2x1xi1> to vector<2x1xi1>
    %84 = vector.broadcast %83 : vector<2x1xi1> to vector<2x128xi1>
    %85 = arith.select %84, %77, %45 : vector<2x128xi1>, vector<2x128xf32>
    %c2_i32 = arith.constant 2 : i32
    %c0_29 = arith.constant 0 : index
    %86 = arith.index_cast %c2_i32 : i32 to index
    %c0_30 = arith.constant 0 : index
    %c0_31 = arith.constant 0 : index
    %87 = vector.load %arg1[%c0_29, %86, %c0_30, %c0_31] : memref<1x8x2x384xf32, #tpu.memory_space<vmem>>, vector<1x1x2x384xf32>
    %88 = vector.shape_cast %87 : vector<1x1x2x384xf32> to vector<2x384xf32>
    %cst_32 = arith.constant dense<0.000000e+00> : vector<2x384xf32>
    %89 = tpu.matmul %85, %1, %cst_32 {dimension_numbers = #tpu.dot_dimension_numbers<[1], [0], [0], [1], [0, 0, 1, 1], [], []>} : vector<2x128xf32>, vector<128x384xf32>, vector<2x384xf32> -> vector<2x384xf32>
    %90 = vector.broadcast %3 : vector<1x384xf32> to vector<2x384xf32>
    %91 = arith.addf %89, %90 : vector<2x384xf32>
    %92 = vector.extract_strided_slice %88 {offsets = [0, 0], sizes = [2, 128], strides = [1, 1]} : vector<2x384xf32> to vector<2x128xf32>
    %93 = vector.extract_strided_slice %91 {offsets = [0, 0], sizes = [2, 128], strides = [1, 1]} : vector<2x384xf32> to vector<2x128xf32>
    %94 = arith.addf %92, %93 : vector<2x128xf32>
    %95 = arith.negf %94 : vector<2x128xf32>
    %96 = math.exp %95 : vector<2x128xf32>
    %cst_33 = arith.constant 1.000000e+00 : f32
    %97 = vector.broadcast %cst_33 : f32 to vector<2x128xf32>
    %98 = arith.addf %97, %96 : vector<2x128xf32>
    %99 = arith.divf %97, %98 : vector<2x128xf32>
    %100 = vector.extract_strided_slice %88 {offsets = [0, 128], sizes = [2, 128], strides = [1, 1]} : vector<2x384xf32> to vector<2x128xf32>
    %101 = vector.extract_strided_slice %91 {offsets = [0, 128], sizes = [2, 128], strides = [1, 1]} : vector<2x384xf32> to vector<2x128xf32>
    %102 = arith.addf %100, %101 : vector<2x128xf32>
    %103 = arith.negf %102 : vector<2x128xf32>
    %104 = math.exp %103 : vector<2x128xf32>
    %cst_34 = arith.constant 1.000000e+00 : f32
    %105 = vector.broadcast %cst_34 : f32 to vector<2x128xf32>
    %106 = arith.addf %105, %104 : vector<2x128xf32>
    %107 = arith.divf %105, %106 : vector<2x128xf32>
    %108 = vector.extract_strided_slice %88 {offsets = [0, 256], sizes = [2, 128], strides = [1, 1]} : vector<2x384xf32> to vector<2x128xf32>
    %109 = vector.extract_strided_slice %91 {offsets = [0, 256], sizes = [2, 128], strides = [1, 1]} : vector<2x384xf32> to vector<2x128xf32>
    %110 = arith.mulf %99, %109 : vector<2x128xf32>
    %111 = arith.addf %108, %110 : vector<2x128xf32>
    %112 = math.tanh %111 : vector<2x128xf32>
    %cst_35 = arith.constant 1.000000e+00 : f32
    %113 = vector.broadcast %cst_35 : f32 to vector<2x128xf32>
    %114 = arith.subf %113, %107 : vector<2x128xf32>
    %115 = arith.mulf %114, %112 : vector<2x128xf32>
    %116 = arith.mulf %107, %85 : vector<2x128xf32>
    %117 = arith.addf %115, %116 : vector<2x128xf32>
    %c0_36 = arith.constant 0 : index
    %118 = arith.index_cast %c2_i32 : i32 to index
    %c0_37 = arith.constant 0 : index
    %c0_38 = arith.constant 0 : index
    %119 = vector.load %arg2[%c0_36, %118, %c0_37, %c0_38] : memref<1x8x2x1xf32, #tpu.memory_space<vmem>>, vector<1x1x2x1xf32>
    %120 = vector.shape_cast %119 : vector<1x1x2x1xf32> to vector<2x1xf32>
    %cst_39 = arith.constant 0.000000e+00 : f32
    %121 = vector.broadcast %cst_39 : f32 to vector<2x1xf32>
    %122 = arith.cmpf one, %120, %121 : vector<2x1xf32>
    %123 = vector.shape_cast %122 : vector<2x1xi1> to vector<2x1xi1>
    %124 = vector.broadcast %123 : vector<2x1xi1> to vector<2x128xi1>
    %125 = arith.select %124, %117, %85 : vector<2x128xi1>, vector<2x128xf32>
    %c3_i32 = arith.constant 3 : i32
    %c0_40 = arith.constant 0 : index
    %126 = arith.index_cast %c3_i32 : i32 to index
    %c0_41 = arith.constant 0 : index
    %c0_42 = arith.constant 0 : index
    %127 = vector.load %arg1[%c0_40, %126, %c0_41, %c0_42] : memref<1x8x2x384xf32, #tpu.memory_space<vmem>>, vector<1x1x2x384xf32>
    %128 = vector.shape_cast %127 : vector<1x1x2x384xf32> to vector<2x384xf32>
    %cst_43 = arith.constant dense<0.000000e+00> : vector<2x384xf32>
    %129 = tpu.matmul %125, %1, %cst_43 {dimension_numbers = #tpu.dot_dimension_numbers<[1], [0], [0], [1], [0, 0, 1, 1], [], []>} : vector<2x128xf32>, vector<128x384xf32>, vector<2x384xf32> -> vector<2x384xf32>
    %130 = vector.broadcast %3 : vector<1x384xf32> to vector<2x384xf32>
    %131 = arith.addf %129, %130 : vector<2x384xf32>
    %132 = vector.extract_strided_slice %128 {offsets = [0, 0], sizes = [2, 128], strides = [1, 1]} : vector<2x384xf32> to vector<2x128xf32>
    %133 = vector.extract_strided_slice %131 {offsets = [0, 0], sizes = [2, 128], strides = [1, 1]} : vector<2x384xf32> to vector<2x128xf32>
    %134 = arith.addf %132, %133 : vector<2x128xf32>
    %135 = arith.negf %134 : vector<2x128xf32>
    %136 = math.exp %135 : vector<2x128xf32>
    %cst_44 = arith.constant 1.000000e+00 : f32
    %137 = vector.broadcast %cst_44 : f32 to vector<2x128xf32>
    %138 = arith.addf %137, %136 : vector<2x128xf32>
    %139 = arith.divf %137, %138 : vector<2x128xf32>
    %140 = vector.extract_strided_slice %128 {offsets = [0, 128], sizes = [2, 128], strides = [1, 1]} : vector<2x384xf32> to vector<2x128xf32>
    %141 = vector.extract_strided_slice %131 {offsets = [0, 128], sizes = [2, 128], strides = [1, 1]} : vector<2x384xf32> to vector<2x128xf32>
    %142 = arith.addf %140, %141 : vector<2x128xf32>
    %143 = arith.negf %142 : vector<2x128xf32>
    %144 = math.exp %143 : vector<2x128xf32>
    %cst_45 = arith.constant 1.000000e+00 : f32
    %145 = vector.broadcast %cst_45 : f32 to vector<2x128xf32>
    %146 = arith.addf %145, %144 : vector<2x128xf32>
    %147 = arith.divf %145, %146 : vector<2x128xf32>
    %148 = vector.extract_strided_slice %128 {offsets = [0, 256], sizes = [2, 128], strides = [1, 1]} : vector<2x384xf32> to vector<2x128xf32>
    %149 = vector.extract_strided_slice %131 {offsets = [0, 256], sizes = [2, 128], strides = [1, 1]} : vector<2x384xf32> to vector<2x128xf32>
    %150 = arith.mulf %139, %149 : vector<2x128xf32>
    %151 = arith.addf %148, %150 : vector<2x128xf32>
    %152 = math.tanh %151 : vector<2x128xf32>
    %cst_46 = arith.constant 1.000000e+00 : f32
    %153 = vector.broadcast %cst_46 : f32 to vector<2x128xf32>
    %154 = arith.subf %153, %147 : vector<2x128xf32>
    %155 = arith.mulf %154, %152 : vector<2x128xf32>
    %156 = arith.mulf %147, %125 : vector<2x128xf32>
    %157 = arith.addf %155, %156 : vector<2x128xf32>
    %c0_47 = arith.constant 0 : index
    %158 = arith.index_cast %c3_i32 : i32 to index
    %c0_48 = arith.constant 0 : index
    %c0_49 = arith.constant 0 : index
    %159 = vector.load %arg2[%c0_47, %158, %c0_48, %c0_49] : memref<1x8x2x1xf32, #tpu.memory_space<vmem>>, vector<1x1x2x1xf32>
    %160 = vector.shape_cast %159 : vector<1x1x2x1xf32> to vector<2x1xf32>
    %cst_50 = arith.constant 0.000000e+00 : f32
    %161 = vector.broadcast %cst_50 : f32 to vector<2x1xf32>
    %162 = arith.cmpf one, %160, %161 : vector<2x1xf32>
    %163 = vector.shape_cast %162 : vector<2x1xi1> to vector<2x1xi1>
    %164 = vector.broadcast %163 : vector<2x1xi1> to vector<2x128xi1>
    %165 = arith.select %164, %157, %125 : vector<2x128xi1>, vector<2x128xf32>
    %c4_i32 = arith.constant 4 : i32
    %c0_51 = arith.constant 0 : index
    %166 = arith.index_cast %c4_i32 : i32 to index
    %c0_52 = arith.constant 0 : index
    %c0_53 = arith.constant 0 : index
    %167 = vector.load %arg1[%c0_51, %166, %c0_52, %c0_53] : memref<1x8x2x384xf32, #tpu.memory_space<vmem>>, vector<1x1x2x384xf32>
    %168 = vector.shape_cast %167 : vector<1x1x2x384xf32> to vector<2x384xf32>
    %cst_54 = arith.constant dense<0.000000e+00> : vector<2x384xf32>
    %169 = tpu.matmul %165, %1, %cst_54 {dimension_numbers = #tpu.dot_dimension_numbers<[1], [0], [0], [1], [0, 0, 1, 1], [], []>} : vector<2x128xf32>, vector<128x384xf32>, vector<2x384xf32> -> vector<2x384xf32>
    %170 = vector.broadcast %3 : vector<1x384xf32> to vector<2x384xf32>
    %171 = arith.addf %169, %170 : vector<2x384xf32>
    %172 = vector.extract_strided_slice %168 {offsets = [0, 0], sizes = [2, 128], strides = [1, 1]} : vector<2x384xf32> to vector<2x128xf32>
    %173 = vector.extract_strided_slice %171 {offsets = [0, 0], sizes = [2, 128], strides = [1, 1]} : vector<2x384xf32> to vector<2x128xf32>
    %174 = arith.addf %172, %173 : vector<2x128xf32>
    %175 = arith.negf %174 : vector<2x128xf32>
    %176 = math.exp %175 : vector<2x128xf32>
    %cst_55 = arith.constant 1.000000e+00 : f32
    %177 = vector.broadcast %cst_55 : f32 to vector<2x128xf32>
    %178 = arith.addf %177, %176 : vector<2x128xf32>
    %179 = arith.divf %177, %178 : vector<2x128xf32>
    %180 = vector.extract_strided_slice %168 {offsets = [0, 128], sizes = [2, 128], strides = [1, 1]} : vector<2x384xf32> to vector<2x128xf32>
    %181 = vector.extract_strided_slice %171 {offsets = [0, 128], sizes = [2, 128], strides = [1, 1]} : vector<2x384xf32> to vector<2x128xf32>
    %182 = arith.addf %180, %181 : vector<2x128xf32>
    %183 = arith.negf %182 : vector<2x128xf32>
    %184 = math.exp %183 : vector<2x128xf32>
    %cst_56 = arith.constant 1.000000e+00 : f32
    %185 = vector.broadcast %cst_56 : f32 to vector<2x128xf32>
    %186 = arith.addf %185, %184 : vector<2x128xf32>
    %187 = arith.divf %185, %186 : vector<2x128xf32>
    %188 = vector.extract_strided_slice %168 {offsets = [0, 256], sizes = [2, 128], strides = [1, 1]} : vector<2x384xf32> to vector<2x128xf32>
    %189 = vector.extract_strided_slice %171 {offsets = [0, 256], sizes = [2, 128], strides = [1, 1]} : vector<2x384xf32> to vector<2x128xf32>
    %190 = arith.mulf %179, %189 : vector<2x128xf32>
    %191 = arith.addf %188, %190 : vector<2x128xf32>
    %192 = math.tanh %191 : vector<2x128xf32>
    %cst_57 = arith.constant 1.000000e+00 : f32
    %193 = vector.broadcast %cst_57 : f32 to vector<2x128xf32>
    %194 = arith.subf %193, %187 : vector<2x128xf32>
    %195 = arith.mulf %194, %192 : vector<2x128xf32>
    %196 = arith.mulf %187, %165 : vector<2x128xf32>
    %197 = arith.addf %195, %196 : vector<2x128xf32>
    %c0_58 = arith.constant 0 : index
    %198 = arith.index_cast %c4_i32 : i32 to index
    %c0_59 = arith.constant 0 : index
    %c0_60 = arith.constant 0 : index
    %199 = vector.load %arg2[%c0_58, %198, %c0_59, %c0_60] : memref<1x8x2x1xf32, #tpu.memory_space<vmem>>, vector<1x1x2x1xf32>
    %200 = vector.shape_cast %199 : vector<1x1x2x1xf32> to vector<2x1xf32>
    %cst_61 = arith.constant 0.000000e+00 : f32
    %201 = vector.broadcast %cst_61 : f32 to vector<2x1xf32>
    %202 = arith.cmpf one, %200, %201 : vector<2x1xf32>
    %203 = vector.shape_cast %202 : vector<2x1xi1> to vector<2x1xi1>
    %204 = vector.broadcast %203 : vector<2x1xi1> to vector<2x128xi1>
    %205 = arith.select %204, %197, %165 : vector<2x128xi1>, vector<2x128xf32>
    %c5_i32 = arith.constant 5 : i32
    %c0_62 = arith.constant 0 : index
    %206 = arith.index_cast %c5_i32 : i32 to index
    %c0_63 = arith.constant 0 : index
    %c0_64 = arith.constant 0 : index
    %207 = vector.load %arg1[%c0_62, %206, %c0_63, %c0_64] : memref<1x8x2x384xf32, #tpu.memory_space<vmem>>, vector<1x1x2x384xf32>
    %208 = vector.shape_cast %207 : vector<1x1x2x384xf32> to vector<2x384xf32>
    %cst_65 = arith.constant dense<0.000000e+00> : vector<2x384xf32>
    %209 = tpu.matmul %205, %1, %cst_65 {dimension_numbers = #tpu.dot_dimension_numbers<[1], [0], [0], [1], [0, 0, 1, 1], [], []>} : vector<2x128xf32>, vector<128x384xf32>, vector<2x384xf32> -> vector<2x384xf32>
    %210 = vector.broadcast %3 : vector<1x384xf32> to vector<2x384xf32>
    %211 = arith.addf %209, %210 : vector<2x384xf32>
    %212 = vector.extract_strided_slice %208 {offsets = [0, 0], sizes = [2, 128], strides = [1, 1]} : vector<2x384xf32> to vector<2x128xf32>
    %213 = vector.extract_strided_slice %211 {offsets = [0, 0], sizes = [2, 128], strides = [1, 1]} : vector<2x384xf32> to vector<2x128xf32>
    %214 = arith.addf %212, %213 : vector<2x128xf32>
    %215 = arith.negf %214 : vector<2x128xf32>
    %216 = math.exp %215 : vector<2x128xf32>
    %cst_66 = arith.constant 1.000000e+00 : f32
    %217 = vector.broadcast %cst_66 : f32 to vector<2x128xf32>
    %218 = arith.addf %217, %216 : vector<2x128xf32>
    %219 = arith.divf %217, %218 : vector<2x128xf32>
    %220 = vector.extract_strided_slice %208 {offsets = [0, 128], sizes = [2, 128], strides = [1, 1]} : vector<2x384xf32> to vector<2x128xf32>
    %221 = vector.extract_strided_slice %211 {offsets = [0, 128], sizes = [2, 128], strides = [1, 1]} : vector<2x384xf32> to vector<2x128xf32>
    %222 = arith.addf %220, %221 : vector<2x128xf32>
    %223 = arith.negf %222 : vector<2x128xf32>
    %224 = math.exp %223 : vector<2x128xf32>
    %cst_67 = arith.constant 1.000000e+00 : f32
    %225 = vector.broadcast %cst_67 : f32 to vector<2x128xf32>
    %226 = arith.addf %225, %224 : vector<2x128xf32>
    %227 = arith.divf %225, %226 : vector<2x128xf32>
    %228 = vector.extract_strided_slice %208 {offsets = [0, 256], sizes = [2, 128], strides = [1, 1]} : vector<2x384xf32> to vector<2x128xf32>
    %229 = vector.extract_strided_slice %211 {offsets = [0, 256], sizes = [2, 128], strides = [1, 1]} : vector<2x384xf32> to vector<2x128xf32>
    %230 = arith.mulf %219, %229 : vector<2x128xf32>
    %231 = arith.addf %228, %230 : vector<2x128xf32>
    %232 = math.tanh %231 : vector<2x128xf32>
    %cst_68 = arith.constant 1.000000e+00 : f32
    %233 = vector.broadcast %cst_68 : f32 to vector<2x128xf32>
    %234 = arith.subf %233, %227 : vector<2x128xf32>
    %235 = arith.mulf %234, %232 : vector<2x128xf32>
    %236 = arith.mulf %227, %205 : vector<2x128xf32>
    %237 = arith.addf %235, %236 : vector<2x128xf32>
    %c0_69 = arith.constant 0 : index
    %238 = arith.index_cast %c5_i32 : i32 to index
    %c0_70 = arith.constant 0 : index
    %c0_71 = arith.constant 0 : index
    %239 = vector.load %arg2[%c0_69, %238, %c0_70, %c0_71] : memref<1x8x2x1xf32, #tpu.memory_space<vmem>>, vector<1x1x2x1xf32>
    %240 = vector.shape_cast %239 : vector<1x1x2x1xf32> to vector<2x1xf32>
    %cst_72 = arith.constant 0.000000e+00 : f32
    %241 = vector.broadcast %cst_72 : f32 to vector<2x1xf32>
    %242 = arith.cmpf one, %240, %241 : vector<2x1xf32>
    %243 = vector.shape_cast %242 : vector<2x1xi1> to vector<2x1xi1>
    %244 = vector.broadcast %243 : vector<2x1xi1> to vector<2x128xi1>
    %245 = arith.select %244, %237, %205 : vector<2x128xi1>, vector<2x128xf32>
    %c6_i32 = arith.constant 6 : i32
    %c0_73 = arith.constant 0 : index
    %246 = arith.index_cast %c6_i32 : i32 to index
    %c0_74 = arith.constant 0 : index
    %c0_75 = arith.constant 0 : index
    %247 = vector.load %arg1[%c0_73, %246, %c0_74, %c0_75] : memref<1x8x2x384xf32, #tpu.memory_space<vmem>>, vector<1x1x2x384xf32>
    %248 = vector.shape_cast %247 : vector<1x1x2x384xf32> to vector<2x384xf32>
    %cst_76 = arith.constant dense<0.000000e+00> : vector<2x384xf32>
    %249 = tpu.matmul %245, %1, %cst_76 {dimension_numbers = #tpu.dot_dimension_numbers<[1], [0], [0], [1], [0, 0, 1, 1], [], []>} : vector<2x128xf32>, vector<128x384xf32>, vector<2x384xf32> -> vector<2x384xf32>
    %250 = vector.broadcast %3 : vector<1x384xf32> to vector<2x384xf32>
    %251 = arith.addf %249, %250 : vector<2x384xf32>
    %252 = vector.extract_strided_slice %248 {offsets = [0, 0], sizes = [2, 128], strides = [1, 1]} : vector<2x384xf32> to vector<2x128xf32>
    %253 = vector.extract_strided_slice %251 {offsets = [0, 0], sizes = [2, 128], strides = [1, 1]} : vector<2x384xf32> to vector<2x128xf32>
    %254 = arith.addf %252, %253 : vector<2x128xf32>
    %255 = arith.negf %254 : vector<2x128xf32>
    %256 = math.exp %255 : vector<2x128xf32>
    %cst_77 = arith.constant 1.000000e+00 : f32
    %257 = vector.broadcast %cst_77 : f32 to vector<2x128xf32>
    %258 = arith.addf %257, %256 : vector<2x128xf32>
    %259 = arith.divf %257, %258 : vector<2x128xf32>
    %260 = vector.extract_strided_slice %248 {offsets = [0, 128], sizes = [2, 128], strides = [1, 1]} : vector<2x384xf32> to vector<2x128xf32>
    %261 = vector.extract_strided_slice %251 {offsets = [0, 128], sizes = [2, 128], strides = [1, 1]} : vector<2x384xf32> to vector<2x128xf32>
    %262 = arith.addf %260, %261 : vector<2x128xf32>
    %263 = arith.negf %262 : vector<2x128xf32>
    %264 = math.exp %263 : vector<2x128xf32>
    %cst_78 = arith.constant 1.000000e+00 : f32
    %265 = vector.broadcast %cst_78 : f32 to vector<2x128xf32>
    %266 = arith.addf %265, %264 : vector<2x128xf32>
    %267 = arith.divf %265, %266 : vector<2x128xf32>
    %268 = vector.extract_strided_slice %248 {offsets = [0, 256], sizes = [2, 128], strides = [1, 1]} : vector<2x384xf32> to vector<2x128xf32>
    %269 = vector.extract_strided_slice %251 {offsets = [0, 256], sizes = [2, 128], strides = [1, 1]} : vector<2x384xf32> to vector<2x128xf32>
    %270 = arith.mulf %259, %269 : vector<2x128xf32>
    %271 = arith.addf %268, %270 : vector<2x128xf32>
    %272 = math.tanh %271 : vector<2x128xf32>
    %cst_79 = arith.constant 1.000000e+00 : f32
    %273 = vector.broadcast %cst_79 : f32 to vector<2x128xf32>
    %274 = arith.subf %273, %267 : vector<2x128xf32>
    %275 = arith.mulf %274, %272 : vector<2x128xf32>
    %276 = arith.mulf %267, %245 : vector<2x128xf32>
    %277 = arith.addf %275, %276 : vector<2x128xf32>
    %c0_80 = arith.constant 0 : index
    %278 = arith.index_cast %c6_i32 : i32 to index
    %c0_81 = arith.constant 0 : index
    %c0_82 = arith.constant 0 : index
    %279 = vector.load %arg2[%c0_80, %278, %c0_81, %c0_82] : memref<1x8x2x1xf32, #tpu.memory_space<vmem>>, vector<1x1x2x1xf32>
    %280 = vector.shape_cast %279 : vector<1x1x2x1xf32> to vector<2x1xf32>
    %cst_83 = arith.constant 0.000000e+00 : f32
    %281 = vector.broadcast %cst_83 : f32 to vector<2x1xf32>
    %282 = arith.cmpf one, %280, %281 : vector<2x1xf32>
    %283 = vector.shape_cast %282 : vector<2x1xi1> to vector<2x1xi1>
    %284 = vector.broadcast %283 : vector<2x1xi1> to vector<2x128xi1>
    %285 = arith.select %284, %277, %245 : vector<2x128xi1>, vector<2x128xf32>
    %c7_i32 = arith.constant 7 : i32
    %c0_84 = arith.constant 0 : index
    %286 = arith.index_cast %c7_i32 : i32 to index
    %c0_85 = arith.constant 0 : index
    %c0_86 = arith.constant 0 : index
    %287 = vector.load %arg1[%c0_84, %286, %c0_85, %c0_86] : memref<1x8x2x384xf32, #tpu.memory_space<vmem>>, vector<1x1x2x384xf32>
    %288 = vector.shape_cast %287 : vector<1x1x2x384xf32> to vector<2x384xf32>
    %cst_87 = arith.constant dense<0.000000e+00> : vector<2x384xf32>
    %289 = tpu.matmul %285, %1, %cst_87 {dimension_numbers = #tpu.dot_dimension_numbers<[1], [0], [0], [1], [0, 0, 1, 1], [], []>} : vector<2x128xf32>, vector<128x384xf32>, vector<2x384xf32> -> vector<2x384xf32>
    %290 = vector.broadcast %3 : vector<1x384xf32> to vector<2x384xf32>
    %291 = arith.addf %289, %290 : vector<2x384xf32>
    %292 = vector.extract_strided_slice %288 {offsets = [0, 0], sizes = [2, 128], strides = [1, 1]} : vector<2x384xf32> to vector<2x128xf32>
    %293 = vector.extract_strided_slice %291 {offsets = [0, 0], sizes = [2, 128], strides = [1, 1]} : vector<2x384xf32> to vector<2x128xf32>
    %294 = arith.addf %292, %293 : vector<2x128xf32>
    %295 = arith.negf %294 : vector<2x128xf32>
    %296 = math.exp %295 : vector<2x128xf32>
    %cst_88 = arith.constant 1.000000e+00 : f32
    %297 = vector.broadcast %cst_88 : f32 to vector<2x128xf32>
    %298 = arith.addf %297, %296 : vector<2x128xf32>
    %299 = arith.divf %297, %298 : vector<2x128xf32>
    %300 = vector.extract_strided_slice %288 {offsets = [0, 128], sizes = [2, 128], strides = [1, 1]} : vector<2x384xf32> to vector<2x128xf32>
    %301 = vector.extract_strided_slice %291 {offsets = [0, 128], sizes = [2, 128], strides = [1, 1]} : vector<2x384xf32> to vector<2x128xf32>
    %302 = arith.addf %300, %301 : vector<2x128xf32>
    %303 = arith.negf %302 : vector<2x128xf32>
    %304 = math.exp %303 : vector<2x128xf32>
    %cst_89 = arith.constant 1.000000e+00 : f32
    %305 = vector.broadcast %cst_89 : f32 to vector<2x128xf32>
    %306 = arith.addf %305, %304 : vector<2x128xf32>
    %307 = arith.divf %305, %306 : vector<2x128xf32>
    %308 = vector.extract_strided_slice %288 {offsets = [0, 256], sizes = [2, 128], strides = [1, 1]} : vector<2x384xf32> to vector<2x128xf32>
    %309 = vector.extract_strided_slice %291 {offsets = [0, 256], sizes = [2, 128], strides = [1, 1]} : vector<2x384xf32> to vector<2x128xf32>
    %310 = arith.mulf %299, %309 : vector<2x128xf32>
    %311 = arith.addf %308, %310 : vector<2x128xf32>
    %312 = math.tanh %311 : vector<2x128xf32>
    %cst_90 = arith.constant 1.000000e+00 : f32
    %313 = vector.broadcast %cst_90 : f32 to vector<2x128xf32>
    %314 = arith.subf %313, %307 : vector<2x128xf32>
    %315 = arith.mulf %314, %312 : vector<2x128xf32>
    %316 = arith.mulf %307, %285 : vector<2x128xf32>
    %317 = arith.addf %315, %316 : vector<2x128xf32>
    %c0_91 = arith.constant 0 : index
    %318 = arith.index_cast %c7_i32 : i32 to index
    %c0_92 = arith.constant 0 : index
    %c0_93 = arith.constant 0 : index
    %319 = vector.load %arg2[%c0_91, %318, %c0_92, %c0_93] : memref<1x8x2x1xf32, #tpu.memory_space<vmem>>, vector<1x1x2x1xf32>
    %320 = vector.shape_cast %319 : vector<1x1x2x1xf32> to vector<2x1xf32>
    %cst_94 = arith.constant 0.000000e+00 : f32
    %321 = vector.broadcast %cst_94 : f32 to vector<2x1xf32>
    %322 = arith.cmpf one, %320, %321 : vector<2x1xf32>
    %323 = vector.shape_cast %322 : vector<2x1xi1> to vector<2x1xi1>
    %324 = vector.broadcast %323 : vector<2x1xi1> to vector<2x128xi1>
    %325 = arith.select %324, %317, %285 : vector<2x128xi1>, vector<2x128xf32>
    %c8_i32 = arith.constant 8 : i32
    %c0_95 = arith.constant 0 : index
    %c0_96 = arith.constant 0 : index
    %c0_97 = arith.constant 0 : index
    %326 = vector.load %arg12[%c0_95, %c0_96, %c0_97] : memref<1x2x128xf32, #tpu.memory_space<vmem>>, vector<1x2x128xf32>
    %327 = vector.shape_cast %326 : vector<1x2x128xf32> to vector<2x128xf32>
    %328 = vector.shape_cast %325 : vector<2x128xf32> to vector<1x2x128xf32>
    tpu.vector_store %arg12[%c0_95, %c0_96, %c0_97], %328 {strides = array<i32>} : memref<1x2x128xf32, #tpu.memory_space<vmem>>, vector<1x2x128xf32>,
    %c0_98 = arith.constant 0 : index
    %c0_99 = arith.constant 0 : index
    %c0_100 = arith.constant 0 : index
    %329 = vector.load %arg6[%c0_98, %c0_99, %c0_100] : memref<1x128x128xf32, #tpu.memory_space<vmem>>, vector<1x128x128xf32>
    %330 = vector.shape_cast %329 : vector<1x128x128xf32> to vector<128x128xf32>
    %cst_101 = arith.constant dense<0.000000e+00> : vector<2x128xf32>
    %331 = tpu.matmul %325, %330, %cst_101 {dimension_numbers = #tpu.dot_dimension_numbers<[1], [0], [0], [1], [0, 0, 1, 1], [], []>} : vector<2x128xf32>, vector<128x128xf32>, vector<2x128xf32> -> vector<2x128xf32>
    %c0_102 = arith.constant 0 : index
    %c0_103 = arith.constant 0 : index
    %c0_104 = arith.constant 0 : index
    %332 = vector.load %arg7[%c0_102, %c0_103, %c0_104] : memref<1x128x128xf32, #tpu.memory_space<vmem>>, vector<1x128x128xf32>
    %333 = vector.shape_cast %332 : vector<1x128x128xf32> to vector<128x128xf32>
    %cst_105 = arith.constant dense<0.000000e+00> : vector<2x128xf32>
    %334 = tpu.matmul %325, %333, %cst_105 {dimension_numbers = #tpu.dot_dimension_numbers<[1], [0], [0], [1], [0, 0, 1, 1], [], []>} : vector<2x128xf32>, vector<128x128xf32>, vector<2x128xf32> -> vector<2x128xf32>
    %c0_i32_106 = arith.constant 0 : i32
    %335 = arith.cmpi eq, %arg0, %c0_i32_106 : i32
    %336 = arith.extui %335 : i1 to i32
    %c0_i32_107 = arith.constant 0 : i32
    %337 = arith.cmpi ne, %336, %c0_i32_107 : i32
    scf.if %337 {
      %cst_118 = arith.constant 0.000000e+00 : f32
      %347 = vector.broadcast %cst_118 : f32 to vector<2x128xf32>
      %c0_119 = arith.constant 0 : index
      %c0_120 = arith.constant 0 : index
      %348 = vector.load %arg10[%c0_119, %c0_120] : memref<2x128xf32, #tpu.memory_space<vmem>>, vector<2x128xf32>
      tpu.vector_store %arg10[%c0_119, %c0_120], %347 {strides = array<i32>} : memref<2x128xf32, #tpu.memory_space<vmem>>, vector<2x128xf32>,
      %cst_121 = arith.constant 0.000000e+00 : f32
      %349 = vector.broadcast %cst_121 : f32 to vector<2x128xf32>
      %c0_122 = arith.constant 0 : index
      %c0_123 = arith.constant 0 : index
      %350 = vector.load %arg11[%c0_122, %c0_123] : memref<2x128xf32, #tpu.memory_space<vmem>>, vector<2x128xf32>
      tpu.vector_store %arg11[%c0_122, %c0_123], %349 {strides = array<i32>} : memref<2x128xf32, #tpu.memory_space<vmem>>, vector<2x128xf32>,
    } else {
    }
    %c0_108 = arith.constant 0 : index
    %c0_109 = arith.constant 0 : index
    %338 = vector.load %arg10[%c0_108, %c0_109] : memref<2x128xf32, #tpu.memory_space<vmem>>, vector<2x128xf32>
    %339 = arith.addf %338, %331 : vector<2x128xf32>
    %c0_110 = arith.constant 0 : index
    %c0_111 = arith.constant 0 : index
    %340 = vector.load %arg10[%c0_110, %c0_111] : memref<2x128xf32, #tpu.memory_space<vmem>>, vector<2x128xf32>
    tpu.vector_store %arg10[%c0_110, %c0_111], %339 {strides = array<i32>} : memref<2x128xf32, #tpu.memory_space<vmem>>, vector<2x128xf32>,
    %c0_112 = arith.constant 0 : index
    %c0_113 = arith.constant 0 : index
    %341 = vector.load %arg11[%c0_112, %c0_113] : memref<2x128xf32, #tpu.memory_space<vmem>>, vector<2x128xf32>
    %342 = arith.addf %341, %334 : vector<2x128xf32>
    %c0_114 = arith.constant 0 : index
    %c0_115 = arith.constant 0 : index
    %343 = vector.load %arg11[%c0_114, %c0_115] : memref<2x128xf32, #tpu.memory_space<vmem>>, vector<2x128xf32>
    tpu.vector_store %arg11[%c0_114, %c0_115], %342 {strides = array<i32>} : memref<2x128xf32, #tpu.memory_space<vmem>>, vector<2x128xf32>,
    %c3_i32_116 = arith.constant 3 : i32
    %344 = arith.cmpi eq, %arg0, %c3_i32_116 : i32
    %345 = arith.extui %344 : i1 to i32
    %c0_i32_117 = arith.constant 0 : i32
    %346 = arith.cmpi ne, %345, %c0_i32_117 : i32
    scf.if %346 {
      %c0_118 = arith.constant 0 : index
      %c0_119 = arith.constant 0 : index
      %347 = vector.load %arg10[%c0_118, %c0_119] : memref<2x128xf32, #tpu.memory_space<vmem>>, vector<2x128xf32>
      %c0_120 = arith.constant 0 : index
      %c0_121 = arith.constant 0 : index
      %348 = vector.load %arg8[%c0_120, %c0_121] : memref<1x128xf32, #tpu.memory_space<vmem>>, vector<1x128xf32>
      %349 = vector.broadcast %348 : vector<1x128xf32> to vector<2x128xf32>
      %350 = arith.addf %347, %349 : vector<2x128xf32>
      %cst_122 = arith.constant 0.000000e+00 : f32
      %351 = vector.broadcast %cst_122 : f32 to vector<2x128xf32>
      %352 = arith.maximumf %350, %351 : vector<2x128xf32>
      %c0_123 = arith.constant 0 : index
      %c0_124 = arith.constant 0 : index
      %353 = vector.load %arg10[%c0_123, %c0_124] : memref<2x128xf32, #tpu.memory_space<vmem>>, vector<2x128xf32>
      tpu.vector_store %arg10[%c0_123, %c0_124], %352 {strides = array<i32>} : memref<2x128xf32, #tpu.memory_space<vmem>>, vector<2x128xf32>,
      %c0_125 = arith.constant 0 : index
      %c0_126 = arith.constant 0 : index
      %354 = vector.load %arg11[%c0_125, %c0_126] : memref<2x128xf32, #tpu.memory_space<vmem>>, vector<2x128xf32>
      %c0_127 = arith.constant 0 : index
      %c0_128 = arith.constant 0 : index
      %355 = vector.load %arg9[%c0_127, %c0_128] : memref<1x128xf32, #tpu.memory_space<vmem>>, vector<1x128xf32>
      %356 = vector.broadcast %355 : vector<1x128xf32> to vector<2x128xf32>
      %357 = arith.addf %354, %356 : vector<2x128xf32>
      %cst_129 = arith.constant 0.000000e+00 : f32
      %358 = vector.broadcast %cst_129 : f32 to vector<2x128xf32>
      %359 = arith.maximumf %357, %358 : vector<2x128xf32>
      %c0_130 = arith.constant 0 : index
      %c0_131 = arith.constant 0 : index
      %360 = vector.load %arg11[%c0_130, %c0_131] : memref<2x128xf32, #tpu.memory_space<vmem>>, vector<2x128xf32>
      tpu.vector_store %arg11[%c0_130, %c0_131], %359 {strides = array<i32>} : memref<2x128xf32, #tpu.memory_space<vmem>>, vector<2x128xf32>,
    } else {
    }
    return
  }
  func.func @transform_0(%arg0: i32) -> (i32, i32, i32, i32) {
    %c0_i32 = arith.constant 0 : i32
    %c0_i32_0 = arith.constant 0 : i32
    %c0_i32_1 = arith.constant 0 : i32
    %c0_i32_2 = arith.constant 0 : i32
    return %arg0, %c0_i32, %c0_i32_0, %c0_i32_1 : i32, i32, i32, i32
  }
  func.func @transform_1(%arg0: i32) -> (i32, i32, i32, i32) {
    %c0_i32 = arith.constant 0 : i32
    %c0_i32_0 = arith.constant 0 : i32
    %c0_i32_1 = arith.constant 0 : i32
    %c0_i32_2 = arith.constant 0 : i32
    return %arg0, %c0_i32, %c0_i32_0, %c0_i32_1 : i32, i32, i32, i32
  }
  func.func @transform_2(%arg0: i32) -> (i32, i32, i32) {
    %c0_i32 = arith.constant 0 : i32
    %c0_i32_0 = arith.constant 0 : i32
    %c0_i32_1 = arith.constant 0 : i32
    return %arg0, %c0_i32, %c0_i32_0 : i32, i32, i32
  }
  func.func @transform_3(%arg0: i32) -> (i32, i32, i32) {
    %c0_i32 = arith.constant 0 : i32
    %c0_i32_0 = arith.constant 0 : i32
    %c0_i32_1 = arith.constant 0 : i32
    return %arg0, %c0_i32, %c0_i32_0 : i32, i32, i32
  }
  func.func @transform_4(%arg0: i32) -> (i32, i32, i32) {
    %c0_i32 = arith.constant 0 : i32
    %c0_i32_0 = arith.constant 0 : i32
    %c0_i32_1 = arith.constant 0 : i32
    return %arg0, %c0_i32, %c0_i32_0 : i32, i32, i32
  }
  func.func @transform_5(%arg0: i32) -> (i32, i32, i32) {
    %c0_i32 = arith.constant 0 : i32
    %c0_i32_0 = arith.constant 0 : i32
    %c0_i32_1 = arith.constant 0 : i32
    return %arg0, %c0_i32, %c0_i32_0 : i32, i32, i32
  }
  func.func @transform_6(%arg0: i32) -> (i32, i32, i32) {
    %c0_i32 = arith.constant 0 : i32
    %c0_i32_0 = arith.constant 0 : i32
    %c0_i32_1 = arith.constant 0 : i32
    return %arg0, %c0_i32, %c0_i32_0 : i32, i32, i32
  }
  func.func @transform_7(%arg0: i32) -> (i32, i32) {
    %c0_i32 = arith.constant 0 : i32
    %c0_i32_0 = arith.constant 0 : i32
    %c0_i32_1 = arith.constant 0 : i32
    return %c0_i32, %c0_i32_0 : i32, i32
  }
  func.func @transform_8(%arg0: i32) -> (i32, i32) {
    %c0_i32 = arith.constant 0 : i32
    %c0_i32_0 = arith.constant 0 : i32
    %c0_i32_1 = arith.constant 0 : i32
    return %c0_i32, %c0_i32_0 : i32, i32
  }
  func.func @transform_9(%arg0: i32) -> (i32, i32) {
    %c0_i32 = arith.constant 0 : i32
    %c0_i32_0 = arith.constant 0 : i32
    %c0_i32_1 = arith.constant 0 : i32
    return %c0_i32, %c0_i32_0 : i32, i32
  }
  func.func @transform_10(%arg0: i32) -> (i32, i32) {
    %c0_i32 = arith.constant 0 : i32
    %c0_i32_0 = arith.constant 0 : i32
    %c0_i32_1 = arith.constant 0 : i32
    return %c0_i32, %c0_i32_0 : i32, i32
  }
  func.func @transform_11(%arg0: i32) -> (i32, i32, i32) {
    %c0_i32 = arith.constant 0 : i32
    %c0_i32_0 = arith.constant 0 : i32
    %c0_i32_1 = arith.constant 0 : i32
    return %arg0, %c0_i32, %c0_i32_0 : i32, i32, i32
  }
}

</mosaic_0001>

<llo_original>
// kernel: tpu_custom_call.1
$region0: #{tpu_custom_call.1}
  #allocation0 [shape = 'u32[]', space=smem, size = 0x4, offset = 0x4, fixed_abs, tag = 'smem constant byte address 0x4 - core index']
  #allocation1 [shape = 'u32[144,128]{1,0:T(1,128)}', space=vmem, size = 0x12000, scoped, tag = 'internal scratch']
  %s0 = inlined_call_operand.hbm [shape: f32[4,8,2,384], index: 0, kind: input, shape index: {}]
  %s1 = inlined_call_operand.vmem [shape: f32[4,8,2,1], index: 1, kind: input, shape index: {}]
  %s2 = inlined_call_operand.vmem [shape: f32[4,2,128], index: 2, kind: input, shape index: {}]
  %s3 = inlined_call_operand.hbm [shape: f32[4,128,384], index: 3, kind: input, shape index: {}]
  %s4 = inlined_call_operand.vmem [shape: f32[4,1,384], index: 4, kind: input, shape index: {}]
  %s5 = inlined_call_operand.hbm [shape: f32[4,128,128], index: 5, kind: input, shape index: {}]
  %s6 = inlined_call_operand.hbm [shape: f32[4,128,128], index: 6, kind: input, shape index: {}]
  %s7 = inlined_call_operand.vmem [shape: f32[1,128], index: 7, kind: input, shape index: {}]
  %s8 = inlined_call_operand.vmem [shape: f32[1,128], index: 8, kind: input, shape index: {}]
  %s9 = inlined_call_operand.hbm [shape: f32[2,128], index: 9, kind: output, shape index: {0}]
  %s10 = inlined_call_operand.hbm [shape: f32[2,128], index: 10, kind: output, shape index: {1}]
  %s11 = inlined_call_operand.hbm [shape: f32[4,2,128], index: 11, kind: output, shape index: {2}]
  %12 = xla_tuple %s9, %s10, %s11
  %s13 = sld [smem:[#allocation0]]
  $region109: #{tpu_custom_call.1} parent=0
    _
  %s15 = ssub.s32 1, %s13
  %s16 = scalar_select 0, %s15, %s13
  $region1: #{tpu_custom_call.1} parent=0
    #allocation2 [shape = 'u8[49152]{0}', space=vmem, size = 0xc000, scoped, tag = 'input window, operand 0']
    #allocation3 [shape = 's32[2]{0}', space=sflag, size = 0x8, scoped, tag = 'scoped memory for tpu_custom_call.1']
    #allocation4 [shape = 's32[2]{0}', space=sflag, size = 0x8, scoped, tag = 'scoped memory for tpu_custom_call.1']
    #allocation5 [shape = 'u8[393216]{0}', space=vmem, size = 0x60000, scoped, tag = 'input window, operand 3']
    #allocation6 [shape = 's32[2]{0}', space=sflag, size = 0x8, scoped, tag = 'scoped memory for tpu_custom_call.1']
    #allocation7 [shape = 'u8[131072]{0}', space=vmem, size = 0x20000, scoped, tag = 'input window, operand 5']
    #allocation8 [shape = 'u8[131072]{0}', space=vmem, size = 0x20000, scoped, tag = 'input window, operand 6']
    #allocation9 [shape = 's32[2]{0}', space=sflag, size = 0x8, scoped, tag = 'scoped memory for tpu_custom_call.1']
    #allocation10 [shape = 'u8[1024]{0}', space=vmem, size = 0x400, scoped, tag = 'output window, operand 0, single buffered']
    #allocation11 [shape = 'u8[1024]{0}', space=vmem, size = 0x400, scoped, tag = 'output window, operand 1, single buffered']
    #allocation12 [shape = 's32[1]{0}', space=sflag, size = 0x4, scoped, tag = 'scoped memory for tpu_custom_call.1']
    #allocation13 [shape = 'u8[2048]{0}', space=vmem, size = 0x800, scoped, tag = 'output window, operand 2']
    %17 = vsyncpa [#allocation3], 0
    %s18 = scalar_lea.sflag [#allocation3], 1
    %19 = vsyncpa %s18, 0
    %20 = vsyncpa [#allocation6], 0
    %s21 = scalar_lea.sflag [#allocation6], 1
    %22 = vsyncpa %s21, 0
    %23 = vsyncpa [#allocation9], 0
    %s24 = scalar_lea.sflag [#allocation9], 1
    %25 = vsyncpa %s24, 0
    %26 = vsyncpa [#allocation4], 0
    %27 = vsyncpa [#allocation12], 0
    loop: start=0, step=1, limit=6
    $region2: #{tpu_custom_call.1} parent=1 // loop_pre_header
      _
    $region3: #{tpu_custom_call.1} parent=1 // loop_header
      %s29 = sphi 0, %s33
      %p30 = scmp.ge.s32.totalorder %s29, 6
      %s39 = sphi 0, %s41
      %s42 = sphi 0, %s39
      %s43 = sphi 0, %s42
      %s59 = sphi 0, %s43
      %s65 = sphi 0, %s67
      %s68 = sphi 0, %s65
      %s69 = sphi 0, %s68
      %s85 = sphi 0, %s69
      %s91 = sphi 0, %s93
      %s94 = sphi 0, %s91
      %s95 = sphi 0, %s94
      %s111 = sphi 0, %s95
      %s117 = sphi 0, %s119
      %s120 = sphi 0, %s117
      %s121 = sphi 0, %s120
      %s137 = sphi 0, %s121
      %s143 = sphi 0, %s145
      %s146 = sphi 0, %s143
      %s147 = sphi 0, %s146
      %s163 = sphi 0, %s147
      %s169 = sphi 0, %s171
      %s172 = sphi 0, %s169
      %s173 = sphi 0, %s172
      %s189 = sphi 0, %s173
      %s195 = sphi 0, %s197
      %s198 = sphi 0, %s195
      %s199 = sphi 0, %s198
      %s215 = sphi 0, %s199
      %s219 = sphi 0, %s219
      %s221 = sphi 0, %s219
      %s222 = sphi 0, %s221
      %s236 = sphi 0, %s222
      %s240 = sphi 0, %s240
      %s242 = sphi 0, %s240
      %s243 = sphi 0, %s242
      %s257 = sphi 0, %s243
      %s261 = sphi 0, %s261
      %s263 = sphi 0, %s261
      %s264 = sphi 0, %s263
      %s278 = sphi 0, %s264
      %s282 = sphi 0, %s282
      %s284 = sphi 0, %s282
      %s285 = sphi 0, %s284
      %s299 = sphi 0, %s285
      %s305 = sphi 0, %s307
      %s308 = sphi 0, %s305
      %s309 = sphi 0, %s308
      %s325 = sphi 0, %s309
    $region4: #{tpu_custom_call.1} parent=1 // loop_header_branch
      %32 = sbr.rel (%p30) target = $region8
    $region5: #{tpu_custom_call.1} parent=1 // loop_body
      %s34 = ssub.s32 %s29, 1
      %s35 = ssub.s32 %s29, 2
      %s36 = sadd.s32 %s29, 1
      %s37 = ssub.s32 %s29, %s36
      %p38 = scmp.eq.s32.totalorder %s37, 0
      %s40 = sadd.s32 %s39, 1
      %s41 = scalar_select %p38, %s39, %s40
      %p44 = pneg %p38
      %p45 = scmp.eq.s32.totalorder %s29, 3
      %p46 = por %p44, %p45
      %p47 = scmp.ne.s32.totalorder %s39, %s42
      %p48 = scmp.eq.s32.totalorder %s29, 0
      %p49 = por %p47, %p48
      %p50 = scmp.ne.s32.totalorder %s39, %s42
      %p51 = scmp.eq.s32.totalorder %s34, 3
      %p52 = por %p50, %p51
      %p53 = scmp.ne.s32.totalorder %s42, %s43
      %p54 = scmp.eq.s32.totalorder %s34, 0
      %p55 = por %p53, %p54
      %p56 = scmp.ne.s32.totalorder %s42, %s43
      %p57 = scmp.eq.s32.totalorder %s35, 3
      %p58 = por %p56, %p57
      %p60 = scmp.ne.s32.totalorder %s43, %s59
      %p61 = scmp.eq.s32.totalorder %s35, 0
      %p62 = por %p60, %p61
      %s63 = ssub.s32 %s29, %s36
      %p64 = scmp.eq.s32.totalorder %s63, 0
      %s66 = sadd.s32 %s65, 1
      %s67 = scalar_select %p64, %s65, %s66
      %p70 = pneg %p64
      %p71 = scmp.eq.s32.totalorder %s29, 3
      %p72 = por %p70, %p71
      %p73 = scmp.ne.s32.totalorder %s65, %s68
      %p74 = scmp.eq.s32.totalorder %s29, 0
      %p75 = por %p73, %p74
      %p76 = scmp.ne.s32.totalorder %s65, %s68
      %p77 = scmp.eq.s32.totalorder %s34, 3
      %p78 = por %p76, %p77
      %p79 = scmp.ne.s32.totalorder %s68, %s69
      %p80 = scmp.eq.s32.totalorder %s34, 0
      %p81 = por %p79, %p80
      %p82 = scmp.ne.s32.totalorder %s68, %s69
      %p83 = scmp.eq.s32.totalorder %s35, 3
      %p84 = por %p82, %p83
      %p86 = scmp.ne.s32.totalorder %s69, %s85
      %p87 = scmp.eq.s32.totalorder %s35, 0
      %p88 = por %p86, %p87
      %s89 = ssub.s32 %s29, %s36
      %p90 = scmp.eq.s32.totalorder %s89, 0
      %s92 = sadd.s32 %s91, 1
      %s93 = scalar_select %p90, %s91, %s92
      %p96 = pneg %p90
      %p97 = scmp.eq.s32.totalorder %s29, 3
      %p98 = por %p96, %p97
      %p99 = scmp.ne.s32.totalorder %s91, %s94
      %p100 = scmp.eq.s32.totalorder %s29, 0
      %p101 = por %p99, %p100
      %p102 = scmp.ne.s32.totalorder %s91, %s94
      %p103 = scmp.eq.s32.totalorder %s34, 3
      %p104 = por %p102, %p103
      %p105 = scmp.ne.s32.totalorder %s94, %s95
      %p106 = scmp.eq.s32.totalorder %s34, 0
      %p107 = por %p105, %p106
      %p108 = scmp.ne.s32.totalorder %s94, %s95
      %p109 = scmp.eq.s32.totalorder %s35, 3
      %p110 = por %p108, %p109
      %p112 = scmp.ne.s32.totalorder %s95, %s111
      %p113 = scmp.eq.s32.totalorder %s35, 0
      %p114 = por %p112, %p113
      %s115 = ssub.s32 %s29, %s36
      %p116 = scmp.eq.s32.totalorder %s115, 0
      %s118 = sadd.s32 %s117, 1
      %s119 = scalar_select %p116, %s117, %s118
      %p122 = pneg %p116
      %p123 = scmp.eq.s32.totalorder %s29, 3
      %p124 = por %p122, %p123
      %p125 = scmp.ne.s32.totalorder %s117, %s120
      %p126 = scmp.eq.s32.totalorder %s29, 0
      %p127 = por %p125, %p126
      %p128 = scmp.ne.s32.totalorder %s117, %s120
      %p129 = scmp.eq.s32.totalorder %s34, 3
      %p130 = por %p128, %p129
      %p131 = scmp.ne.s32.totalorder %s120, %s121
      %p132 = scmp.eq.s32.totalorder %s34, 0
      %p133 = por %p131, %p132
      %p134 = scmp.ne.s32.totalorder %s120, %s121
      %p135 = scmp.eq.s32.totalorder %s35, 3
      %p136 = por %p134, %p135
      %p138 = scmp.ne.s32.totalorder %s121, %s137
      %p139 = scmp.eq.s32.totalorder %s35, 0
      %p140 = por %p138, %p139
      %s141 = ssub.s32 %s29, %s36
      %p142 = scmp.eq.s32.totalorder %s141, 0
      %s144 = sadd.s32 %s143, 1
      %s145 = scalar_select %p142, %s143, %s144
      %p148 = pneg %p142
      %p149 = scmp.eq.s32.totalorder %s29, 3
      %p150 = por %p148, %p149
      %p151 = scmp.ne.s32.totalorder %s143, %s146
      %p152 = scmp.eq.s32.totalorder %s29, 0
      %p153 = por %p151, %p152
      %p154 = scmp.ne.s32.totalorder %s143, %s146
      %p155 = scmp.eq.s32.totalorder %s34, 3
      %p156 = por %p154, %p155
      %p157 = scmp.ne.s32.totalorder %s146, %s147
      %p158 = scmp.eq.s32.totalorder %s34, 0
      %p159 = por %p157, %p158
      %p160 = scmp.ne.s32.totalorder %s146, %s147
      %p161 = scmp.eq.s32.totalorder %s35, 3
      %p162 = por %p160, %p161
      %p164 = scmp.ne.s32.totalorder %s147, %s163
      %p165 = scmp.eq.s32.totalorder %s35, 0
      %p166 = por %p164, %p165
      %s167 = ssub.s32 %s29, %s36
      %p168 = scmp.eq.s32.totalorder %s167, 0
      %s170 = sadd.s32 %s169, 1
      %s171 = scalar_select %p168, %s169, %s170
      %p174 = pneg %p168
      %p175 = scmp.eq.s32.totalorder %s29, 3
      %p176 = por %p174, %p175
      %p177 = scmp.ne.s32.totalorder %s169, %s172
      %p178 = scmp.eq.s32.totalorder %s29, 0
      %p179 = por %p177, %p178
      %p180 = scmp.ne.s32.totalorder %s169, %s172
      %p181 = scmp.eq.s32.totalorder %s34, 3
      %p182 = por %p180, %p181
      %p183 = scmp.ne.s32.totalorder %s172, %s173
      %p184 = scmp.eq.s32.totalorder %s34, 0
      %p185 = por %p183, %p184
      %p186 = scmp.ne.s32.totalorder %s172, %s173
      %p187 = scmp.eq.s32.totalorder %s35, 3
      %p188 = por %p186, %p187
      %p190 = scmp.ne.s32.totalorder %s173, %s189
      %p191 = scmp.eq.s32.totalorder %s35, 0
      %p192 = por %p190, %p191
      %s193 = ssub.s32 %s29, %s36
      %p194 = scmp.eq.s32.totalorder %s193, 0
      %s196 = sadd.s32 %s195, 1
      %s197 = scalar_select %p194, %s195, %s196
      %p200 = pneg %p194
      %p201 = scmp.eq.s32.totalorder %s29, 3
      %p202 = por %p200, %p201
      %p203 = scmp.ne.s32.totalorder %s195, %s198
      %p204 = scmp.eq.s32.totalorder %s29, 0
      %p205 = por %p203, %p204
      %p206 = scmp.ne.s32.totalorder %s195, %s198
      %p207 = scmp.eq.s32.totalorder %s34, 3
      %p208 = por %p206, %p207
      %p209 = scmp.ne.s32.totalorder %s198, %s199
      %p210 = scmp.eq.s32.totalorder %s34, 0
      %p211 = por %p209, %p210
      %p212 = scmp.ne.s32.totalorder %s198, %s199
      %p213 = scmp.eq.s32.totalorder %s35, 3
      %p214 = por %p212, %p213
      %p216 = scmp.ne.s32.totalorder %s199, %s215
      %p217 = scmp.eq.s32.totalorder %s35, 0
      %p218 = por %p216, %p217
      %s220 = sadd.s32 %s219, 1
      %p223 = scmp.eq.s32.totalorder %s29, 3
      %p224 = scmp.ne.s32.totalorder %s219, %s221
      %p225 = scmp.eq.s32.totalorder %s29, 0
      %p226 = por %p224, %p225
      %p227 = scmp.ne.s32.totalorder %s219, %s221
      %p228 = scmp.eq.s32.totalorder %s34, 3
      %p229 = por %p227, %p228
      %p230 = scmp.ne.s32.totalorder %s221, %s222
      %p231 = scmp.eq.s32.totalorder %s34, 0
      %p232 = por %p230, %p231
      %p233 = scmp.ne.s32.totalorder %s221, %s222
      %p234 = scmp.eq.s32.totalorder %s35, 3
      %p235 = por %p233, %p234
      %p237 = scmp.ne.s32.totalorder %s222, %s236
      %p238 = scmp.eq.s32.totalorder %s35, 0
      %p239 = por %p237, %p238
      %s241 = sadd.s32 %s240, 1
      %p244 = scmp.eq.s32.totalorder %s29, 3
      %p245 = scmp.ne.s32.totalorder %s240, %s242
      %p246 = scmp.eq.s32.totalorder %s29, 0
      %p247 = por %p245, %p246
      %p248 = scmp.ne.s32.totalorder %s240, %s242
      %p249 = scmp.eq.s32.totalorder %s34, 3
      %p250 = por %p248, %p249
      %p251 = scmp.ne.s32.totalorder %s242, %s243
      %p252 = scmp.eq.s32.totalorder %s34, 0
      %p253 = por %p251, %p252
      %p254 = scmp.ne.s32.totalorder %s242, %s243
      %p255 = scmp.eq.s32.totalorder %s35, 3
      %p256 = por %p254, %p255
      %p258 = scmp.ne.s32.totalorder %s243, %s257
      %p259 = scmp.eq.s32.totalorder %s35, 0
      %p260 = por %p258, %p259
      %s262 = sadd.s32 %s261, 1
      %p265 = scmp.eq.s32.totalorder %s29, 3
      %p266 = scmp.ne.s32.totalorder %s261, %s263
      %p267 = scmp.eq.s32.totalorder %s29, 0
      %p268 = por %p266, %p267
      %p269 = scmp.ne.s32.totalorder %s261, %s263
      %p270 = scmp.eq.s32.totalorder %s34, 3
      %p271 = por %p269, %p270
      %p272 = scmp.ne.s32.totalorder %s263, %s264
      %p273 = scmp.eq.s32.totalorder %s34, 0
      %p274 = por %p272, %p273
      %p275 = scmp.ne.s32.totalorder %s263, %s264
      %p276 = scmp.eq.s32.totalorder %s35, 3
      %p277 = por %p275, %p276
      %p279 = scmp.ne.s32.totalorder %s264, %s278
      %p280 = scmp.eq.s32.totalorder %s35, 0
      %p281 = por %p279, %p280
      %s283 = sadd.s32 %s282, 1
      %p286 = scmp.eq.s32.totalorder %s29, 3
      %p287 = scmp.ne.s32.totalorder %s282, %s284
      %p288 = scmp.eq.s32.totalorder %s29, 0
      %p289 = por %p287, %p288
      %p290 = scmp.ne.s32.totalorder %s282, %s284
      %p291 = scmp.eq.s32.totalorder %s34, 3
      %p292 = por %p290, %p291
      %p293 = scmp.ne.s32.totalorder %s284, %s285
      %p294 = scmp.eq.s32.totalorder %s34, 0
      %p295 = por %p293, %p294
      %p296 = scmp.ne.s32.totalorder %s284, %s285
      %p297 = scmp.eq.s32.totalorder %s35, 3
      %p298 = por %p296, %p297
      %p300 = scmp.ne.s32.totalorder %s285, %s299
      %p301 = scmp.eq.s32.totalorder %s35, 0
      %p302 = por %p300, %p301
      %s303 = ssub.s32 %s29, %s36
      %p304 = scmp.eq.s32.totalorder %s303, 0
      %s306 = sadd.s32 %s305, 1
      %s307 = scalar_select %p304, %s305, %s306
      %p310 = pneg %p304
      %p311 = scmp.eq.s32.totalorder %s29, 3
      %p312 = por %p310, %p311
      %p313 = scmp.ne.s32.totalorder %s305, %s308
      %p314 = scmp.eq.s32.totalorder %s29, 0
      %p315 = por %p313, %p314
      %p316 = scmp.ne.s32.totalorder %s305, %s308
      %p317 = scmp.eq.s32.totalorder %s34, 3
      %p318 = por %p316, %p317
      %p319 = scmp.ne.s32.totalorder %s308, %s309
      %p320 = scmp.eq.s32.totalorder %s34, 0
      %p321 = por %p319, %p320
      %p322 = scmp.ne.s32.totalorder %s308, %s309
      %p323 = scmp.eq.s32.totalorder %s35, 3
      %p324 = por %p322, %p323
      %p326 = scmp.ne.s32.totalorder %s309, %s325
      %p327 = scmp.eq.s32.totalorder %s35, 0
      %p328 = por %p326, %p327
      %p329 = scmp.le.s32.totalorder 1, %s29
      %p330 = scmp.lt.s32.totalorder %s29, 5
      %p331 = pnand %p329, %p330
      %p332 = pneg %p331
      // Predicated region
      $region9: #{tpu_custom_call.1} parent=5 // pred_check
        _
      $region10: #{tpu_custom_call.1} parent=5 // pred_check_branch
        %334 = sbr.rel (%p331) target = $region12
      $region11: #{tpu_custom_call.1} parent=5 // pred_region
        %s335 = ssub.s32 %s29, 1
        // Predicated region
        $region13: #{tpu_custom_call.1} parent=11 // pred_check
          %p336 = pneg %p232
        $region14: #{tpu_custom_call.1} parent=11 // pred_check_branch
          %338 = sbr.rel (%p336) target = $region16
        $region15: #{tpu_custom_call.1} parent=11 // pred_region
          _
        $region16: #{tpu_custom_call.1} parent=11 // pred_fallthru
          _
        // Predicated region
        $region17: #{tpu_custom_call.1} parent=11 // pred_check
          %p339 = pneg %p253
        $region18: #{tpu_custom_call.1} parent=11 // pred_check_branch
          %341 = sbr.rel (%p339) target = $region20
        $region19: #{tpu_custom_call.1} parent=11 // pred_region
          _
        $region20: #{tpu_custom_call.1} parent=11 // pred_fallthru
          _
      $region12: #{tpu_custom_call.1} parent=5 // pred_fallthru
        _
      %p342 = scmp.lt.s32.totalorder %s29, 4
      // Predicated region
      $region21: #{tpu_custom_call.1} parent=5 // pred_check
        %p343 = pneg %p342
      $region22: #{tpu_custom_call.1} parent=5 // pred_check_branch
        %345 = sbr.rel (%p343) target = $region24
      $region23: #{tpu_custom_call.1} parent=5 // pred_region
        // Predicated region
        $region25: #{tpu_custom_call.1} parent=23 // pred_check
          %p346 = pneg %p49
        $region26: #{tpu_custom_call.1} parent=23 // pred_check_branch
          %348 = sbr.rel (%p346) target = $region28
        $region27: #{tpu_custom_call.1} parent=23 // pred_region
          %s349 = sand.u32 %s39, 1
          %s350 = scalar_lea.sflag [#allocation3], %s349
          %s351 = sand.u32 %s39, 1
          %s352 = smul.addr %s351, 48
          %s353 = scalar_lea.vmem [#allocation2], %s352
          %s355 = ssub.s32 768, 768
          %356 = vsyncadd %s350, %s355
          %s357 = smul.addr %s29, 24
          %s358 = smul.addr %s357, 32
          %s359 = scalar_lea.hbm %s0, %s358
          %s360 = sshll.u32 %s353, 4
          %s361 = int_to_ptr.vmem [resolvable:$true] %s360
          %366 = dma.hbm_to_vmem [thread:$0]  %s359, 768, %s361, %s350, 96, 96, 6
        $region28: #{tpu_custom_call.1} parent=23 // pred_fallthru
          _
        // Predicated region
        $region29: #{tpu_custom_call.1} parent=23 // pred_check
          %p367 = pneg %p75
        $region30: #{tpu_custom_call.1} parent=23 // pred_check_branch
          %369 = sbr.rel (%p367) target = $region32
        $region31: #{tpu_custom_call.1} parent=23 // pred_region
          %p370 = scmp.lt.s32.totalorder %s29, 3
          %s371 = scalar_select %p370, %s29, 3
          %s372 = smul.addr %s371, 8
          %s373 = smul.addr %s372, 2
          %s374 = scalar_lea.vmem %s1, %s373
        $region32: #{tpu_custom_call.1} parent=23 // pred_fallthru
          _
        // Predicated region
        $region33: #{tpu_custom_call.1} parent=23 // pred_check
          %p375 = pneg %p101
        $region34: #{tpu_custom_call.1} parent=23 // pred_check_branch
          %377 = sbr.rel (%p375) target = $region36
        $region35: #{tpu_custom_call.1} parent=23 // pred_region
          %p378 = scmp.lt.s32.totalorder %s29, 3
          %s379 = scalar_select %p378, %s29, 3
          %s380 = smul.addr %s379, 2
          %s381 = scalar_lea.vmem %s2, %s380
        $region36: #{tpu_custom_call.1} parent=23 // pred_fallthru
          _
        // Predicated region
        $region37: #{tpu_custom_call.1} parent=23 // pred_check
          %p382 = pneg %p127
        $region38: #{tpu_custom_call.1} parent=23 // pred_check_branch
          %384 = sbr.rel (%p382) target = $region40
        $region39: #{tpu_custom_call.1} parent=23 // pred_region
          %s385 = sand.u32 %s29, 1
          %s386 = scalar_lea.sflag [#allocation6], %s385
          %s387 = sand.u32 %s117, 1
          %s388 = smul.addr %s387, 384
          %s389 = scalar_lea.vmem [#allocation5], %s388
          %s391 = ssub.s32 6144, 6144
          %392 = vsyncadd %s386, %s391
          %s393 = smul.addr %s29, 48
          %s394 = smul.addr %s393, 128
          %s395 = scalar_lea.hbm %s3, %s394
          %s396 = sshll.u32 %s389, 4
          %s397 = int_to_ptr.vmem [resolvable:$true] %s396
          %402 = dma.hbm_to_vmem [thread:$0]  %s395, 6144, %s397, %s386, 384, 384, 24
        $region40: #{tpu_custom_call.1} parent=23 // pred_fallthru
          _
        // Predicated region
        $region41: #{tpu_custom_call.1} parent=23 // pred_check
          %p403 = pneg %p153
        $region42: #{tpu_custom_call.1} parent=23 // pred_check_branch
          %405 = sbr.rel (%p403) target = $region44
        $region43: #{tpu_custom_call.1} parent=23 // pred_region
          %p406 = scmp.lt.s32.totalorder %s29, 3
          %s407 = scalar_select %p406, %s29, 3
          %s408 = smul.addr %s407, 3
          %s409 = scalar_lea.vmem %s4, %s408
        $region44: #{tpu_custom_call.1} parent=23 // pred_fallthru
          _
        // Predicated region
        $region45: #{tpu_custom_call.1} parent=23 // pred_check
          %p410 = pneg %p179
        $region46: #{tpu_custom_call.1} parent=23 // pred_check_branch
          %412 = sbr.rel (%p410) target = $region48
        $region47: #{tpu_custom_call.1} parent=23 // pred_region
          %s413 = sand.u32 %s29, 1
          %s414 = scalar_lea.sflag [#allocation6], %s413
          %s415 = sand.u32 %s169, 1
          %s416 = smul.addr %s415, 128
          %s417 = scalar_lea.vmem [#allocation7], %s416
          %s419 = ssub.s32 2048, 2048
          %420 = vsyncadd %s414, %s419
          %s421 = smul.addr %s29, 16
          %s422 = smul.addr %s421, 128
          %s423 = scalar_lea.hbm %s5, %s422
          %s424 = sshll.u32 %s417, 4
          %s425 = int_to_ptr.vmem [resolvable:$true] %s424
          %430 = dma.hbm_to_vmem [thread:$0]  %s423, 2048, %s425, %s414, 128, 128, 8
        $region48: #{tpu_custom_call.1} parent=23 // pred_fallthru
          _
        // Predicated region
        $region49: #{tpu_custom_call.1} parent=23 // pred_check
          %p431 = pneg %p205
        $region50: #{tpu_custom_call.1} parent=23 // pred_check_branch
          %433 = sbr.rel (%p431) target = $region52
        $region51: #{tpu_custom_call.1} parent=23 // pred_region
          %s434 = sand.u32 %s195, 1
          %s435 = scalar_lea.sflag [#allocation9], %s434
          %s436 = sand.u32 %s195, 1
          %s437 = smul.addr %s436, 128
          %s438 = scalar_lea.vmem [#allocation8], %s437
          %s440 = ssub.s32 2048, 2048
          %441 = vsyncadd %s435, %s440
          %s442 = smul.addr %s29, 16
          %s443 = smul.addr %s442, 128
          %s444 = scalar_lea.hbm %s6, %s443
          %s445 = sshll.u32 %s438, 4
          %s446 = int_to_ptr.vmem [resolvable:$true] %s445
          %451 = dma.hbm_to_vmem [thread:$0]  %s444, 2048, %s446, %s435, 128, 128, 8
        $region52: #{tpu_custom_call.1} parent=23 // pred_fallthru
          _
      $region24: #{tpu_custom_call.1} parent=5 // pred_fallthru
        _
      %p452 = scmp.le.s32.totalorder 1, %s29
      %p453 = scmp.lt.s32.totalorder %s29, 5
      %p454 = pnand %p452, %p453
      %p455 = pneg %p454
      // Predicated region
      $region53: #{tpu_custom_call.1} parent=5 // pred_check
        _
      $region54: #{tpu_custom_call.1} parent=5 // pred_check_branch
        %457 = sbr.rel (%p454) target = $region56
      $region55: #{tpu_custom_call.1} parent=5 // pred_region
        %s458 = ssub.s32 %s29, 1
        %s459 = sand.u32 %s42, 1
        %s460 = scalar_lea.sflag [#allocation3], %s459
        %s461 = sand.u32 %s42, 1
        %s462 = smul.addr %s461, 48
        %s463 = scalar_lea.vmem [#allocation2], %s462
        // Predicated region
        $region57: #{tpu_custom_call.1} parent=55 // pred_check
          %p464 = pneg %p55
        $region58: #{tpu_custom_call.1} parent=55 // pred_check_branch
          %466 = sbr.rel (%p464) target = $region60
        $region59: #{tpu_custom_call.1} parent=55 // pred_region
          %467 = dma.done %s460, 768
        $region60: #{tpu_custom_call.1} parent=55 // pred_fallthru
          _
        %s468 = sand.u32 %s34, 1
        %s469 = scalar_lea.sflag [#allocation6], %s468
        %s470 = sand.u32 %s120, 1
        %s471 = smul.addr %s470, 384
        %s472 = scalar_lea.vmem [#allocation5], %s471
        // Predicated region
        $region61: #{tpu_custom_call.1} parent=55 // pred_check
          %p473 = pneg %p133
        $region62: #{tpu_custom_call.1} parent=55 // pred_check_branch
          %475 = sbr.rel (%p473) target = $region64
        $region63: #{tpu_custom_call.1} parent=55 // pred_region
          %476 = dma.done %s469, 6144
        $region64: #{tpu_custom_call.1} parent=55 // pred_fallthru
          _
        %s477 = sand.u32 %s34, 1
        %s478 = scalar_lea.sflag [#allocation6], %s477
        %s479 = sand.u32 %s172, 1
        %s480 = smul.addr %s479, 128
        %s481 = scalar_lea.vmem [#allocation7], %s480
        // Predicated region
        $region65: #{tpu_custom_call.1} parent=55 // pred_check
          %p482 = pneg %p185
        $region66: #{tpu_custom_call.1} parent=55 // pred_check_branch
          %484 = sbr.rel (%p482) target = $region68
        $region67: #{tpu_custom_call.1} parent=55 // pred_region
          %485 = dma.done %s478, 2048
        $region68: #{tpu_custom_call.1} parent=55 // pred_fallthru
          _
        %s486 = sand.u32 %s198, 1
        %s487 = scalar_lea.sflag [#allocation9], %s486
        %s488 = sand.u32 %s198, 1
        %s489 = smul.addr %s488, 128
        %s490 = scalar_lea.vmem [#allocation8], %s489
        // Predicated region
        $region69: #{tpu_custom_call.1} parent=55 // pred_check
          %p491 = pneg %p211
        $region70: #{tpu_custom_call.1} parent=55 // pred_check_branch
          %493 = sbr.rel (%p491) target = $region72
        $region71: #{tpu_custom_call.1} parent=55 // pred_region
          %494 = dma.done %s487, 2048
        $region72: #{tpu_custom_call.1} parent=55 // pred_fallthru
          _
        %s495 = sand.u32 %s42, 1
        %s496 = scalar_lea.sflag [#allocation3], %s495
        %s497 = sand.u32 %s42, 1
        %s498 = smul.addr %s497, 48
        %s499 = scalar_lea.vmem [#allocation2], %s498
        %p500 = pneg %p55
        %p501 = pneg %p52
        %p502 = scmp.lt.s32.totalorder %s34, 3
        %s503 = scalar_select %p502, %s34, 3
        %s504 = smul.addr %s503, 8
        %s505 = smul.addr %s504, 2
        %s506 = scalar_lea.vmem %s1, %s505
        %p507 = pneg %p81
        %p508 = pneg %p78
        %p509 = scmp.lt.s32.totalorder %s34, 3
        %s510 = scalar_select %p509, %s34, 3
        %s511 = smul.addr %s510, 2
        %s512 = scalar_lea.vmem %s2, %s511
        %p513 = pneg %p107
        %p514 = pneg %p104
        %s515 = sand.u32 %s34, 1
        %s516 = scalar_lea.sflag [#allocation6], %s515
        %s517 = sand.u32 %s120, 1
        %s518 = smul.addr %s517, 384
        %s519 = scalar_lea.vmem [#allocation5], %s518
        %p520 = pneg %p133
        %p521 = pneg %p130
        %p522 = scmp.lt.s32.totalorder %s34, 3
        %s523 = scalar_select %p522, %s34, 3
        %s524 = smul.addr %s523, 3
        %s525 = scalar_lea.vmem %s4, %s524
        %p526 = pneg %p159
        %p527 = pneg %p156
        %s528 = sand.u32 %s34, 1
        %s529 = scalar_lea.sflag [#allocation6], %s528
        %s530 = sand.u32 %s172, 1
        %s531 = smul.addr %s530, 128
        %s532 = scalar_lea.vmem [#allocation7], %s531
        %p533 = pneg %p185
        %p534 = pneg %p182
        %s535 = sand.u32 %s198, 1
        %s536 = scalar_lea.sflag [#allocation9], %s535
        %s537 = sand.u32 %s198, 1
        %s538 = smul.addr %s537, 128
        %s539 = scalar_lea.vmem [#allocation8], %s538
        %p540 = pneg %p211
        %p541 = pneg %p208
        %p542 = pneg %p232
        %p543 = pneg %p229
        %p544 = pneg %p253
        %p545 = pneg %p250
        %p546 = pneg %p274
        %p547 = pneg %p271
        %p548 = pneg %p295
        %p549 = pneg %p292
        %p550 = pneg %p321
        %p551 = pneg %p318
        %s552 = sand.u32 %s34, 1
        %s553 = scalar_lea.sflag [#allocation4], %s552
        %s554 = sand.u32 %s308, 1
        %s555 = smul.addr %s554, 2
        %s556 = scalar_lea.vmem [#allocation13], %s555
        %p557 = scmp.lt.s32.totalorder %s34, 3
        %s558 = scalar_select %p557, %s34, 3
        %s559 = smul.addr %s558, 8
        %s560 = smul.addr %s559, 2
        %s561 = scalar_lea.vmem %s1, %s560
        %p562 = scmp.lt.s32.totalorder %s34, 3
        %s563 = scalar_select %p562, %s34, 3
        %s564 = smul.addr %s563, 2
        %s565 = scalar_lea.vmem %s2, %s564
        %p566 = scmp.lt.s32.totalorder %s34, 3
        %s567 = scalar_select %p566, %s34, 3
        %s568 = smul.addr %s567, 3
        %s569 = scalar_lea.vmem %s4, %s568
        %v570 = vld [vmem:[%s472] sm:$0xff]
        %v571 = vld [vmem:[%s472 + $0x8] sm:$0xff]
        %v572 = vld [vmem:[%s472 + $0x10] sm:$0xff]
        %v573 = vld [vmem:[%s472 + $0x18] sm:$0xff]
        %v574 = vld [vmem:[%s472 + $0x20] sm:$0xff]
        %v575 = vld [vmem:[%s472 + $0x28] sm:$0xff]
        %v576 = vld [vmem:[%s472 + $0x30] sm:$0xff]
        %v577 = vld [vmem:[%s472 + $0x38] sm:$0xff]
        %v578 = vld [vmem:[%s472 + $0x40] sm:$0xff]
        %v579 = vld [vmem:[%s472 + $0x48] sm:$0xff]
        %v580 = vld [vmem:[%s472 + $0x50] sm:$0xff]
        %v581 = vld [vmem:[%s472 + $0x58] sm:$0xff]
        %v582 = vld [vmem:[%s472 + $0x60] sm:$0xff]
        %v583 = vld [vmem:[%s472 + $0x68] sm:$0xff]
        %v584 = vld [vmem:[%s472 + $0x70] sm:$0xff]
        %v585 = vld [vmem:[%s472 + $0x78] sm:$0xff]
        %v586 = vld [vmem:[%s472 + $0x80] sm:$0xff]
        %v587 = vld [vmem:[%s472 + $0x88] sm:$0xff]
        %v588 = vld [vmem:[%s472 + $0x90] sm:$0xff]
        %v589 = vld [vmem:[%s472 + $0x98] sm:$0xff]
        %v590 = vld [vmem:[%s472 + $0xa0] sm:$0xff]
        %v591 = vld [vmem:[%s472 + $0xa8] sm:$0xff]
        %v592 = vld [vmem:[%s472 + $0xb0] sm:$0xff]
        %v593 = vld [vmem:[%s472 + $0xb8] sm:$0xff]
        %v594 = vld [vmem:[%s472 + $0xc0] sm:$0xff]
        %v595 = vld [vmem:[%s472 + $0xc8] sm:$0xff]
        %v596 = vld [vmem:[%s472 + $0xd0] sm:$0xff]
        %v597 = vld [vmem:[%s472 + $0xd8] sm:$0xff]
        %v598 = vld [vmem:[%s472 + $0xe0] sm:$0xff]
        %v599 = vld [vmem:[%s472 + $0xe8] sm:$0xff]
        %v600 = vld [vmem:[%s472 + $0xf0] sm:$0xff]
        %v601 = vld [vmem:[%s472 + $0xf8] sm:$0xff]
        %v602 = vld [vmem:[%s472 + $0x100] sm:$0xff]
        %v603 = vld [vmem:[%s472 + $0x108] sm:$0xff]
        %v604 = vld [vmem:[%s472 + $0x110] sm:$0xff]
        %v605 = vld [vmem:[%s472 + $0x118] sm:$0xff]
        %v606 = vld [vmem:[%s472 + $0x120] sm:$0xff]
        %v607 = vld [vmem:[%s472 + $0x128] sm:$0xff]
        %v608 = vld [vmem:[%s472 + $0x130] sm:$0xff]
        %v609 = vld [vmem:[%s472 + $0x138] sm:$0xff]
        %v610 = vld [vmem:[%s472 + $0x140] sm:$0xff]
        %v611 = vld [vmem:[%s472 + $0x148] sm:$0xff]
        %v612 = vld [vmem:[%s472 + $0x150] sm:$0xff]
        %v613 = vld [vmem:[%s472 + $0x158] sm:$0xff]
        %v614 = vld [vmem:[%s472 + $0x160] sm:$0xff]
        %v615 = vld [vmem:[%s472 + $0x168] sm:$0xff]
        %v616 = vld [vmem:[%s472 + $0x170] sm:$0xff]
        %v617 = vld [vmem:[%s472 + $0x178] sm:$0xff]
        %v618 = vld [vmem:[%s569] sm:$0x7]
        %v619 = vld [vmem:[%s565] sm:$0x3]
        %v620 = vld [vmem:[%s463] sm:$0x3f]
        %v622 = vlaneseq
        %v623 = vshrl.u32 %v622, 7
        %v624 = vsub.s32 0, %v623
        %v625 = vrot.slane %v618, %v624
        %v626 = vlaneseq
        %v627 = vshrl.u32 %v626, 7
        %v628 = vsub.s32 1, %v627
        %v629 = vrot.slane %v618, %v628
        %v630 = vlaneseq
        %v631 = vshrl.u32 %v630, 7
        %v632 = vsub.s32 2, %v631
        %v633 = vrot.slane %v618, %v632
        %637 = vmatprep.subr.mxu0 %v571
        %638 = vmatpush1.msra.mxu0 %v570
        %639 = vmatprep.subr.mxu0 %v574
        %640 = vmatpush1.msra.mxu0 %v573
        %641 = vmatprep.subr.mxu0 %v577
        %642 = vmatpush1.msra.mxu0 %v576
        %643 = vmatprep.subr.mxu0 %v580
        %644 = vmatpush1.msra.mxu0 %v579
        %645 = vmatprep.subr.mxu0 %v583
        %646 = vmatpush1.msra.mxu0 %v582
        %647 = vmatprep.subr.mxu0 %v586
        %648 = vmatpush1.msra.mxu0 %v585
        %649 = vmatprep.subr.mxu0 %v589
        %650 = vmatpush1.msra.mxu0 %v588
        %651 = vmatprep.subr.mxu0 %v592
        %652 = vmatpush1.msra.mxu0 %v591
        %653 = vmatprep.subr.mxu0 %v595
        %654 = vmatpush1.msra.mxu0 %v594
        %655 = vmatprep.subr.mxu0 %v598
        %656 = vmatpush1.msra.mxu0 %v597
        %657 = vmatprep.subr.mxu0 %v601
        %658 = vmatpush1.msra.mxu0 %v600
        %659 = vmatprep.subr.mxu0 %v604
        %660 = vmatpush1.msra.mxu0 %v603
        %661 = vmatprep.subr.mxu0 %v607
        %662 = vmatpush1.msra.mxu0 %v606
        %663 = vmatprep.subr.mxu0 %v610
        %664 = vmatpush1.msra.mxu0 %v609
        %665 = vmatprep.subr.mxu0 %v613
        %666 = vmatpush1.msra.mxu0 %v612
        %667 = vmatprep.subr.mxu0 %v616
        %668 = vmatpush1.msra.mxu0 %v615
        %669 = vmatprep.subr.mxu0 0.0
        %670 = vmatpush1.msra.mxu0 0.0
        %671 = vmatprep.subr.mxu0 0.0
        %672 = vmatpush1.msra.mxu0 0.0
        %673 = vmatprep.subr.mxu0 0.0
        %674 = vmatpush1.msra.mxu0 0.0
        %675 = vmatprep.subr.mxu0 0.0
        %676 = vmatpush1.msra.mxu0 0.0
        %677 = vmatprep.subr.mxu0 0.0
        %678 = vmatpush1.msra.mxu0 0.0
        %679 = vmatprep.subr.mxu0 0.0
        %680 = vmatpush1.msra.mxu0 0.0
        %681 = vmatprep.subr.mxu0 0.0
        %682 = vmatpush1.msra.mxu0 0.0
        %683 = vmatprep.subr.mxu0 0.0
        %684 = vmatpush1.msra.mxu0 0.0
        %685 = vmatprep.subr.mxu0 0.0
        %686 = vmatpush1.msra.mxu0 0.0
        %687 = vmatprep.subr.mxu0 0.0
        %688 = vmatpush1.msra.mxu0 0.0
        %689 = vmatprep.subr.mxu0 0.0
        %690 = vmatpush1.msra.mxu0 0.0
        %691 = vmatprep.subr.mxu0 0.0
        %692 = vmatpush1.msra.mxu0 0.0
        %693 = vmatprep.subr.mxu0 0.0
        %694 = vmatpush1.msra.mxu0 0.0
        %695 = vmatprep.subr.mxu0 0.0
        %696 = vmatpush1.msra.mxu0 0.0
        %697 = vmatprep.subr.mxu0 0.0
        %698 = vmatpush1.msra.mxu0 0.0
        %699 = vmatprep.subr.mxu0 0.0
        %700 = vmatpush1.msra.mxu0 0.0
        %701 = vmatprep.mubr.f32.mxu0 0.0
        %702 = vmatmul.mubr.f32.gmra.mrb[0].mxu0 %v619
        %v703 = vpop.f32.mrb[0].mxu0
        %v704 = vadd.f32 %v625, %v703
        %v705 = vpop.f32.mrb[0].mxu0
        %v706 = vadd.f32 %v629, %v705
        %707 = vdwg.mxu0
        %708 = vmatprep.subr.mxu0 0.0
        %709 = vmatpush1.msra.mxu0 %v572
        %710 = vmatprep.subr.mxu0 0.0
        %711 = vmatpush1.msra.mxu0 %v575
        %712 = vmatprep.subr.mxu0 0.0
        %713 = vmatpush1.msra.mxu0 %v578
        %714 = vmatprep.subr.mxu0 0.0
        %715 = vmatpush1.msra.mxu0 %v581
        %716 = vmatprep.subr.mxu0 0.0
        %717 = vmatpush1.msra.mxu0 %v584
        %718 = vmatprep.subr.mxu0 0.0
        %719 = vmatpush1.msra.mxu0 %v587
        %720 = vmatprep.subr.mxu0 0.0
        %721 = vmatpush1.msra.mxu0 %v590
        %722 = vmatprep.subr.mxu0 0.0
        %723 = vmatpush1.msra.mxu0 %v593
        %724 = vmatprep.subr.mxu0 0.0
        %725 = vmatpush1.msra.mxu0 %v596
        %726 = vmatprep.subr.mxu0 0.0
        %727 = vmatpush1.msra.mxu0 %v599
        %728 = vmatprep.subr.mxu0 0.0
        %729 = vmatpush1.msra.mxu0 %v602
        %730 = vmatprep.subr.mxu0 0.0
        %731 = vmatpush1.msra.mxu0 %v605
        %732 = vmatprep.subr.mxu0 0.0
        %733 = vmatpush1.msra.mxu0 %v608
        %734 = vmatprep.subr.mxu0 0.0
        %735 = vmatpush1.msra.mxu0 %v611
        %736 = vmatprep.subr.mxu0 0.0
        %737 = vmatpush1.msra.mxu0 %v614
        %738 = vmatprep.subr.mxu0 0.0
        %739 = vmatpush1.msra.mxu0 %v617
        %740 = vmatprep.subr.mxu0 0.0
        %741 = vmatpush1.msra.mxu0 0.0
        %742 = vmatprep.subr.mxu0 0.0
        %743 = vmatpush1.msra.mxu0 0.0
        %744 = vmatprep.subr.mxu0 0.0
        %745 = vmatpush1.msra.mxu0 0.0
        %746 = vmatprep.subr.mxu0 0.0
        %747 = vmatpush1.msra.mxu0 0.0
        %748 = vmatprep.subr.mxu0 0.0
        %749 = vmatpush1.msra.mxu0 0.0
        %750 = vmatprep.subr.mxu0 0.0
        %751 = vmatpush1.msra.mxu0 0.0
        %752 = vmatprep.subr.mxu0 0.0
        %753 = vmatpush1.msra.mxu0 0.0
        %754 = vmatprep.subr.mxu0 0.0
        %755 = vmatpush1.msra.mxu0 0.0
        %756 = vmatprep.subr.mxu0 0.0
        %757 = vmatpush1.msra.mxu0 0.0
        %758 = vmatprep.subr.mxu0 0.0
        %759 = vmatpush1.msra.mxu0 0.0
        %760 = vmatprep.subr.mxu0 0.0
        %761 = vmatpush1.msra.mxu0 0.0
        %762 = vmatprep.subr.mxu0 0.0
        %763 = vmatpush1.msra.mxu0 0.0
        %764 = vmatprep.subr.mxu0 0.0
        %765 = vmatpush1.msra.mxu0 0.0
        %766 = vmatprep.subr.mxu0 0.0
        %767 = vmatpush1.msra.mxu0 0.0
        %768 = vmatprep.subr.mxu0 0.0
        %769 = vmatpush1.msra.mxu0 0.0
        %770 = vmatprep.subr.mxu0 0.0
        %771 = vmatpush1.msra.mxu0 0.0
        %772 = vmatprep.mubr.f32.mxu0 0.0
        %773 = vmatmul.mubr.f32.gmra.mrb[0].mxu0 %v619
        %v774 = vpop.f32.mrb[0].mxu0
        %v775 = vadd.f32 %v633, %v774
        %v776 = vpop.f32.mrb[0].mxu0
        %777 = vdwg.mxu0
        %v778 = vadd.f32 %v620, %v704
        %v779 = vxor.u32 %v778, 2147483648
        %v780 = vmul.f32 %v779, 1.442695
        %v781 = vpow.pop %v780
        %v782 = vadd.f32 %v781, 1.0
        %v783 = vrcp.pop %v782
        %v784 = vmul.f32 1.0, %v783
        %v786 = vrot.slane %v620, 2
        %v788 = vadd.f32 %v786, %v706
        %v789 = vxor.u32 %v788, 2147483648
        %v790 = vmul.f32 %v789, 1.442695
        %v791 = vpow.pop %v790
        %v792 = vadd.f32 %v791, 1.0
        %v793 = vrcp.pop %v792
        %v794 = vmul.f32 1.0, %v793
        %v795 = vmul.f32 %v784, %v775
        %v796 = vrot.slane %v620, 4
        %v798 = vadd.f32 %v796, %v795
        %v799 = vtanh.pop %v798
        %v800 = vsub.f32 1.0, %v794
        %v801 = vmul.f32 %v800, %v799
        %v802 = vmul.f32 %v794, %v619
        %v803 = vadd.f32 %v801, %v802
        %v804 = vld [vmem:[%s561] sm:$0x3]
        %vm805 = vcmp.ne.f32.partialorder %v804, 0.0
        %v806 = vsel %vm805, 1, 0
        %807 = vset.pattern.permute.xlu0 0
        %808 = vperm.xlu0 %807, %v806
        %v809 = vpop.permute.xlu0 %808
        %vm810 = vcmp.eq.s32.totalorder %v809, 1
        %v811 = vsel %vm810, %v803, %v619
        %s812 = scalar_lea.vmem %s463, 6 [#allocation2]
        %v813 = vld [vmem:[%s812] sm:$0x3f]
        %814 = vmatprep.subr.mxu0 %v571
        %815 = vmatpush1.msra.mxu0 %v570
        %816 = vmatprep.subr.mxu0 %v574
        %817 = vmatpush1.msra.mxu0 %v573
        %818 = vmatprep.subr.mxu0 %v577
        %819 = vmatpush1.msra.mxu0 %v576
        %820 = vmatprep.subr.mxu0 %v580
        %821 = vmatpush1.msra.mxu0 %v579
        %822 = vmatprep.subr.mxu0 %v583
        %823 = vmatpush1.msra.mxu0 %v582
        %824 = vmatprep.subr.mxu0 %v586
        %825 = vmatpush1.msra.mxu0 %v585
        %826 = vmatprep.subr.mxu0 %v589
        %827 = vmatpush1.msra.mxu0 %v588
        %828 = vmatprep.subr.mxu0 %v592
        %829 = vmatpush1.msra.mxu0 %v591
        %830 = vmatprep.subr.mxu0 %v595
        %831 = vmatpush1.msra.mxu0 %v594
        %832 = vmatprep.subr.mxu0 %v598
        %833 = vmatpush1.msra.mxu0 %v597
        %834 = vmatprep.subr.mxu0 %v601
        %835 = vmatpush1.msra.mxu0 %v600
        %836 = vmatprep.subr.mxu0 %v604
        %837 = vmatpush1.msra.mxu0 %v603
        %838 = vmatprep.subr.mxu0 %v607
        %839 = vmatpush1.msra.mxu0 %v606
        %840 = vmatprep.subr.mxu0 %v610
        %841 = vmatpush1.msra.mxu0 %v609
        %842 = vmatprep.subr.mxu0 %v613
        %843 = vmatpush1.msra.mxu0 %v612
        %844 = vmatprep.subr.mxu0 %v616
        %845 = vmatpush1.msra.mxu0 %v615
        %846 = vmatprep.subr.mxu0 0.0
        %847 = vmatpush1.msra.mxu0 0.0
        %848 = vmatprep.subr.mxu0 0.0
        %849 = vmatpush1.msra.mxu0 0.0
        %850 = vmatprep.subr.mxu0 0.0
        %851 = vmatpush1.msra.mxu0 0.0
        %852 = vmatprep.subr.mxu0 0.0
        %853 = vmatpush1.msra.mxu0 0.0
        %854 = vmatprep.subr.mxu0 0.0
        %855 = vmatpush1.msra.mxu0 0.0
        %856 = vmatprep.subr.mxu0 0.0
        %857 = vmatpush1.msra.mxu0 0.0
        %858 = vmatprep.subr.mxu0 0.0
        %859 = vmatpush1.msra.mxu0 0.0
        %860 = vmatprep.subr.mxu0 0.0
        %861 = vmatpush1.msra.mxu0 0.0
        %862 = vmatprep.subr.mxu0 0.0
        %863 = vmatpush1.msra.mxu0 0.0
        %864 = vmatprep.subr.mxu0 0.0
        %865 = vmatpush1.msra.mxu0 0.0
        %866 = vmatprep.subr.mxu0 0.0
        %867 = vmatpush1.msra.mxu0 0.0
        %868 = vmatprep.subr.mxu0 0.0
        %869 = vmatpush1.msra.mxu0 0.0
        %870 = vmatprep.subr.mxu0 0.0
        %871 = vmatpush1.msra.mxu0 0.0
        %872 = vmatprep.subr.mxu0 0.0
        %873 = vmatpush1.msra.mxu0 0.0
        %874 = vmatprep.subr.mxu0 0.0
        %875 = vmatpush1.msra.mxu0 0.0
        %876 = vmatprep.subr.mxu0 0.0
        %877 = vmatpush1.msra.mxu0 0.0
        %878 = vmatprep.mubr.f32.mxu0 0.0
        %879 = vmatmul.mubr.f32.gmra.mrb[0].mxu0 %v811
        %v880 = vpop.f32.mrb[0].mxu0
        %v881 = vadd.f32 %v625, %v880
        %v882 = vpop.f32.mrb[0].mxu0
        %v883 = vadd.f32 %v629, %v882
        %884 = vdwg.mxu0
        %885 = vmatprep.subr.mxu0 0.0
        %886 = vmatpush1.msra.mxu0 %v572
        %887 = vmatprep.subr.mxu0 0.0
        %888 = vmatpush1.msra.mxu0 %v575
        %889 = vmatprep.subr.mxu0 0.0
        %890 = vmatpush1.msra.mxu0 %v578
        %891 = vmatprep.subr.mxu0 0.0
        %892 = vmatpush1.msra.mxu0 %v581
        %893 = vmatprep.subr.mxu0 0.0
        %894 = vmatpush1.msra.mxu0 %v584
        %895 = vmatprep.subr.mxu0 0.0
        %896 = vmatpush1.msra.mxu0 %v587
        %897 = vmatprep.subr.mxu0 0.0
        %898 = vmatpush1.msra.mxu0 %v590
        %899 = vmatprep.subr.mxu0 0.0
        %900 = vmatpush1.msra.mxu0 %v593
        %901 = vmatprep.subr.mxu0 0.0
        %902 = vmatpush1.msra.mxu0 %v596
        %903 = vmatprep.subr.mxu0 0.0
        %904 = vmatpush1.msra.mxu0 %v599
        %905 = vmatprep.subr.mxu0 0.0
        %906 = vmatpush1.msra.mxu0 %v602
        %907 = vmatprep.subr.mxu0 0.0
        %908 = vmatpush1.msra.mxu0 %v605
        %909 = vmatprep.subr.mxu0 0.0
        %910 = vmatpush1.msra.mxu0 %v608
        %911 = vmatprep.subr.mxu0 0.0
        %912 = vmatpush1.msra.mxu0 %v611
        %913 = vmatprep.subr.mxu0 0.0
        %914 = vmatpush1.msra.mxu0 %v614
        %915 = vmatprep.subr.mxu0 0.0
        %916 = vmatpush1.msra.mxu0 %v617
        %917 = vmatprep.subr.mxu0 0.0
        %918 = vmatpush1.msra.mxu0 0.0
        %919 = vmatprep.subr.mxu0 0.0
        %920 = vmatpush1.msra.mxu0 0.0
        %921 = vmatprep.subr.mxu0 0.0
        %922 = vmatpush1.msra.mxu0 0.0
        %923 = vmatprep.subr.mxu0 0.0
        %924 = vmatpush1.msra.mxu0 0.0
        %925 = vmatprep.subr.mxu0 0.0
        %926 = vmatpush1.msra.mxu0 0.0
        %927 = vmatprep.subr.mxu0 0.0
        %928 = vmatpush1.msra.mxu0 0.0
        %929 = vmatprep.subr.mxu0 0.0
        %930 = vmatpush1.msra.mxu0 0.0
        %931 = vmatprep.subr.mxu0 0.0
        %932 = vmatpush1.msra.mxu0 0.0
        %933 = vmatprep.subr.mxu0 0.0
        %934 = vmatpush1.msra.mxu0 0.0
        %935 = vmatprep.subr.mxu0 0.0
        %936 = vmatpush1.msra.mxu0 0.0
        %937 = vmatprep.subr.mxu0 0.0
        %938 = vmatpush1.msra.mxu0 0.0
        %939 = vmatprep.subr.mxu0 0.0
        %940 = vmatpush1.msra.mxu0 0.0
        %941 = vmatprep.subr.mxu0 0.0
        %942 = vmatpush1.msra.mxu0 0.0
        %943 = vmatprep.subr.mxu0 0.0
        %944 = vmatpush1.msra.mxu0 0.0
        %945 = vmatprep.subr.mxu0 0.0
        %946 = vmatpush1.msra.mxu0 0.0
        %947 = vmatprep.subr.mxu0 0.0
        %948 = vmatpush1.msra.mxu0 0.0
        %949 = vmatprep.mubr.f32.mxu0 0.0
        %950 = vmatmul.mubr.f32.gmra.mrb[0].mxu0 %v811
        %v951 = vpop.f32.mrb[0].mxu0
        %v952 = vadd.f32 %v633, %v951
        %v953 = vpop.f32.mrb[0].mxu0
        %954 = vdwg.mxu0
        %v955 = vadd.f32 %v813, %v881
        %v956 = vxor.u32 %v955, 2147483648
        %v957 = vmul.f32 %v956, 1.442695
        %v958 = vpow.pop %v957
        %v959 = vadd.f32 %v958, 1.0
        %v960 = vrcp.pop %v959
        %v961 = vmul.f32 1.0, %v960
        %v963 = vrot.slane %v813, 2
        %v965 = vadd.f32 %v963, %v883
        %v966 = vxor.u32 %v965, 2147483648
        %v967 = vmul.f32 %v966, 1.442695
        %v968 = vpow.pop %v967
        %v969 = vadd.f32 %v968, 1.0
        %v970 = vrcp.pop %v969
        %v971 = vmul.f32 1.0, %v970
        %v972 = vmul.f32 %v961, %v952
        %v973 = vrot.slane %v813, 4
        %v975 = vadd.f32 %v973, %v972
        %v976 = vtanh.pop %v975
        %v977 = vsub.f32 1.0, %v971
        %v978 = vmul.f32 %v977, %v976
        %v979 = vmul.f32 %v971, %v811
        %v980 = vadd.f32 %v978, %v979
        %s981 = scalar_lea.vmem %s561, 2
        %v982 = vld [vmem:[%s981] sm:$0x3]
        %vm983 = vcmp.ne.f32.partialorder %v982, 0.0
        %v984 = vsel %vm983, 1, 0
        %985 = vset.pattern.permute.xlu0 0
        %986 = vperm.xlu0 %985, %v984
        %v987 = vpop.permute.xlu0 %986
        %vm988 = vcmp.eq.s32.totalorder %v987, 1
        %v989 = vsel %vm988, %v980, %v811
        %s990 = scalar_lea.vmem %s463, 12 [#allocation2]
        %v991 = vld [vmem:[%s990] sm:$0x3f]
        %992 = vmatprep.subr.mxu0 %v571
        %993 = vmatpush1.msra.mxu0 %v570
        %994 = vmatprep.subr.mxu0 %v574
        %995 = vmatpush1.msra.mxu0 %v573
        %996 = vmatprep.subr.mxu0 %v577
        %997 = vmatpush1.msra.mxu0 %v576
        %998 = vmatprep.subr.mxu0 %v580
        %999 = vmatpush1.msra.mxu0 %v579
        %1000 = vmatprep.subr.mxu0 %v583
        %1001 = vmatpush1.msra.mxu0 %v582
        %1002 = vmatprep.subr.mxu0 %v586
        %1003 = vmatpush1.msra.mxu0 %v585
        %1004 = vmatprep.subr.mxu0 %v589
        %1005 = vmatpush1.msra.mxu0 %v588
        %1006 = vmatprep.subr.mxu0 %v592
        %1007 = vmatpush1.msra.mxu0 %v591
        %1008 = vmatprep.subr.mxu0 %v595
        %1009 = vmatpush1.msra.mxu0 %v594
        %1010 = vmatprep.subr.mxu0 %v598
        %1011 = vmatpush1.msra.mxu0 %v597
        %1012 = vmatprep.subr.mxu0 %v601
        %1013 = vmatpush1.msra.mxu0 %v600
        %1014 = vmatprep.subr.mxu0 %v604
        %1015 = vmatpush1.msra.mxu0 %v603
        %1016 = vmatprep.subr.mxu0 %v607
        %1017 = vmatpush1.msra.mxu0 %v606
        %1018 = vmatprep.subr.mxu0 %v610
        %1019 = vmatpush1.msra.mxu0 %v609
        %1020 = vmatprep.subr.mxu0 %v613
        %1021 = vmatpush1.msra.mxu0 %v612
        %1022 = vmatprep.subr.mxu0 %v616
        %1023 = vmatpush1.msra.mxu0 %v615
        %1024 = vmatprep.subr.mxu0 0.0
        %1025 = vmatpush1.msra.mxu0 0.0
        %1026 = vmatprep.subr.mxu0 0.0
        %1027 = vmatpush1.msra.mxu0 0.0
        %1028 = vmatprep.subr.mxu0 0.0
        %1029 = vmatpush1.msra.mxu0 0.0
        %1030 = vmatprep.subr.mxu0 0.0
        %1031 = vmatpush1.msra.mxu0 0.0
        %1032 = vmatprep.subr.mxu0 0.0
        %1033 = vmatpush1.msra.mxu0 0.0
        %1034 = vmatprep.subr.mxu0 0.0
        %1035 = vmatpush1.msra.mxu0 0.0
        %1036 = vmatprep.subr.mxu0 0.0
        %1037 = vmatpush1.msra.mxu0 0.0
        %1038 = vmatprep.subr.mxu0 0.0
        %1039 = vmatpush1.msra.mxu0 0.0
        %1040 = vmatprep.subr.mxu0 0.0
        %1041 = vmatpush1.msra.mxu0 0.0
        %1042 = vmatprep.subr.mxu0 0.0
        %1043 = vmatpush1.msra.mxu0 0.0
        %1044 = vmatprep.subr.mxu0 0.0
        %1045 = vmatpush1.msra.mxu0 0.0
        %1046 = vmatprep.subr.mxu0 0.0
        %1047 = vmatpush1.msra.mxu0 0.0
        %1048 = vmatprep.subr.mxu0 0.0
        %1049 = vmatpush1.msra.mxu0 0.0
        %1050 = vmatprep.subr.mxu0 0.0
        %1051 = vmatpush1.msra.mxu0 0.0
        %1052 = vmatprep.subr.mxu0 0.0
        %1053 = vmatpush1.msra.mxu0 0.0
        %1054 = vmatprep.subr.mxu0 0.0
        %1055 = vmatpush1.msra.mxu0 0.0
        %1056 = vmatprep.mubr.f32.mxu0 0.0
        %1057 = vmatmul.mubr.f32.gmra.mrb[0].mxu0 %v989
        %v1058 = vpop.f32.mrb[0].mxu0
        %v1059 = vadd.f32 %v625, %v1058
        %v1060 = vpop.f32.mrb[0].mxu0
        %v1061 = vadd.f32 %v629, %v1060
        %1062 = vdwg.mxu0
        %1063 = vmatprep.subr.mxu0 0.0
        %1064 = vmatpush1.msra.mxu0 %v572
        %1065 = vmatprep.subr.mxu0 0.0
        %1066 = vmatpush1.msra.mxu0 %v575
        %1067 = vmatprep.subr.mxu0 0.0
        %1068 = vmatpush1.msra.mxu0 %v578
        %1069 = vmatprep.subr.mxu0 0.0
        %1070 = vmatpush1.msra.mxu0 %v581
        %1071 = vmatprep.subr.mxu0 0.0
        %1072 = vmatpush1.msra.mxu0 %v584
        %1073 = vmatprep.subr.mxu0 0.0
        %1074 = vmatpush1.msra.mxu0 %v587
        %1075 = vmatprep.subr.mxu0 0.0
        %1076 = vmatpush1.msra.mxu0 %v590
        %1077 = vmatprep.subr.mxu0 0.0
        %1078 = vmatpush1.msra.mxu0 %v593
        %1079 = vmatprep.subr.mxu0 0.0
        %1080 = vmatpush1.msra.mxu0 %v596
        %1081 = vmatprep.subr.mxu0 0.0
        %1082 = vmatpush1.msra.mxu0 %v599
        %1083 = vmatprep.subr.mxu0 0.0
        %1084 = vmatpush1.msra.mxu0 %v602
        %1085 = vmatprep.subr.mxu0 0.0
        %1086 = vmatpush1.msra.mxu0 %v605
        %1087 = vmatprep.subr.mxu0 0.0
        %1088 = vmatpush1.msra.mxu0 %v608
        %1089 = vmatprep.subr.mxu0 0.0
        %1090 = vmatpush1.msra.mxu0 %v611
        %1091 = vmatprep.subr.mxu0 0.0
        %1092 = vmatpush1.msra.mxu0 %v614
        %1093 = vmatprep.subr.mxu0 0.0
        %1094 = vmatpush1.msra.mxu0 %v617
        %1095 = vmatprep.subr.mxu0 0.0
        %1096 = vmatpush1.msra.mxu0 0.0
        %1097 = vmatprep.subr.mxu0 0.0
        %1098 = vmatpush1.msra.mxu0 0.0
        %1099 = vmatprep.subr.mxu0 0.0
        %1100 = vmatpush1.msra.mxu0 0.0
        %1101 = vmatprep.subr.mxu0 0.0
        %1102 = vmatpush1.msra.mxu0 0.0
        %1103 = vmatprep.subr.mxu0 0.0
        %1104 = vmatpush1.msra.mxu0 0.0
        %1105 = vmatprep.subr.mxu0 0.0
        %1106 = vmatpush1.msra.mxu0 0.0
        %1107 = vmatprep.subr.mxu0 0.0
        %1108 = vmatpush1.msra.mxu0 0.0
        %1109 = vmatprep.subr.mxu0 0.0
        %1110 = vmatpush1.msra.mxu0 0.0
        %1111 = vmatprep.subr.mxu0 0.0
        %1112 = vmatpush1.msra.mxu0 0.0
        %1113 = vmatprep.subr.mxu0 0.0
        %1114 = vmatpush1.msra.mxu0 0.0
        %1115 = vmatprep.subr.mxu0 0.0
        %1116 = vmatpush1.msra.mxu0 0.0
        %1117 = vmatprep.subr.mxu0 0.0
        %1118 = vmatpush1.msra.mxu0 0.0
        %1119 = vmatprep.subr.mxu0 0.0
        %1120 = vmatpush1.msra.mxu0 0.0
        %1121 = vmatprep.subr.mxu0 0.0
        %1122 = vmatpush1.msra.mxu0 0.0
        %1123 = vmatprep.subr.mxu0 0.0
        %1124 = vmatpush1.msra.mxu0 0.0
        %1125 = vmatprep.subr.mxu0 0.0
        %1126 = vmatpush1.msra.mxu0 0.0
        %1127 = vmatprep.mubr.f32.mxu0 0.0
        %1128 = vmatmul.mubr.f32.gmra.mrb[0].mxu0 %v989
        %v1129 = vpop.f32.mrb[0].mxu0
        %v1130 = vadd.f32 %v633, %v1129
        %v1131 = vpop.f32.mrb[0].mxu0
        %1132 = vdwg.mxu0
        %v1133 = vadd.f32 %v991, %v1059
        %v1134 = vxor.u32 %v1133, 2147483648
        %v1135 = vmul.f32 %v1134, 1.442695
        %v1136 = vpow.pop %v1135
        %v1137 = vadd.f32 %v1136, 1.0
        %v1138 = vrcp.pop %v1137
        %v1139 = vmul.f32 1.0, %v1138
        %v1141 = vrot.slane %v991, 2
        %v1143 = vadd.f32 %v1141, %v1061
        %v1144 = vxor.u32 %v1143, 2147483648
        %v1145 = vmul.f32 %v1144, 1.442695
        %v1146 = vpow.pop %v1145
        %v1147 = vadd.f32 %v1146, 1.0
        %v1148 = vrcp.pop %v1147
        %v1149 = vmul.f32 1.0, %v1148
        %v1150 = vmul.f32 %v1139, %v1130
        %v1151 = vrot.slane %v991, 4
        %v1153 = vadd.f32 %v1151, %v1150
        %v1154 = vtanh.pop %v1153
        %v1155 = vsub.f32 1.0, %v1149
        %v1156 = vmul.f32 %v1155, %v1154
        %v1157 = vmul.f32 %v1149, %v989
        %v1158 = vadd.f32 %v1156, %v1157
        %s1159 = scalar_lea.vmem %s561, 4
        %v1160 = vld [vmem:[%s1159] sm:$0x3]
        %vm1161 = vcmp.ne.f32.partialorder %v1160, 0.0
        %v1162 = vsel %vm1161, 1, 0
        %1163 = vset.pattern.permute.xlu0 0
        %1164 = vperm.xlu0 %1163, %v1162
        %v1165 = vpop.permute.xlu0 %1164
        %vm1166 = vcmp.eq.s32.totalorder %v1165, 1
        %v1167 = vsel %vm1166, %v1158, %v989
        %s1168 = scalar_lea.vmem %s463, 18 [#allocation2]
        %v1169 = vld [vmem:[%s1168] sm:$0x3f]
        %1170 = vmatprep.subr.mxu0 %v571
        %1171 = vmatpush1.msra.mxu0 %v570
        %1172 = vmatprep.subr.mxu0 %v574
        %1173 = vmatpush1.msra.mxu0 %v573
        %1174 = vmatprep.subr.mxu0 %v577
        %1175 = vmatpush1.msra.mxu0 %v576
        %1176 = vmatprep.subr.mxu0 %v580
        %1177 = vmatpush1.msra.mxu0 %v579
        %1178 = vmatprep.subr.mxu0 %v583
        %1179 = vmatpush1.msra.mxu0 %v582
        %1180 = vmatprep.subr.mxu0 %v586
        %1181 = vmatpush1.msra.mxu0 %v585
        %1182 = vmatprep.subr.mxu0 %v589
        %1183 = vmatpush1.msra.mxu0 %v588
        %1184 = vmatprep.subr.mxu0 %v592
        %1185 = vmatpush1.msra.mxu0 %v591
        %1186 = vmatprep.subr.mxu0 %v595
        %1187 = vmatpush1.msra.mxu0 %v594
        %1188 = vmatprep.subr.mxu0 %v598
        %1189 = vmatpush1.msra.mxu0 %v597
        %1190 = vmatprep.subr.mxu0 %v601
        %1191 = vmatpush1.msra.mxu0 %v600
        %1192 = vmatprep.subr.mxu0 %v604
        %1193 = vmatpush1.msra.mxu0 %v603
        %1194 = vmatprep.subr.mxu0 %v607
        %1195 = vmatpush1.msra.mxu0 %v606
        %1196 = vmatprep.subr.mxu0 %v610
        %1197 = vmatpush1.msra.mxu0 %v609
        %1198 = vmatprep.subr.mxu0 %v613
        %1199 = vmatpush1.msra.mxu0 %v612
        %1200 = vmatprep.subr.mxu0 %v616
        %1201 = vmatpush1.msra.mxu0 %v615
        %1202 = vmatprep.subr.mxu0 0.0
        %1203 = vmatpush1.msra.mxu0 0.0
        %1204 = vmatprep.subr.mxu0 0.0
        %1205 = vmatpush1.msra.mxu0 0.0
        %1206 = vmatprep.subr.mxu0 0.0
        %1207 = vmatpush1.msra.mxu0 0.0
        %1208 = vmatprep.subr.mxu0 0.0
        %1209 = vmatpush1.msra.mxu0 0.0
        %1210 = vmatprep.subr.mxu0 0.0
        %1211 = vmatpush1.msra.mxu0 0.0
        %1212 = vmatprep.subr.mxu0 0.0
        %1213 = vmatpush1.msra.mxu0 0.0
        %1214 = vmatprep.subr.mxu0 0.0
        %1215 = vmatpush1.msra.mxu0 0.0
        %1216 = vmatprep.subr.mxu0 0.0
        %1217 = vmatpush1.msra.mxu0 0.0
        %1218 = vmatprep.subr.mxu0 0.0
        %1219 = vmatpush1.msra.mxu0 0.0
        %1220 = vmatprep.subr.mxu0 0.0
        %1221 = vmatpush1.msra.mxu0 0.0
        %1222 = vmatprep.subr.mxu0 0.0
        %1223 = vmatpush1.msra.mxu0 0.0
        %1224 = vmatprep.subr.mxu0 0.0
        %1225 = vmatpush1.msra.mxu0 0.0
        %1226 = vmatprep.subr.mxu0 0.0
        %1227 = vmatpush1.msra.mxu0 0.0
        %1228 = vmatprep.subr.mxu0 0.0
        %1229 = vmatpush1.msra.mxu0 0.0
        %1230 = vmatprep.subr.mxu0 0.0
        %1231 = vmatpush1.msra.mxu0 0.0
        %1232 = vmatprep.subr.mxu0 0.0
        %1233 = vmatpush1.msra.mxu0 0.0
        %1234 = vmatprep.mubr.f32.mxu0 0.0
        %1235 = vmatmul.mubr.f32.gmra.mrb[0].mxu0 %v1167
        %v1236 = vpop.f32.mrb[0].mxu0
        %v1237 = vadd.f32 %v625, %v1236
        %v1238 = vpop.f32.mrb[0].mxu0
        %v1239 = vadd.f32 %v629, %v1238
        %1240 = vdwg.mxu0
        %1241 = vmatprep.subr.mxu0 0.0
        %1242 = vmatpush1.msra.mxu0 %v572
        %1243 = vmatprep.subr.mxu0 0.0
        %1244 = vmatpush1.msra.mxu0 %v575
        %1245 = vmatprep.subr.mxu0 0.0
        %1246 = vmatpush1.msra.mxu0 %v578
        %1247 = vmatprep.subr.mxu0 0.0
        %1248 = vmatpush1.msra.mxu0 %v581
        %1249 = vmatprep.subr.mxu0 0.0
        %1250 = vmatpush1.msra.mxu0 %v584
        %1251 = vmatprep.subr.mxu0 0.0
        %1252 = vmatpush1.msra.mxu0 %v587
        %1253 = vmatprep.subr.mxu0 0.0
        %1254 = vmatpush1.msra.mxu0 %v590
        %1255 = vmatprep.subr.mxu0 0.0
        %1256 = vmatpush1.msra.mxu0 %v593
        %1257 = vmatprep.subr.mxu0 0.0
        %1258 = vmatpush1.msra.mxu0 %v596
        %1259 = vmatprep.subr.mxu0 0.0
        %1260 = vmatpush1.msra.mxu0 %v599
        %1261 = vmatprep.subr.mxu0 0.0
        %1262 = vmatpush1.msra.mxu0 %v602
        %1263 = vmatprep.subr.mxu0 0.0
        %1264 = vmatpush1.msra.mxu0 %v605
        %1265 = vmatprep.subr.mxu0 0.0
        %1266 = vmatpush1.msra.mxu0 %v608
        %1267 = vmatprep.subr.mxu0 0.0
        %1268 = vmatpush1.msra.mxu0 %v611
        %1269 = vmatprep.subr.mxu0 0.0
        %1270 = vmatpush1.msra.mxu0 %v614
        %1271 = vmatprep.subr.mxu0 0.0
        %1272 = vmatpush1.msra.mxu0 %v617
        %1273 = vmatprep.subr.mxu0 0.0
        %1274 = vmatpush1.msra.mxu0 0.0
        %1275 = vmatprep.subr.mxu0 0.0
        %1276 = vmatpush1.msra.mxu0 0.0
        %1277 = vmatprep.subr.mxu0 0.0
        %1278 = vmatpush1.msra.mxu0 0.0
        %1279 = vmatprep.subr.mxu0 0.0
        %1280 = vmatpush1.msra.mxu0 0.0
        %1281 = vmatprep.subr.mxu0 0.0
        %1282 = vmatpush1.msra.mxu0 0.0
        %1283 = vmatprep.subr.mxu0 0.0
        %1284 = vmatpush1.msra.mxu0 0.0
        %1285 = vmatprep.subr.mxu0 0.0
        %1286 = vmatpush1.msra.mxu0 0.0
        %1287 = vmatprep.subr.mxu0 0.0
        %1288 = vmatpush1.msra.mxu0 0.0
        %1289 = vmatprep.subr.mxu0 0.0
        %1290 = vmatpush1.msra.mxu0 0.0
        %1291 = vmatprep.subr.mxu0 0.0
        %1292 = vmatpush1.msra.mxu0 0.0
        %1293 = vmatprep.subr.mxu0 0.0
        %1294 = vmatpush1.msra.mxu0 0.0
        %1295 = vmatprep.subr.mxu0 0.0
        %1296 = vmatpush1.msra.mxu0 0.0
        %1297 = vmatprep.subr.mxu0 0.0
        %1298 = vmatpush1.msra.mxu0 0.0
        %1299 = vmatprep.subr.mxu0 0.0
        %1300 = vmatpush1.msra.mxu0 0.0
        %1301 = vmatprep.subr.mxu0 0.0
        %1302 = vmatpush1.msra.mxu0 0.0
        %1303 = vmatprep.subr.mxu0 0.0
        %1304 = vmatpush1.msra.mxu0 0.0
        %1305 = vmatprep.mubr.f32.mxu0 0.0
        %1306 = vmatmul.mubr.f32.gmra.mrb[0].mxu0 %v1167
        %v1307 = vpop.f32.mrb[0].mxu0
        %v1308 = vadd.f32 %v633, %v1307
        %v1309 = vpop.f32.mrb[0].mxu0
        %1310 = vdwg.mxu0
        %v1311 = vadd.f32 %v1169, %v1237
        %v1312 = vxor.u32 %v1311, 2147483648
        %v1313 = vmul.f32 %v1312, 1.442695
        %v1314 = vpow.pop %v1313
        %v1315 = vadd.f32 %v1314, 1.0
        %v1316 = vrcp.pop %v1315
        %v1317 = vmul.f32 1.0, %v1316
        %v1319 = vrot.slane %v1169, 2
        %v1321 = vadd.f32 %v1319, %v1239
        %v1322 = vxor.u32 %v1321, 2147483648
        %v1323 = vmul.f32 %v1322, 1.442695
        %v1324 = vpow.pop %v1323
        %v1325 = vadd.f32 %v1324, 1.0
        %v1326 = vrcp.pop %v1325
        %v1327 = vmul.f32 1.0, %v1326
        %v1328 = vmul.f32 %v1317, %v1308
        %v1329 = vrot.slane %v1169, 4
        %v1331 = vadd.f32 %v1329, %v1328
        %v1332 = vtanh.pop %v1331
        %v1333 = vsub.f32 1.0, %v1327
        %v1334 = vmul.f32 %v1333, %v1332
        %v1335 = vmul.f32 %v1327, %v1167
        %v1336 = vadd.f32 %v1334, %v1335
        %s1337 = scalar_lea.vmem %s561, 6
        %v1338 = vld [vmem:[%s1337] sm:$0x3]
        %vm1339 = vcmp.ne.f32.partialorder %v1338, 0.0
        %v1340 = vsel %vm1339, 1, 0
        %1341 = vset.pattern.permute.xlu0 0
        %1342 = vperm.xlu0 %1341, %v1340
        %v1343 = vpop.permute.xlu0 %1342
        %vm1344 = vcmp.eq.s32.totalorder %v1343, 1
        %v1345 = vsel %vm1344, %v1336, %v1167
        %s1346 = scalar_lea.vmem %s463, 24 [#allocation2]
        %v1347 = vld [vmem:[%s1346] sm:$0x3f]
        %1348 = vmatprep.subr.mxu0 %v571
        %1349 = vmatpush1.msra.mxu0 %v570
        %1350 = vmatprep.subr.mxu0 %v574
        %1351 = vmatpush1.msra.mxu0 %v573
        %1352 = vmatprep.subr.mxu0 %v577
        %1353 = vmatpush1.msra.mxu0 %v576
        %1354 = vmatprep.subr.mxu0 %v580
        %1355 = vmatpush1.msra.mxu0 %v579
        %1356 = vmatprep.subr.mxu0 %v583
        %1357 = vmatpush1.msra.mxu0 %v582
        %1358 = vmatprep.subr.mxu0 %v586
        %1359 = vmatpush1.msra.mxu0 %v585
        %1360 = vmatprep.subr.mxu0 %v589
        %1361 = vmatpush1.msra.mxu0 %v588
        %1362 = vmatprep.subr.mxu0 %v592
        %1363 = vmatpush1.msra.mxu0 %v591
        %1364 = vmatprep.subr.mxu0 %v595
        %1365 = vmatpush1.msra.mxu0 %v594
        %1366 = vmatprep.subr.mxu0 %v598
        %1367 = vmatpush1.msra.mxu0 %v597
        %1368 = vmatprep.subr.mxu0 %v601
        %1369 = vmatpush1.msra.mxu0 %v600
        %1370 = vmatprep.subr.mxu0 %v604
        %1371 = vmatpush1.msra.mxu0 %v603
        %1372 = vmatprep.subr.mxu0 %v607
        %1373 = vmatpush1.msra.mxu0 %v606
        %1374 = vmatprep.subr.mxu0 %v610
        %1375 = vmatpush1.msra.mxu0 %v609
        %1376 = vmatprep.subr.mxu0 %v613
        %1377 = vmatpush1.msra.mxu0 %v612
        %1378 = vmatprep.subr.mxu0 %v616
        %1379 = vmatpush1.msra.mxu0 %v615
        %1380 = vmatprep.subr.mxu0 0.0
        %1381 = vmatpush1.msra.mxu0 0.0
        %1382 = vmatprep.subr.mxu0 0.0
        %1383 = vmatpush1.msra.mxu0 0.0
        %1384 = vmatprep.subr.mxu0 0.0
        %1385 = vmatpush1.msra.mxu0 0.0
        %1386 = vmatprep.subr.mxu0 0.0
        %1387 = vmatpush1.msra.mxu0 0.0
        %1388 = vmatprep.subr.mxu0 0.0
        %1389 = vmatpush1.msra.mxu0 0.0
        %1390 = vmatprep.subr.mxu0 0.0
        %1391 = vmatpush1.msra.mxu0 0.0
        %1392 = vmatprep.subr.mxu0 0.0
        %1393 = vmatpush1.msra.mxu0 0.0
        %1394 = vmatprep.subr.mxu0 0.0
        %1395 = vmatpush1.msra.mxu0 0.0
        %1396 = vmatprep.subr.mxu0 0.0
        %1397 = vmatpush1.msra.mxu0 0.0
        %1398 = vmatprep.subr.mxu0 0.0
        %1399 = vmatpush1.msra.mxu0 0.0
        %1400 = vmatprep.subr.mxu0 0.0
        %1401 = vmatpush1.msra.mxu0 0.0
        %1402 = vmatprep.subr.mxu0 0.0
        %1403 = vmatpush1.msra.mxu0 0.0
        %1404 = vmatprep.subr.mxu0 0.0
        %1405 = vmatpush1.msra.mxu0 0.0
        %1406 = vmatprep.subr.mxu0 0.0
        %1407 = vmatpush1.msra.mxu0 0.0
        %1408 = vmatprep.subr.mxu0 0.0
        %1409 = vmatpush1.msra.mxu0 0.0
        %1410 = vmatprep.subr.mxu0 0.0
        %1411 = vmatpush1.msra.mxu0 0.0
        %1412 = vmatprep.mubr.f32.mxu0 0.0
        %1413 = vmatmul.mubr.f32.gmra.mrb[0].mxu0 %v1345
        %v1414 = vpop.f32.mrb[0].mxu0
        %v1415 = vadd.f32 %v625, %v1414
        %v1416 = vpop.f32.mrb[0].mxu0
        %v1417 = vadd.f32 %v629, %v1416
        %1418 = vdwg.mxu0
        %1419 = vmatprep.subr.mxu0 0.0
        %1420 = vmatpush1.msra.mxu0 %v572
        %1421 = vmatprep.subr.mxu0 0.0
        %1422 = vmatpush1.msra.mxu0 %v575
        %1423 = vmatprep.subr.mxu0 0.0
        %1424 = vmatpush1.msra.mxu0 %v578
        %1425 = vmatprep.subr.mxu0 0.0
        %1426 = vmatpush1.msra.mxu0 %v581
        %1427 = vmatprep.subr.mxu0 0.0
        %1428 = vmatpush1.msra.mxu0 %v584
        %1429 = vmatprep.subr.mxu0 0.0
        %1430 = vmatpush1.msra.mxu0 %v587
        %1431 = vmatprep.subr.mxu0 0.0
        %1432 = vmatpush1.msra.mxu0 %v590
        %1433 = vmatprep.subr.mxu0 0.0
        %1434 = vmatpush1.msra.mxu0 %v593
        %1435 = vmatprep.subr.mxu0 0.0
        %1436 = vmatpush1.msra.mxu0 %v596
        %1437 = vmatprep.subr.mxu0 0.0
        %1438 = vmatpush1.msra.mxu0 %v599
        %1439 = vmatprep.subr.mxu0 0.0
        %1440 = vmatpush1.msra.mxu0 %v602
        %1441 = vmatprep.subr.mxu0 0.0
        %1442 = vmatpush1.msra.mxu0 %v605
        %1443 = vmatprep.subr.mxu0 0.0
        %1444 = vmatpush1.msra.mxu0 %v608
        %1445 = vmatprep.subr.mxu0 0.0
        %1446 = vmatpush1.msra.mxu0 %v611
        %1447 = vmatprep.subr.mxu0 0.0
        %1448 = vmatpush1.msra.mxu0 %v614
        %1449 = vmatprep.subr.mxu0 0.0
        %1450 = vmatpush1.msra.mxu0 %v617
        %1451 = vmatprep.subr.mxu0 0.0
        %1452 = vmatpush1.msra.mxu0 0.0
        %1453 = vmatprep.subr.mxu0 0.0
        %1454 = vmatpush1.msra.mxu0 0.0
        %1455 = vmatprep.subr.mxu0 0.0
        %1456 = vmatpush1.msra.mxu0 0.0
        %1457 = vmatprep.subr.mxu0 0.0
        %1458 = vmatpush1.msra.mxu0 0.0
        %1459 = vmatprep.subr.mxu0 0.0
        %1460 = vmatpush1.msra.mxu0 0.0
        %1461 = vmatprep.subr.mxu0 0.0
        %1462 = vmatpush1.msra.mxu0 0.0
        %1463 = vmatprep.subr.mxu0 0.0
        %1464 = vmatpush1.msra.mxu0 0.0
        %1465 = vmatprep.subr.mxu0 0.0
        %1466 = vmatpush1.msra.mxu0 0.0
        %1467 = vmatprep.subr.mxu0 0.0
        %1468 = vmatpush1.msra.mxu0 0.0
        %1469 = vmatprep.subr.mxu0 0.0
        %1470 = vmatpush1.msra.mxu0 0.0
        %1471 = vmatprep.subr.mxu0 0.0
        %1472 = vmatpush1.msra.mxu0 0.0
        %1473 = vmatprep.subr.mxu0 0.0
        %1474 = vmatpush1.msra.mxu0 0.0
        %1475 = vmatprep.subr.mxu0 0.0
        %1476 = vmatpush1.msra.mxu0 0.0
        %1477 = vmatprep.subr.mxu0 0.0
        %1478 = vmatpush1.msra.mxu0 0.0
        %1479 = vmatprep.subr.mxu0 0.0
        %1480 = vmatpush1.msra.mxu0 0.0
        %1481 = vmatprep.subr.mxu0 0.0
        %1482 = vmatpush1.msra.mxu0 0.0
        %1483 = vmatprep.mubr.f32.mxu0 0.0
        %1484 = vmatmul.mubr.f32.gmra.mrb[0].mxu0 %v1345
        %v1485 = vpop.f32.mrb[0].mxu0
        %v1486 = vadd.f32 %v633, %v1485
        %v1487 = vpop.f32.mrb[0].mxu0
        %1488 = vdwg.mxu0
        %v1489 = vadd.f32 %v1347, %v1415
        %v1490 = vxor.u32 %v1489, 2147483648
        %v1491 = vmul.f32 %v1490, 1.442695
        %v1492 = vpow.pop %v1491
        %v1493 = vadd.f32 %v1492, 1.0
        %v1494 = vrcp.pop %v1493
        %v1495 = vmul.f32 1.0, %v1494
        %v1497 = vrot.slane %v1347, 2
        %v1499 = vadd.f32 %v1497, %v1417
        %v1500 = vxor.u32 %v1499, 2147483648
        %v1501 = vmul.f32 %v1500, 1.442695
        %v1502 = vpow.pop %v1501
        %v1503 = vadd.f32 %v1502, 1.0
        %v1504 = vrcp.pop %v1503
        %v1505 = vmul.f32 1.0, %v1504
        %v1506 = vmul.f32 %v1495, %v1486
        %v1507 = vrot.slane %v1347, 4
        %v1509 = vadd.f32 %v1507, %v1506
        %v1510 = vtanh.pop %v1509
        %v1511 = vsub.f32 1.0, %v1505
        %v1512 = vmul.f32 %v1511, %v1510
        %v1513 = vmul.f32 %v1505, %v1345
        %v1514 = vadd.f32 %v1512, %v1513
        %s1515 = scalar_lea.vmem %s561, 8
        %v1516 = vld [vmem:[%s1515] sm:$0x3]
        %vm1517 = vcmp.ne.f32.partialorder %v1516, 0.0
        %v1518 = vsel %vm1517, 1, 0
        %1519 = vset.pattern.permute.xlu0 0
        %1520 = vperm.xlu0 %1519, %v1518
        %v1521 = vpop.permute.xlu0 %1520
        %vm1522 = vcmp.eq.s32.totalorder %v1521, 1
        %v1523 = vsel %vm1522, %v1514, %v1345
        %s1524 = scalar_lea.vmem %s463, 30 [#allocation2]
        %v1525 = vld [vmem:[%s1524] sm:$0x3f]
        %1526 = vmatprep.subr.mxu0 %v571
        %1527 = vmatpush1.msra.mxu0 %v570
        %1528 = vmatprep.subr.mxu0 %v574
        %1529 = vmatpush1.msra.mxu0 %v573
        %1530 = vmatprep.subr.mxu0 %v577
        %1531 = vmatpush1.msra.mxu0 %v576
        %1532 = vmatprep.subr.mxu0 %v580
        %1533 = vmatpush1.msra.mxu0 %v579
        %1534 = vmatprep.subr.mxu0 %v583
        %1535 = vmatpush1.msra.mxu0 %v582
        %1536 = vmatprep.subr.mxu0 %v586
        %1537 = vmatpush1.msra.mxu0 %v585
        %1538 = vmatprep.subr.mxu0 %v589
        %1539 = vmatpush1.msra.mxu0 %v588
        %1540 = vmatprep.subr.mxu0 %v592
        %1541 = vmatpush1.msra.mxu0 %v591
        %1542 = vmatprep.subr.mxu0 %v595
        %1543 = vmatpush1.msra.mxu0 %v594
        %1544 = vmatprep.subr.mxu0 %v598
        %1545 = vmatpush1.msra.mxu0 %v597
        %1546 = vmatprep.subr.mxu0 %v601
        %1547 = vmatpush1.msra.mxu0 %v600
        %1548 = vmatprep.subr.mxu0 %v604
        %1549 = vmatpush1.msra.mxu0 %v603
        %1550 = vmatprep.subr.mxu0 %v607
        %1551 = vmatpush1.msra.mxu0 %v606
        %1552 = vmatprep.subr.mxu0 %v610
        %1553 = vmatpush1.msra.mxu0 %v609
        %1554 = vmatprep.subr.mxu0 %v613
        %1555 = vmatpush1.msra.mxu0 %v612
        %1556 = vmatprep.subr.mxu0 %v616
        %1557 = vmatpush1.msra.mxu0 %v615
        %1558 = vmatprep.subr.mxu0 0.0
        %1559 = vmatpush1.msra.mxu0 0.0
        %1560 = vmatprep.subr.mxu0 0.0
        %1561 = vmatpush1.msra.mxu0 0.0
        %1562 = vmatprep.subr.mxu0 0.0
        %1563 = vmatpush1.msra.mxu0 0.0
        %1564 = vmatprep.subr.mxu0 0.0
        %1565 = vmatpush1.msra.mxu0 0.0
        %1566 = vmatprep.subr.mxu0 0.0
        %1567 = vmatpush1.msra.mxu0 0.0
        %1568 = vmatprep.subr.mxu0 0.0
        %1569 = vmatpush1.msra.mxu0 0.0
        %1570 = vmatprep.subr.mxu0 0.0
        %1571 = vmatpush1.msra.mxu0 0.0
        %1572 = vmatprep.subr.mxu0 0.0
        %1573 = vmatpush1.msra.mxu0 0.0
        %1574 = vmatprep.subr.mxu0 0.0
        %1575 = vmatpush1.msra.mxu0 0.0
        %1576 = vmatprep.subr.mxu0 0.0
        %1577 = vmatpush1.msra.mxu0 0.0
        %1578 = vmatprep.subr.mxu0 0.0
        %1579 = vmatpush1.msra.mxu0 0.0
        %1580 = vmatprep.subr.mxu0 0.0
        %1581 = vmatpush1.msra.mxu0 0.0
        %1582 = vmatprep.subr.mxu0 0.0
        %1583 = vmatpush1.msra.mxu0 0.0
        %1584 = vmatprep.subr.mxu0 0.0
        %1585 = vmatpush1.msra.mxu0 0.0
        %1586 = vmatprep.subr.mxu0 0.0
        %1587 = vmatpush1.msra.mxu0 0.0
        %1588 = vmatprep.subr.mxu0 0.0
        %1589 = vmatpush1.msra.mxu0 0.0
        %1590 = vmatprep.mubr.f32.mxu0 0.0
        %1591 = vmatmul.mubr.f32.gmra.mrb[0].mxu0 %v1523
        %v1592 = vpop.f32.mrb[0].mxu0
        %v1593 = vadd.f32 %v625, %v1592
        %v1594 = vpop.f32.mrb[0].mxu0
        %v1595 = vadd.f32 %v629, %v1594
        %1596 = vdwg.mxu0
        %1597 = vmatprep.subr.mxu0 0.0
        %1598 = vmatpush1.msra.mxu0 %v572
        %1599 = vmatprep.subr.mxu0 0.0
        %1600 = vmatpush1.msra.mxu0 %v575
        %1601 = vmatprep.subr.mxu0 0.0
        %1602 = vmatpush1.msra.mxu0 %v578
        %1603 = vmatprep.subr.mxu0 0.0
        %1604 = vmatpush1.msra.mxu0 %v581
        %1605 = vmatprep.subr.mxu0 0.0
        %1606 = vmatpush1.msra.mxu0 %v584
        %1607 = vmatprep.subr.mxu0 0.0
        %1608 = vmatpush1.msra.mxu0 %v587
        %1609 = vmatprep.subr.mxu0 0.0
        %1610 = vmatpush1.msra.mxu0 %v590
        %1611 = vmatprep.subr.mxu0 0.0
        %1612 = vmatpush1.msra.mxu0 %v593
        %1613 = vmatprep.subr.mxu0 0.0
        %1614 = vmatpush1.msra.mxu0 %v596
        %1615 = vmatprep.subr.mxu0 0.0
        %1616 = vmatpush1.msra.mxu0 %v599
        %1617 = vmatprep.subr.mxu0 0.0
        %1618 = vmatpush1.msra.mxu0 %v602
        %1619 = vmatprep.subr.mxu0 0.0
        %1620 = vmatpush1.msra.mxu0 %v605
        %1621 = vmatprep.subr.mxu0 0.0
        %1622 = vmatpush1.msra.mxu0 %v608
        %1623 = vmatprep.subr.mxu0 0.0
        %1624 = vmatpush1.msra.mxu0 %v611
        %1625 = vmatprep.subr.mxu0 0.0
        %1626 = vmatpush1.msra.mxu0 %v614
        %1627 = vmatprep.subr.mxu0 0.0
        %1628 = vmatpush1.msra.mxu0 %v617
        %1629 = vmatprep.subr.mxu0 0.0
        %1630 = vmatpush1.msra.mxu0 0.0
        %1631 = vmatprep.subr.mxu0 0.0
        %1632 = vmatpush1.msra.mxu0 0.0
        %1633 = vmatprep.subr.mxu0 0.0
        %1634 = vmatpush1.msra.mxu0 0.0
        %1635 = vmatprep.subr.mxu0 0.0
        %1636 = vmatpush1.msra.mxu0 0.0
        %1637 = vmatprep.subr.mxu0 0.0
        %1638 = vmatpush1.msra.mxu0 0.0
        %1639 = vmatprep.subr.mxu0 0.0
        %1640 = vmatpush1.msra.mxu0 0.0
        %1641 = vmatprep.subr.mxu0 0.0
        %1642 = vmatpush1.msra.mxu0 0.0
        %1643 = vmatprep.subr.mxu0 0.0
        %1644 = vmatpush1.msra.mxu0 0.0
        %1645 = vmatprep.subr.mxu0 0.0
        %1646 = vmatpush1.msra.mxu0 0.0
        %1647 = vmatprep.subr.mxu0 0.0
        %1648 = vmatpush1.msra.mxu0 0.0
        %1649 = vmatprep.subr.mxu0 0.0
        %1650 = vmatpush1.msra.mxu0 0.0
        %1651 = vmatprep.subr.mxu0 0.0
        %1652 = vmatpush1.msra.mxu0 0.0
        %1653 = vmatprep.subr.mxu0 0.0
        %1654 = vmatpush1.msra.mxu0 0.0
        %1655 = vmatprep.subr.mxu0 0.0
        %1656 = vmatpush1.msra.mxu0 0.0
        %1657 = vmatprep.subr.mxu0 0.0
        %1658 = vmatpush1.msra.mxu0 0.0
        %1659 = vmatprep.subr.mxu0 0.0
        %1660 = vmatpush1.msra.mxu0 0.0
        %1661 = vmatprep.mubr.f32.mxu0 0.0
        %1662 = vmatmul.mubr.f32.gmra.mrb[0].mxu0 %v1523
        %v1663 = vpop.f32.mrb[0].mxu0
        %v1664 = vadd.f32 %v633, %v1663
        %v1665 = vpop.f32.mrb[0].mxu0
        %1666 = vdwg.mxu0
        %v1667 = vadd.f32 %v1525, %v1593
        %v1668 = vxor.u32 %v1667, 2147483648
        %v1669 = vmul.f32 %v1668, 1.442695
        %v1670 = vpow.pop %v1669
        %v1671 = vadd.f32 %v1670, 1.0
        %v1672 = vrcp.pop %v1671
        %v1673 = vmul.f32 1.0, %v1672
        %v1675 = vrot.slane %v1525, 2
        %v1677 = vadd.f32 %v1675, %v1595
        %v1678 = vxor.u32 %v1677, 2147483648
        %v1679 = vmul.f32 %v1678, 1.442695
        %v1680 = vpow.pop %v1679
        %v1681 = vadd.f32 %v1680, 1.0
        %v1682 = vrcp.pop %v1681
        %v1683 = vmul.f32 1.0, %v1682
        %v1684 = vmul.f32 %v1673, %v1664
        %v1685 = vrot.slane %v1525, 4
        %v1687 = vadd.f32 %v1685, %v1684
        %v1688 = vtanh.pop %v1687
        %v1689 = vsub.f32 1.0, %v1683
        %v1690 = vmul.f32 %v1689, %v1688
        %v1691 = vmul.f32 %v1683, %v1523
        %v1692 = vadd.f32 %v1690, %v1691
        %s1693 = scalar_lea.vmem %s561, 10
        %v1694 = vld [vmem:[%s1693] sm:$0x3]
        %vm1695 = vcmp.ne.f32.partialorder %v1694, 0.0
        %v1696 = vsel %vm1695, 1, 0
        %1697 = vset.pattern.permute.xlu0 0
        %1698 = vperm.xlu0 %1697, %v1696
        %v1699 = vpop.permute.xlu0 %1698
        %vm1700 = vcmp.eq.s32.totalorder %v1699, 1
        %v1701 = vsel %vm1700, %v1692, %v1523
        %s1702 = scalar_lea.vmem %s463, 36 [#allocation2]
        %v1703 = vld [vmem:[%s1702] sm:$0x3f]
        %1704 = vmatprep.subr.mxu0 %v571
        %1705 = vmatpush1.msra.mxu0 %v570
        %1706 = vmatprep.subr.mxu0 %v574
        %1707 = vmatpush1.msra.mxu0 %v573
        %1708 = vmatprep.subr.mxu0 %v577
        %1709 = vmatpush1.msra.mxu0 %v576
        %1710 = vmatprep.subr.mxu0 %v580
        %1711 = vmatpush1.msra.mxu0 %v579
        %1712 = vmatprep.subr.mxu0 %v583
        %1713 = vmatpush1.msra.mxu0 %v582
        %1714 = vmatprep.subr.mxu0 %v586
        %1715 = vmatpush1.msra.mxu0 %v585
        %1716 = vmatprep.subr.mxu0 %v589
        %1717 = vmatpush1.msra.mxu0 %v588
        %1718 = vmatprep.subr.mxu0 %v592
        %1719 = vmatpush1.msra.mxu0 %v591
        %1720 = vmatprep.subr.mxu0 %v595
        %1721 = vmatpush1.msra.mxu0 %v594
        %1722 = vmatprep.subr.mxu0 %v598
        %1723 = vmatpush1.msra.mxu0 %v597
        %1724 = vmatprep.subr.mxu0 %v601
        %1725 = vmatpush1.msra.mxu0 %v600
        %1726 = vmatprep.subr.mxu0 %v604
        %1727 = vmatpush1.msra.mxu0 %v603
        %1728 = vmatprep.subr.mxu0 %v607
        %1729 = vmatpush1.msra.mxu0 %v606
        %1730 = vmatprep.subr.mxu0 %v610
        %1731 = vmatpush1.msra.mxu0 %v609
        %1732 = vmatprep.subr.mxu0 %v613
        %1733 = vmatpush1.msra.mxu0 %v612
        %1734 = vmatprep.subr.mxu0 %v616
        %1735 = vmatpush1.msra.mxu0 %v615
        %1736 = vmatprep.subr.mxu0 0.0
        %1737 = vmatpush1.msra.mxu0 0.0
        %1738 = vmatprep.subr.mxu0 0.0
        %1739 = vmatpush1.msra.mxu0 0.0
        %1740 = vmatprep.subr.mxu0 0.0
        %1741 = vmatpush1.msra.mxu0 0.0
        %1742 = vmatprep.subr.mxu0 0.0
        %1743 = vmatpush1.msra.mxu0 0.0
        %1744 = vmatprep.subr.mxu0 0.0
        %1745 = vmatpush1.msra.mxu0 0.0
        %1746 = vmatprep.subr.mxu0 0.0
        %1747 = vmatpush1.msra.mxu0 0.0
        %1748 = vmatprep.subr.mxu0 0.0
        %1749 = vmatpush1.msra.mxu0 0.0
        %1750 = vmatprep.subr.mxu0 0.0
        %1751 = vmatpush1.msra.mxu0 0.0
        %1752 = vmatprep.subr.mxu0 0.0
        %1753 = vmatpush1.msra.mxu0 0.0
        %1754 = vmatprep.subr.mxu0 0.0
        %1755 = vmatpush1.msra.mxu0 0.0
        %1756 = vmatprep.subr.mxu0 0.0
        %1757 = vmatpush1.msra.mxu0 0.0
        %1758 = vmatprep.subr.mxu0 0.0
        %1759 = vmatpush1.msra.mxu0 0.0
        %1760 = vmatprep.subr.mxu0 0.0
        %1761 = vmatpush1.msra.mxu0 0.0
        %1762 = vmatprep.subr.mxu0 0.0
        %1763 = vmatpush1.msra.mxu0 0.0
        %1764 = vmatprep.subr.mxu0 0.0
        %1765 = vmatpush1.msra.mxu0 0.0
        %1766 = vmatprep.subr.mxu0 0.0
        %1767 = vmatpush1.msra.mxu0 0.0
        %1768 = vmatprep.mubr.f32.mxu0 0.0
        %1769 = vmatmul.mubr.f32.gmra.mrb[0].mxu0 %v1701
        %v1770 = vpop.f32.mrb[0].mxu0
        %v1771 = vadd.f32 %v625, %v1770
        %v1772 = vpop.f32.mrb[0].mxu0
        %v1773 = vadd.f32 %v629, %v1772
        %1774 = vdwg.mxu0
        %1775 = vmatprep.subr.mxu0 0.0
        %1776 = vmatpush1.msra.mxu0 %v572
        %1777 = vmatprep.subr.mxu0 0.0
        %1778 = vmatpush1.msra.mxu0 %v575
        %1779 = vmatprep.subr.mxu0 0.0
        %1780 = vmatpush1.msra.mxu0 %v578
        %1781 = vmatprep.subr.mxu0 0.0
        %1782 = vmatpush1.msra.mxu0 %v581
        %1783 = vmatprep.subr.mxu0 0.0
        %1784 = vmatpush1.msra.mxu0 %v584
        %1785 = vmatprep.subr.mxu0 0.0
        %1786 = vmatpush1.msra.mxu0 %v587
        %1787 = vmatprep.subr.mxu0 0.0
        %1788 = vmatpush1.msra.mxu0 %v590
        %1789 = vmatprep.subr.mxu0 0.0
        %1790 = vmatpush1.msra.mxu0 %v593
        %1791 = vmatprep.subr.mxu0 0.0
        %1792 = vmatpush1.msra.mxu0 %v596
        %1793 = vmatprep.subr.mxu0 0.0
        %1794 = vmatpush1.msra.mxu0 %v599
        %1795 = vmatprep.subr.mxu0 0.0
        %1796 = vmatpush1.msra.mxu0 %v602
        %1797 = vmatprep.subr.mxu0 0.0
        %1798 = vmatpush1.msra.mxu0 %v605
        %1799 = vmatprep.subr.mxu0 0.0
        %1800 = vmatpush1.msra.mxu0 %v608
        %1801 = vmatprep.subr.mxu0 0.0
        %1802 = vmatpush1.msra.mxu0 %v611
        %1803 = vmatprep.subr.mxu0 0.0
        %1804 = vmatpush1.msra.mxu0 %v614
        %1805 = vmatprep.subr.mxu0 0.0
        %1806 = vmatpush1.msra.mxu0 %v617
        %1807 = vmatprep.subr.mxu0 0.0
        %1808 = vmatpush1.msra.mxu0 0.0
        %1809 = vmatprep.subr.mxu0 0.0
        %1810 = vmatpush1.msra.mxu0 0.0
        %1811 = vmatprep.subr.mxu0 0.0
        %1812 = vmatpush1.msra.mxu0 0.0
        %1813 = vmatprep.subr.mxu0 0.0
        %1814 = vmatpush1.msra.mxu0 0.0
        %1815 = vmatprep.subr.mxu0 0.0
        %1816 = vmatpush1.msra.mxu0 0.0
        %1817 = vmatprep.subr.mxu0 0.0
        %1818 = vmatpush1.msra.mxu0 0.0
        %1819 = vmatprep.subr.mxu0 0.0
        %1820 = vmatpush1.msra.mxu0 0.0
        %1821 = vmatprep.subr.mxu0 0.0
        %1822 = vmatpush1.msra.mxu0 0.0
        %1823 = vmatprep.subr.mxu0 0.0
        %1824 = vmatpush1.msra.mxu0 0.0
        %1825 = vmatprep.subr.mxu0 0.0
        %1826 = vmatpush1.msra.mxu0 0.0
        %1827 = vmatprep.subr.mxu0 0.0
        %1828 = vmatpush1.msra.mxu0 0.0
        %1829 = vmatprep.subr.mxu0 0.0
        %1830 = vmatpush1.msra.mxu0 0.0
        %1831 = vmatprep.subr.mxu0 0.0
        %1832 = vmatpush1.msra.mxu0 0.0
        %1833 = vmatprep.subr.mxu0 0.0
        %1834 = vmatpush1.msra.mxu0 0.0
        %1835 = vmatprep.subr.mxu0 0.0
        %1836 = vmatpush1.msra.mxu0 0.0
        %1837 = vmatprep.subr.mxu0 0.0
        %1838 = vmatpush1.msra.mxu0 0.0
        %1839 = vmatprep.mubr.f32.mxu0 0.0
        %1840 = vmatmul.mubr.f32.gmra.mrb[0].mxu0 %v1701
        %v1841 = vpop.f32.mrb[0].mxu0
        %v1842 = vadd.f32 %v633, %v1841
        %v1843 = vpop.f32.mrb[0].mxu0
        %1844 = vdwg.mxu0
        %v1845 = vadd.f32 %v1703, %v1771
        %v1846 = vxor.u32 %v1845, 2147483648
        %v1847 = vmul.f32 %v1846, 1.442695
        %v1848 = vpow.pop %v1847
        %v1849 = vadd.f32 %v1848, 1.0
        %v1850 = vrcp.pop %v1849
        %v1851 = vmul.f32 1.0, %v1850
        %v1853 = vrot.slane %v1703, 2
        %v1855 = vadd.f32 %v1853, %v1773
        %v1856 = vxor.u32 %v1855, 2147483648
        %v1857 = vmul.f32 %v1856, 1.442695
        %v1858 = vpow.pop %v1857
        %v1859 = vadd.f32 %v1858, 1.0
        %v1860 = vrcp.pop %v1859
        %v1861 = vmul.f32 1.0, %v1860
        %v1862 = vmul.f32 %v1851, %v1842
        %v1863 = vrot.slane %v1703, 4
        %v1865 = vadd.f32 %v1863, %v1862
        %v1866 = vtanh.pop %v1865
        %v1867 = vsub.f32 1.0, %v1861
        %v1868 = vmul.f32 %v1867, %v1866
        %v1869 = vmul.f32 %v1861, %v1701
        %v1870 = vadd.f32 %v1868, %v1869
        %s1871 = scalar_lea.vmem %s561, 12
        %v1872 = vld [vmem:[%s1871] sm:$0x3]
        %vm1873 = vcmp.ne.f32.partialorder %v1872, 0.0
        %v1874 = vsel %vm1873, 1, 0
        %1875 = vset.pattern.permute.xlu0 0
        %1876 = vperm.xlu0 %1875, %v1874
        %v1877 = vpop.permute.xlu0 %1876
        %vm1878 = vcmp.eq.s32.totalorder %v1877, 1
        %v1879 = vsel %vm1878, %v1870, %v1701
        %s1880 = scalar_lea.vmem %s463, 42 [#allocation2]
        %v1881 = vld [vmem:[%s1880] sm:$0x3f]
        %1882 = vmatprep.subr.mxu0 %v571
        %1883 = vmatpush1.msra.mxu0 %v570
        %1884 = vmatprep.subr.mxu0 %v574
        %1885 = vmatpush1.msra.mxu0 %v573
        %1886 = vmatprep.subr.mxu0 %v577
        %1887 = vmatpush1.msra.mxu0 %v576
        %1888 = vmatprep.subr.mxu0 %v580
        %1889 = vmatpush1.msra.mxu0 %v579
        %1890 = vmatprep.subr.mxu0 %v583
        %1891 = vmatpush1.msra.mxu0 %v582
        %1892 = vmatprep.subr.mxu0 %v586
        %1893 = vmatpush1.msra.mxu0 %v585
        %1894 = vmatprep.subr.mxu0 %v589
        %1895 = vmatpush1.msra.mxu0 %v588
        %1896 = vmatprep.subr.mxu0 %v592
        %1897 = vmatpush1.msra.mxu0 %v591
        %1898 = vmatprep.subr.mxu0 %v595
        %1899 = vmatpush1.msra.mxu0 %v594
        %1900 = vmatprep.subr.mxu0 %v598
        %1901 = vmatpush1.msra.mxu0 %v597
        %1902 = vmatprep.subr.mxu0 %v601
        %1903 = vmatpush1.msra.mxu0 %v600
        %1904 = vmatprep.subr.mxu0 %v604
        %1905 = vmatpush1.msra.mxu0 %v603
        %1906 = vmatprep.subr.mxu0 %v607
        %1907 = vmatpush1.msra.mxu0 %v606
        %1908 = vmatprep.subr.mxu0 %v610
        %1909 = vmatpush1.msra.mxu0 %v609
        %1910 = vmatprep.subr.mxu0 %v613
        %1911 = vmatpush1.msra.mxu0 %v612
        %1912 = vmatprep.subr.mxu0 %v616
        %1913 = vmatpush1.msra.mxu0 %v615
        %1914 = vmatprep.subr.mxu0 0.0
        %1915 = vmatpush1.msra.mxu0 0.0
        %1916 = vmatprep.subr.mxu0 0.0
        %1917 = vmatpush1.msra.mxu0 0.0
        %1918 = vmatprep.subr.mxu0 0.0
        %1919 = vmatpush1.msra.mxu0 0.0
        %1920 = vmatprep.subr.mxu0 0.0
        %1921 = vmatpush1.msra.mxu0 0.0
        %1922 = vmatprep.subr.mxu0 0.0
        %1923 = vmatpush1.msra.mxu0 0.0
        %1924 = vmatprep.subr.mxu0 0.0
        %1925 = vmatpush1.msra.mxu0 0.0
        %1926 = vmatprep.subr.mxu0 0.0
        %1927 = vmatpush1.msra.mxu0 0.0
        %1928 = vmatprep.subr.mxu0 0.0
        %1929 = vmatpush1.msra.mxu0 0.0
        %1930 = vmatprep.subr.mxu0 0.0
        %1931 = vmatpush1.msra.mxu0 0.0
        %1932 = vmatprep.subr.mxu0 0.0
        %1933 = vmatpush1.msra.mxu0 0.0
        %1934 = vmatprep.subr.mxu0 0.0
        %1935 = vmatpush1.msra.mxu0 0.0
        %1936 = vmatprep.subr.mxu0 0.0
        %1937 = vmatpush1.msra.mxu0 0.0
        %1938 = vmatprep.subr.mxu0 0.0
        %1939 = vmatpush1.msra.mxu0 0.0
        %1940 = vmatprep.subr.mxu0 0.0
        %1941 = vmatpush1.msra.mxu0 0.0
        %1942 = vmatprep.subr.mxu0 0.0
        %1943 = vmatpush1.msra.mxu0 0.0
        %1944 = vmatprep.subr.mxu0 0.0
        %1945 = vmatpush1.msra.mxu0 0.0
        %1946 = vmatprep.mubr.f32.mxu0 0.0
        %1947 = vmatmul.mubr.f32.gmra.mrb[0].mxu0 %v1879
        %v1948 = vpop.f32.mrb[0].mxu0
        %v1949 = vadd.f32 %v625, %v1948
        %v1950 = vpop.f32.mrb[0].mxu0
        %v1951 = vadd.f32 %v629, %v1950
        %1952 = vdwg.mxu0
        %1953 = vmatprep.subr.mxu0 0.0
        %1954 = vmatpush1.msra.mxu0 %v572
        %1955 = vmatprep.subr.mxu0 0.0
        %1956 = vmatpush1.msra.mxu0 %v575
        %1957 = vmatprep.subr.mxu0 0.0
        %1958 = vmatpush1.msra.mxu0 %v578
        %1959 = vmatprep.subr.mxu0 0.0
        %1960 = vmatpush1.msra.mxu0 %v581
        %1961 = vmatprep.subr.mxu0 0.0
        %1962 = vmatpush1.msra.mxu0 %v584
        %1963 = vmatprep.subr.mxu0 0.0
        %1964 = vmatpush1.msra.mxu0 %v587
        %1965 = vmatprep.subr.mxu0 0.0
        %1966 = vmatpush1.msra.mxu0 %v590
        %1967 = vmatprep.subr.mxu0 0.0
        %1968 = vmatpush1.msra.mxu0 %v593
        %1969 = vmatprep.subr.mxu0 0.0
        %1970 = vmatpush1.msra.mxu0 %v596
        %1971 = vmatprep.subr.mxu0 0.0
        %1972 = vmatpush1.msra.mxu0 %v599
        %1973 = vmatprep.subr.mxu0 0.0
        %1974 = vmatpush1.msra.mxu0 %v602
        %1975 = vmatprep.subr.mxu0 0.0
        %1976 = vmatpush1.msra.mxu0 %v605
        %1977 = vmatprep.subr.mxu0 0.0
        %1978 = vmatpush1.msra.mxu0 %v608
        %1979 = vmatprep.subr.mxu0 0.0
        %1980 = vmatpush1.msra.mxu0 %v611
        %1981 = vmatprep.subr.mxu0 0.0
        %1982 = vmatpush1.msra.mxu0 %v614
        %1983 = vmatprep.subr.mxu0 0.0
        %1984 = vmatpush1.msra.mxu0 %v617
        %1985 = vmatprep.subr.mxu0 0.0
        %1986 = vmatpush1.msra.mxu0 0.0
        %1987 = vmatprep.subr.mxu0 0.0
        %1988 = vmatpush1.msra.mxu0 0.0
        %1989 = vmatprep.subr.mxu0 0.0
        %1990 = vmatpush1.msra.mxu0 0.0
        %1991 = vmatprep.subr.mxu0 0.0
        %1992 = vmatpush1.msra.mxu0 0.0
        %1993 = vmatprep.subr.mxu0 0.0
        %1994 = vmatpush1.msra.mxu0 0.0
        %1995 = vmatprep.subr.mxu0 0.0
        %1996 = vmatpush1.msra.mxu0 0.0
        %1997 = vmatprep.subr.mxu0 0.0
        %1998 = vmatpush1.msra.mxu0 0.0
        %1999 = vmatprep.subr.mxu0 0.0
        %2000 = vmatpush1.msra.mxu0 0.0
        %2001 = vmatprep.subr.mxu0 0.0
        %2002 = vmatpush1.msra.mxu0 0.0
        %2003 = vmatprep.subr.mxu0 0.0
        %2004 = vmatpush1.msra.mxu0 0.0
        %2005 = vmatprep.subr.mxu0 0.0
        %2006 = vmatpush1.msra.mxu0 0.0
        %2007 = vmatprep.subr.mxu0 0.0
        %2008 = vmatpush1.msra.mxu0 0.0
        %2009 = vmatprep.subr.mxu0 0.0
        %2010 = vmatpush1.msra.mxu0 0.0
        %2011 = vmatprep.subr.mxu0 0.0
        %2012 = vmatpush1.msra.mxu0 0.0
        %2013 = vmatprep.subr.mxu0 0.0
        %2014 = vmatpush1.msra.mxu0 0.0
        %2015 = vmatprep.subr.mxu0 0.0
        %2016 = vmatpush1.msra.mxu0 0.0
        %2017 = vmatprep.mubr.f32.mxu0 0.0
        %2018 = vmatmul.mubr.f32.gmra.mrb[0].mxu0 %v1879
        %v2019 = vpop.f32.mrb[0].mxu0
        %v2020 = vadd.f32 %v633, %v2019
        %v2021 = vpop.f32.mrb[0].mxu0
        %2022 = vdwg.mxu0
        %v2023 = vadd.f32 %v1881, %v1949
        %v2024 = vxor.u32 %v2023, 2147483648
        %v2025 = vmul.f32 %v2024, 1.442695
        %v2026 = vpow.pop %v2025
        %v2027 = vadd.f32 %v2026, 1.0
        %v2028 = vrcp.pop %v2027
        %v2029 = vmul.f32 1.0, %v2028
        %v2031 = vrot.slane %v1881, 2
        %v2033 = vadd.f32 %v2031, %v1951
        %v2034 = vxor.u32 %v2033, 2147483648
        %v2035 = vmul.f32 %v2034, 1.442695
        %v2036 = vpow.pop %v2035
        %v2037 = vadd.f32 %v2036, 1.0
        %v2038 = vrcp.pop %v2037
        %v2039 = vmul.f32 1.0, %v2038
        %v2040 = vmul.f32 %v2029, %v2020
        %v2041 = vrot.slane %v1881, 4
        %v2043 = vadd.f32 %v2041, %v2040
        %v2044 = vtanh.pop %v2043
        %v2045 = vsub.f32 1.0, %v2039
        %v2046 = vmul.f32 %v2045, %v2044
        %v2047 = vmul.f32 %v2039, %v1879
        %v2048 = vadd.f32 %v2046, %v2047
        %s2049 = scalar_lea.vmem %s561, 14
        %v2050 = vld [vmem:[%s2049] sm:$0x3]
        %vm2051 = vcmp.ne.f32.partialorder %v2050, 0.0
        %v2052 = vsel %vm2051, 1, 0
        %2053 = vset.pattern.permute.xlu0 0
        %2054 = vperm.xlu0 %2053, %v2052
        %v2055 = vpop.permute.xlu0 %2054
        %vm2056 = vcmp.eq.s32.totalorder %v2055, 1
        %v2057 = vsel %vm2056, %v2048, %v1879
        %2058 = vst [vmem:[%s556] sm:$0x3] %v2057
        %v2059 = vld [vmem:[%s481] sm:$0xff]
        %v2060 = vld [vmem:[%s481 + $0x8] sm:$0xff]
        %v2061 = vld [vmem:[%s481 + $0x10] sm:$0xff]
        %v2062 = vld [vmem:[%s481 + $0x18] sm:$0xff]
        %v2063 = vld [vmem:[%s481 + $0x20] sm:$0xff]
        %v2064 = vld [vmem:[%s481 + $0x28] sm:$0xff]
        %v2065 = vld [vmem:[%s481 + $0x30] sm:$0xff]
        %v2066 = vld [vmem:[%s481 + $0x38] sm:$0xff]
        %v2067 = vld [vmem:[%s481 + $0x40] sm:$0xff]
        %v2068 = vld [vmem:[%s481 + $0x48] sm:$0xff]
        %v2069 = vld [vmem:[%s481 + $0x50] sm:$0xff]
        %v2070 = vld [vmem:[%s481 + $0x58] sm:$0xff]
        %v2071 = vld [vmem:[%s481 + $0x60] sm:$0xff]
        %v2072 = vld [vmem:[%s481 + $0x68] sm:$0xff]
        %v2073 = vld [vmem:[%s481 + $0x70] sm:$0xff]
        %v2074 = vld [vmem:[%s481 + $0x78] sm:$0xff]
        %2075 = vmatprep.subr.mxu0 0.0
        %2076 = vmatpush1.msra.mxu0 %v2059
        %2077 = vmatprep.subr.mxu0 0.0
        %2078 = vmatpush1.msra.mxu0 %v2060
        %2079 = vmatprep.subr.mxu0 0.0
        %2080 = vmatpush1.msra.mxu0 %v2061
        %2081 = vmatprep.subr.mxu0 0.0
        %2082 = vmatpush1.msra.mxu0 %v2062
        %2083 = vmatprep.subr.mxu0 0.0
        %2084 = vmatpush1.msra.mxu0 %v2063
        %2085 = vmatprep.subr.mxu0 0.0
        %2086 = vmatpush1.msra.mxu0 %v2064
        %2087 = vmatprep.subr.mxu0 0.0
        %2088 = vmatpush1.msra.mxu0 %v2065
        %2089 = vmatprep.subr.mxu0 0.0
        %2090 = vmatpush1.msra.mxu0 %v2066
        %2091 = vmatprep.subr.mxu0 0.0
        %2092 = vmatpush1.msra.mxu0 %v2067
        %2093 = vmatprep.subr.mxu0 0.0
        %2094 = vmatpush1.msra.mxu0 %v2068
        %2095 = vmatprep.subr.mxu0 0.0
        %2096 = vmatpush1.msra.mxu0 %v2069
        %2097 = vmatprep.subr.mxu0 0.0
        %2098 = vmatpush1.msra.mxu0 %v2070
        %2099 = vmatprep.subr.mxu0 0.0
        %2100 = vmatpush1.msra.mxu0 %v2071
        %2101 = vmatprep.subr.mxu0 0.0
        %2102 = vmatpush1.msra.mxu0 %v2072
        %2103 = vmatprep.subr.mxu0 0.0
        %2104 = vmatpush1.msra.mxu0 %v2073
        %2105 = vmatprep.subr.mxu0 0.0
        %2106 = vmatpush1.msra.mxu0 %v2074
        %2107 = vmatprep.subr.mxu0 0.0
        %2108 = vmatpush1.msra.mxu0 0.0
        %2109 = vmatprep.subr.mxu0 0.0
        %2110 = vmatpush1.msra.mxu0 0.0
        %2111 = vmatprep.subr.mxu0 0.0
        %2112 = vmatpush1.msra.mxu0 0.0
        %2113 = vmatprep.subr.mxu0 0.0
        %2114 = vmatpush1.msra.mxu0 0.0
        %2115 = vmatprep.subr.mxu0 0.0
        %2116 = vmatpush1.msra.mxu0 0.0
        %2117 = vmatprep.subr.mxu0 0.0
        %2118 = vmatpush1.msra.mxu0 0.0
        %2119 = vmatprep.subr.mxu0 0.0
        %2120 = vmatpush1.msra.mxu0 0.0
        %2121 = vmatprep.subr.mxu0 0.0
        %2122 = vmatpush1.msra.mxu0 0.0
        %2123 = vmatprep.subr.mxu0 0.0
        %2124 = vmatpush1.msra.mxu0 0.0
        %2125 = vmatprep.subr.mxu0 0.0
        %2126 = vmatpush1.msra.mxu0 0.0
        %2127 = vmatprep.subr.mxu0 0.0
        %2128 = vmatpush1.msra.mxu0 0.0
        %2129 = vmatprep.subr.mxu0 0.0
        %2130 = vmatpush1.msra.mxu0 0.0
        %2131 = vmatprep.subr.mxu0 0.0
        %2132 = vmatpush1.msra.mxu0 0.0
        %2133 = vmatprep.subr.mxu0 0.0
        %2134 = vmatpush1.msra.mxu0 0.0
        %2135 = vmatprep.subr.mxu0 0.0
        %2136 = vmatpush1.msra.mxu0 0.0
        %2137 = vmatprep.subr.mxu0 0.0
        %2138 = vmatpush1.msra.mxu0 0.0
        %2139 = vmatprep.mubr.f32.mxu0 0.0
        %2140 = vmatmul.mubr.f32.gmra.mrb[0].mxu0 %v2057
        %v2141 = vpop.f32.mrb[0].mxu0
        %v2142 = vadd.f32 0.0, %v2141
        %v2143 = vpop.f32.mrb[0].mxu0
        %2144 = vdwg.mxu0
        %v2145 = vld [vmem:[%s490] sm:$0xff]
        %v2146 = vld [vmem:[%s490 + $0x8] sm:$0xff]
        %v2147 = vld [vmem:[%s490 + $0x10] sm:$0xff]
        %v2148 = vld [vmem:[%s490 + $0x18] sm:$0xff]
        %v2149 = vld [vmem:[%s490 + $0x20] sm:$0xff]
        %v2150 = vld [vmem:[%s490 + $0x28] sm:$0xff]
        %v2151 = vld [vmem:[%s490 + $0x30] sm:$0xff]
        %v2152 = vld [vmem:[%s490 + $0x38] sm:$0xff]
        %v2153 = vld [vmem:[%s490 + $0x40] sm:$0xff]
        %v2154 = vld [vmem:[%s490 + $0x48] sm:$0xff]
        %v2155 = vld [vmem:[%s490 + $0x50] sm:$0xff]
        %v2156 = vld [vmem:[%s490 + $0x58] sm:$0xff]
        %v2157 = vld [vmem:[%s490 + $0x60] sm:$0xff]
        %v2158 = vld [vmem:[%s490 + $0x68] sm:$0xff]
        %v2159 = vld [vmem:[%s490 + $0x70] sm:$0xff]
        %v2160 = vld [vmem:[%s490 + $0x78] sm:$0xff]
        %2161 = vmatprep.subr.mxu0 0.0
        %2162 = vmatpush1.msra.mxu0 %v2145
        %2163 = vmatprep.subr.mxu0 0.0
        %2164 = vmatpush1.msra.mxu0 %v2146
        %2165 = vmatprep.subr.mxu0 0.0
        %2166 = vmatpush1.msra.mxu0 %v2147
        %2167 = vmatprep.subr.mxu0 0.0
        %2168 = vmatpush1.msra.mxu0 %v2148
        %2169 = vmatprep.subr.mxu0 0.0
        %2170 = vmatpush1.msra.mxu0 %v2149
        %2171 = vmatprep.subr.mxu0 0.0
        %2172 = vmatpush1.msra.mxu0 %v2150
        %2173 = vmatprep.subr.mxu0 0.0
        %2174 = vmatpush1.msra.mxu0 %v2151
        %2175 = vmatprep.subr.mxu0 0.0
        %2176 = vmatpush1.msra.mxu0 %v2152
        %2177 = vmatprep.subr.mxu0 0.0
        %2178 = vmatpush1.msra.mxu0 %v2153
        %2179 = vmatprep.subr.mxu0 0.0
        %2180 = vmatpush1.msra.mxu0 %v2154
        %2181 = vmatprep.subr.mxu0 0.0
        %2182 = vmatpush1.msra.mxu0 %v2155
        %2183 = vmatprep.subr.mxu0 0.0
        %2184 = vmatpush1.msra.mxu0 %v2156
        %2185 = vmatprep.subr.mxu0 0.0
        %2186 = vmatpush1.msra.mxu0 %v2157
        %2187 = vmatprep.subr.mxu0 0.0
        %2188 = vmatpush1.msra.mxu0 %v2158
        %2189 = vmatprep.subr.mxu0 0.0
        %2190 = vmatpush1.msra.mxu0 %v2159
        %2191 = vmatprep.subr.mxu0 0.0
        %2192 = vmatpush1.msra.mxu0 %v2160
        %2193 = vmatprep.subr.mxu0 0.0
        %2194 = vmatpush1.msra.mxu0 0.0
        %2195 = vmatprep.subr.mxu0 0.0
        %2196 = vmatpush1.msra.mxu0 0.0
        %2197 = vmatprep.subr.mxu0 0.0
        %2198 = vmatpush1.msra.mxu0 0.0
        %2199 = vmatprep.subr.mxu0 0.0
        %2200 = vmatpush1.msra.mxu0 0.0
        %2201 = vmatprep.subr.mxu0 0.0
        %2202 = vmatpush1.msra.mxu0 0.0
        %2203 = vmatprep.subr.mxu0 0.0
        %2204 = vmatpush1.msra.mxu0 0.0
        %2205 = vmatprep.subr.mxu0 0.0
        %2206 = vmatpush1.msra.mxu0 0.0
        %2207 = vmatprep.subr.mxu0 0.0
        %2208 = vmatpush1.msra.mxu0 0.0
        %2209 = vmatprep.subr.mxu0 0.0
        %2210 = vmatpush1.msra.mxu0 0.0
        %2211 = vmatprep.subr.mxu0 0.0
        %2212 = vmatpush1.msra.mxu0 0.0
        %2213 = vmatprep.subr.mxu0 0.0
        %2214 = vmatpush1.msra.mxu0 0.0
        %2215 = vmatprep.subr.mxu0 0.0
        %2216 = vmatpush1.msra.mxu0 0.0
        %2217 = vmatprep.subr.mxu0 0.0
        %2218 = vmatpush1.msra.mxu0 0.0
        %2219 = vmatprep.subr.mxu0 0.0
        %2220 = vmatpush1.msra.mxu0 0.0
        %2221 = vmatprep.subr.mxu0 0.0
        %2222 = vmatpush1.msra.mxu0 0.0
        %2223 = vmatprep.subr.mxu0 0.0
        %2224 = vmatpush1.msra.mxu0 0.0
        %2225 = vmatprep.mubr.f32.mxu0 0.0
        %2226 = vmatmul.mubr.f32.gmra.mrb[0].mxu0 %v2057
        %v2227 = vpop.f32.mrb[0].mxu0
        %v2228 = vadd.f32 0.0, %v2227
        %v2229 = vpop.f32.mrb[0].mxu0
        %2230 = vdwg.mxu0
        %p2231 = scmp.eq.s32.totalorder %s34, 0
        // Predicated region
        $region73: #{tpu_custom_call.1} parent=55 // pred_check
          %p2232 = pneg %p2231
        $region74: #{tpu_custom_call.1} parent=55 // pred_check_branch
          %2234 = sbr.rel (%p2232) target = $region76
        $region75: #{tpu_custom_call.1} parent=55 // pred_region
          %2235 = vst [vmem:[#allocation10] sm:$0x3] 0.0
          %2236 = vst [vmem:[#allocation11] sm:$0x3] 0.0
        $region76: #{tpu_custom_call.1} parent=55 // pred_fallthru
          _
        %v2237 = vld [vmem:[#allocation10] sm:$0x3]
        %v2238 = vadd.f32 %v2237, %v2142
        %2239 = vst [vmem:[#allocation10] sm:$0x3] %v2238
        %v2240 = vld [vmem:[#allocation11] sm:$0x3]
        %v2241 = vadd.f32 %v2240, %v2228
        %2242 = vst [vmem:[#allocation11] sm:$0x3] %v2241
        %p2243 = scmp.eq.s32.totalorder %s34, 3
        // Predicated region
        $region77: #{tpu_custom_call.1} parent=55 // pred_check
          %p2244 = pneg %p2243
        $region78: #{tpu_custom_call.1} parent=55 // pred_check_branch
          %2246 = sbr.rel (%p2244) target = $region80
        $region79: #{tpu_custom_call.1} parent=55 // pred_region
          %v2247 = vld [vmem:[#allocation10] sm:$0x3]
          %v2248 = vld [vmem:[%s7] sm:$0x1]
          %v2250 = vlaneseq
          %v2251 = vshrl.u32 %v2250, 7
          %v2252 = vsub.s32 0, %v2251
          %v2253 = vrot.slane %v2248, %v2252
          %v2255 = vadd.f32 %v2247, %v2253
          %v2256 = vmax.f32 %v2255, 0.0
          %2257 = vst [vmem:[#allocation10] sm:$0x3] %v2256
          %v2258 = vld [vmem:[#allocation11] sm:$0x3]
          %v2259 = vld [vmem:[%s8] sm:$0x1]
          %v2261 = vlaneseq
          %v2262 = vshrl.u32 %v2261, 7
          %v2263 = vsub.s32 0, %v2262
          %v2264 = vrot.slane %v2259, %v2263
          %v2266 = vadd.f32 %v2258, %v2264
          %v2267 = vmax.f32 %v2266, 0.0
          %2268 = vst [vmem:[#allocation11] sm:$0x3] %v2267
        $region80: #{tpu_custom_call.1} parent=55 // pred_fallthru
          _
        %s2269 = sand.u32 %s34, 1
        %s2270 = scalar_lea.sflag [#allocation4], %s2269
        %s2271 = sand.u32 %s308, 1
        %s2272 = smul.addr %s2271, 2
        %s2273 = scalar_lea.vmem [#allocation13], %s2272
        // Predicated region
        $region81: #{tpu_custom_call.1} parent=55 // pred_check
          %p2274 = pneg %p271
        $region82: #{tpu_custom_call.1} parent=55 // pred_check_branch
          %2276 = sbr.rel (%p2274) target = $region84
        $region83: #{tpu_custom_call.1} parent=55 // pred_region
          %s2278 = ssub.s32 32, 32
          %2279 = vsyncadd [#allocation4], %s2278
          %s2281 = sshll.u32 [#allocation10], 4
          %s2282 = int_to_ptr.vmem [resolvable:$true] %s2281
          %2284 = dma.vmem_to_hbm [thread:$0]  %s2282, 32, %s9, [#allocation4]
        $region84: #{tpu_custom_call.1} parent=55 // pred_fallthru
          _
        // Predicated region
        $region85: #{tpu_custom_call.1} parent=55 // pred_check
          %p2285 = pneg %p292
        $region86: #{tpu_custom_call.1} parent=55 // pred_check_branch
          %2287 = sbr.rel (%p2285) target = $region88
        $region87: #{tpu_custom_call.1} parent=55 // pred_region
          %s2289 = ssub.s32 32, 32
          %2290 = vsyncadd [#allocation12], %s2289
          %s2292 = sshll.u32 [#allocation11], 4
          %s2293 = int_to_ptr.vmem [resolvable:$true] %s2292
          %2295 = dma.vmem_to_hbm [thread:$0]  %s2293, 32, %s10, [#allocation12]
        $region88: #{tpu_custom_call.1} parent=55 // pred_fallthru
          _
        // Predicated region
        $region89: #{tpu_custom_call.1} parent=55 // pred_check
          %p2296 = pneg %p318
        $region90: #{tpu_custom_call.1} parent=55 // pred_check_branch
          %2298 = sbr.rel (%p2296) target = $region92
        $region91: #{tpu_custom_call.1} parent=55 // pred_region
          %s2300 = ssub.s32 32, 32
          %2301 = vsyncadd %s2270, %s2300
          %s2302 = smul.addr %s34, 32
          %s2303 = scalar_lea.hbm %s11, %s2302
          %s2305 = sshll.u32 %s2273, 4
          %s2306 = int_to_ptr.vmem [resolvable:$true] %s2305
          %2308 = dma.vmem_to_hbm [thread:$0]  %s2306, 32, %s2303, %s2270
        $region92: #{tpu_custom_call.1} parent=55 // pred_fallthru
          _
        // Predicated region
        $region93: #{tpu_custom_call.1} parent=55 // pred_check
          %p2309 = pneg %p271
        $region94: #{tpu_custom_call.1} parent=55 // pred_check_branch
          %2311 = sbr.rel (%p2309) target = $region96
        $region95: #{tpu_custom_call.1} parent=55 // pred_region
          %2312 = dma.done [#allocation4], 32
        $region96: #{tpu_custom_call.1} parent=55 // pred_fallthru
          _
        // Predicated region
        $region97: #{tpu_custom_call.1} parent=55 // pred_check
          %p2313 = pneg %p292
        $region98: #{tpu_custom_call.1} parent=55 // pred_check_branch
          %2315 = sbr.rel (%p2313) target = $region100
        $region99: #{tpu_custom_call.1} parent=55 // pred_region
          %2316 = dma.done [#allocation12], 32
        $region100: #{tpu_custom_call.1} parent=55 // pred_fallthru
          _
      $region56: #{tpu_custom_call.1} parent=5 // pred_fallthru
        _
      %p2317 = scmp.le.s32.totalorder 2, %s29
      // Predicated region
      $region101: #{tpu_custom_call.1} parent=5 // pred_check
        %p2318 = pneg %p2317
      $region102: #{tpu_custom_call.1} parent=5 // pred_check_branch
        %2320 = sbr.rel (%p2318) target = $region104
      $region103: #{tpu_custom_call.1} parent=5 // pred_region
        %s2321 = ssub.s32 %s29, 2
        // Predicated region
        $region105: #{tpu_custom_call.1} parent=103 // pred_check
          %p2322 = pneg %p324
        $region106: #{tpu_custom_call.1} parent=103 // pred_check_branch
          %2324 = sbr.rel (%p2322) target = $region108
        $region107: #{tpu_custom_call.1} parent=103 // pred_region
          %s2325 = sand.u32 %s35, 1
          %s2326 = scalar_lea.sflag [#allocation4], %s2325
          %s2327 = sand.u32 %s309, 1
          %s2328 = smul.addr %s2327, 2
          %s2329 = scalar_lea.vmem [#allocation13], %s2328
          %2330 = dma.done %s2326, 32
        $region108: #{tpu_custom_call.1} parent=103 // pred_fallthru
          _
      $region104: #{tpu_custom_call.1} parent=5 // pred_fallthru
        _
    $region6: #{tpu_custom_call.1} parent=1 // loop_footer
      %s33 = sadd.s32 1, %s29
    $region7: #{tpu_custom_call.1} parent=1 // loop_footer_branch
      %28 = sbr.rel target = $region3
    $region8: #{tpu_custom_call.1} parent=1 // loop_exit
      _
    %2331 = vsyncpa [#allocation3], 1
    %s2332 = scalar_lea.sflag [#allocation3], 1
    %2333 = vsyncpa %s2332, 1
    %2334 = vsyncpa [#allocation6], 1
    %s2335 = scalar_lea.sflag [#allocation6], 1
    %2336 = vsyncpa %s2335, 1
    %2337 = vsyncpa [#allocation9], 1
    %s2338 = scalar_lea.sflag [#allocation9], 1
    %2339 = vsyncpa %s2338, 1
    %2340 = vsyncpa [#allocation4], 1
    %s2341 = scalar_lea.sflag [#allocation4], 1
    %2342 = vsyncpa %s2341, 1
    %2343 = vsyncpa [#allocation12], 1

</llo_original>
